<compile_context>
chip_gen: v7x
topology: tpu7x:2x2x1
jax: 0.10.0
libtpu: 0.0.40
codegen_flags: <defaults>
</compile_context>

<pallas_src>
import jax
import jax.numpy as jnp
from jax import lax
from jax.experimental import pallas as pl
from jax.experimental.pallas import tpu as pltpu

EPS = 1e-5                       # nn.GroupNorm default eps
INV_SQRT_EPS = float(EPS) ** -0.5  # compile-time constant for the degenerate fc GroupNorm


def stn3d_kernel(h1_ref,
                 w2_ref, w3_ref, wf1_ref, wf2_ref, wo_ref,
                 v1_ref, v2_ref, v3_ref, vf1_ref, vf2_ref, vo_ref,
                 out_ref):
    tb, n, _ = h1_ref.shape  # TB samples, N points, C1 channels (conv1 already applied)

    def gn_relu_bf16(y3, gb_ref):
        # GroupNorm(num_groups == C) on (B, C, N): per-(sample, channel) statistics over
        # the N points, biased variance, single pass (E[y^2] - mu^2; slightly less
        # stable than the centered two-pass form but clamped at 0). The conv bias is
        # omitted upstream because it cancels exactly under the mean subtraction.
        # Affine folded into one FMA; ReLU and the bf16 downcast fused into this pass.
        c = y3.shape[-1]
        mu = jnp.mean(y3, axis=1, keepdims=True)                          # (tb,1,c)
        var = jnp.maximum(
            jnp.mean(y3 * y3, axis=1, keepdims=True) - mu * mu, 0.0)      # (tb,1,c)
        scale = gb_ref[0:1, :].reshape(1, 1, c) * lax.rsqrt(var + EPS)
        shift = gb_ref[1:2, :].reshape(1, 1, c) - mu * scale
        return jnp.maximum(y3 * scale + shift, 0.0).astype(jnp.bfloat16)  # (tb,n,c) bf16

    # conv1 is folded into the wrapper; the kernel starts at GroupNorm1.
    h = gn_relu_bf16(h1_ref[...].astype(jnp.float32), v1_ref)             # (tb,n,c1) bf16
    y = jnp.dot(h.reshape(tb * n, -1), w2_ref[...],
                preferred_element_type=jnp.float32)                       # conv2 (MXU)
    h = gn_relu_bf16(y.reshape(tb, n, -1), v2_ref)                        # (tb,n,c2) bf16
    y = jnp.dot(h.reshape(tb * n, -1), w3_ref[...],
                preferred_element_type=jnp.float32)                       # conv3 (MXU)
    h = gn_relu_bf16(y.reshape(tb, n, -1), v3_ref)                        # (tb,n,c3) bf16

    # torch.max(x, -1, keepdim=True)[0] then view(-1, 1024 // r)
    g = jnp.max(h, axis=1)                                                # (tb, c3) bf16

    def fc_gn_relu(v2d, w_ref, vec_ref):
        y = jnp.dot(v2d, w_ref[...],
                    preferred_element_type=jnp.float32) + vec_ref[0:1, :]
        # GroupNorm with group size 1 on (B, C): exactly 0 for finite y; NaN/Inf
        # propagate like PyTorch. rsqrt(eps) is a compile-time scalar constant.
        yn = (y - y) * INV_SQRT_EPS
        return jnp.maximum(yn * vec_ref[1:2, :] + vec_ref[2:3, :], 0.0)

    f = fc_gn_relu(g, wf1_ref, vf1_ref)                                   # (tb, f1) f32
    f = fc_gn_relu(f.astype(jnp.bfloat16), wf2_ref, vf2_ref)              # (tb, f2) f32

    # Output head: f32 matmul into a 128-lane-padded tail (lane-dense store).
    o = jnp.dot(f, wo_ref[...], preferred_element_type=jnp.float32)
    o = o + vo_ref[0:1, :] + vo_ref[1:2, :]                               # bias + identity
    out_ref[...] = o.reshape(out_ref.shape).astype(out_ref.dtype)


def _pick_tb(batch, points_per_sample, max_rows, min_grid=2):
    """Pick the samples-per-step tile TB.

    Constraints / preferences, in order:
      * TB divides batch and TB * N <= max_rows (VMEM cap on the biggest intermediate).
      * batch // TB >= min_grid when batch allows it (keeps both v7x TensorCores busy
        and preserves DMA/compute pipelining; a no-op perf-wise on v5e/v6e).
      * Prefer TB a multiple of 8 (sublane-dense tiles).
    """
    cap = max(max_rows // max(points_per_sample, 1), 1)
    divisors = [d for d in range(1, batch + 1) if batch % d == 0]
    feasible = [d for d in divisors if d <= cap] or [1]
    if batch >= min_grid:
        guarded = [d for d in feasible if batch // d >= min_grid]
        if guarded:
            feasible = guarded
    mult8 = [d for d in feasible if d % 8 == 0]
    return max(mult8) if mult8 else max(feasible)


def stn3d_forward(x, p, out_size=3, max_rows_per_step=2048,
                  vmem_limit_bytes=48 * 1024 * 1024):
    """STN3d forward. x: (B, Cin, N) f32, params p from init_params.

    max_rows_per_step: rows (TB * N) fed to each grid step's matmuls. 2048 is a safe
    default on every generation; v5e/v6e (128 MiB VMEM) can go to ~4096 for the r=1
    config with a higher vmem_limit_bytes, v7x (64 MiB) should stay <= ~2048.
    """
    B, cin, n = x.shape
    odim = out_size * out_size
    odim_pad = ((odim + 127) // 128) * 128
    c1 = p["w1"].shape[1]

    # conv1 (1x1, K=Cin) + layout transpose + bf16 cast folded into one XLA einsum:
    # kernel input is (B, N, 64//r) bf16, points on sublanes, channels on lanes.
    # conv1's bias is dropped: a constant-over-N per-channel offset cancels exactly
    # under GroupNorm's mean subtraction.
    h1 = jnp.einsum("bcn,cd->bnd", x, p["w1"]).astype(jnp.bfloat16)

    bf = lambda a: a.astype(jnp.bfloat16)
    # Pad the output head to 128 lanes so the per-step store is lane-dense; the extra
    # columns are exact zeros and get sliced away below.
    wo_pad = jnp.zeros((p["wo"].shape[0], odim_pad), jnp.float32).at[:, :odim].set(p["wo"])
    vo_pad = jnp.zeros((2, odim_pad), jnp.float32).at[:, :odim].set(
        jnp.concatenate([p["bo"], p["idt"]], axis=0))

    operands = [
        bf(p["w2"]), bf(p["w3"]), bf(p["wf1"]), bf(p["wf2"]), wo_pad,   # wo stays f32
        # conv-layer GroupNorm affine (gamma, beta); conv biases are not needed.
        jnp.concatenate([p["g1"], p["be1"]], axis=0),
        jnp.concatenate([p["g2"], p["be2"]], axis=0),
        jnp.concatenate([p["g3"], p["be3"]], axis=0),
        # fc-layer (bias, gamma, beta) packed per layer.
        jnp.concatenate([p["bf1"], p["gf1"], p["bef1"]], axis=0),
        jnp.concatenate([p["bf2"], p["gf2"], p["bef2"]], axis=0),
        vo_pad,
    ]

    tb = _pick_tb(B, n, max_rows_per_step)
    grid_len = B // tb

    def rep_spec(arr):
        # Grid-invariant operands (constant index_map -> fetched once).
        # (pipeline_mode=pl.Buffered(1) would also single-buffer them for extra VMEM
        # headroom on v7x; left off for portability across Pallas versions.)
        nd = arr.ndim
        return pl.BlockSpec(arr.shape, lambda b, _nd=nd: (0,) * _nd)

    out = pl.pallas_call(
        stn3d_kernel,
        # 3-D output (steps, TB, 128): the block's trailing dims equal the full array
        # dims, so the store is dense and legal for any TB.
        out_shape=jax.ShapeDtypeStruct((grid_len, tb, odim_pad), jnp.float32),
        grid=(grid_len,),
        in_specs=[pl.BlockSpec((tb, n, c1), lambda b: (b, 0, 0))]
                 + [rep_spec(a) for a in operands],
        out_specs=pl.BlockSpec((1, tb, odim_pad), lambda b: (b, 0, 0)),
        compiler_params=pltpu.CompilerParams(
            dimension_semantics=("parallel",),      # batch tiles are independent
            vmem_limit_bytes=vmem_limit_bytes),
    )(h1, *operands)

    return out.reshape(B, odim_pad)[:, :odim].reshape(B, out_size, out_size)


def init_params(key, in_channels=3, out_size=3, feature_channels=512):
    """Deterministic parameter init matching STN3d.__init__ shapes.

    Conv/Linear weights are stored pre-transposed as (in, out) so x @ W applies them.
    GroupNorm affine params follow PyTorch defaults (1, 0). The `output` layer weight
    and bias are zeroed, as in the module. Conv biases (b1..b3) are kept for the
    reference path even though the kernel omits them (they cancel under GroupNorm).
    """
    r = 512 // feature_channels
    c1, c2, c3 = 64 // r, 128 // r, 1024 // r
    f1, f2 = 512 // r, 256 // r
    odim = out_size * out_size
    ks = jax.random.split(key, 10)

    def wmat(k, fan_in, fan_out):
        s = 1.0 / (fan_in ** 0.5)
        return jax.random.uniform(k, (fan_in, fan_out), jnp.float32, -s, s)

    def bvec(k, fan_in, fan_out):
        s = 1.0 / (fan_in ** 0.5)
        return jax.random.uniform(k, (1, fan_out), jnp.float32, -s, s)

    ones = lambda c: jnp.ones((1, c), jnp.float32)
    zeros = lambda c: jnp.zeros((1, c), jnp.float32)

    return {
        "w1": wmat(ks[0], in_channels, c1), "b1": bvec(ks[1], in_channels, c1),
        "g1": ones(c1), "be1": zeros(c1),
        "w2": wmat(ks[2], c1, c2), "b2": bvec(ks[3], c1, c2),
        "g2": ones(c2), "be2": zeros(c2),
        "w3": wmat(ks[4], c2, c3), "b3": bvec(ks[5], c2, c3),
        "g3": ones(c3), "be3": zeros(c3),
        "wf1": wmat(ks[6], c3, f1), "bf1": bvec(ks[7], c3, f1),
        "gf1": ones(f1), "bef1": zeros(f1),
        "wf2": wmat(ks[8], f1, f2), "bf2": bvec(ks[9], f1, f2),
        "gf2": ones(f2), "bef2": zeros(f2),
        # nn.init.constant_(output.weight, 0), constant_(output.bias, 0)
        "wo": jnp.zeros((f2, odim), jnp.float32), "bo": jnp.zeros((1, odim), jnp.float32),
        "idt": jnp.eye(out_size, dtype=jnp.float32).reshape(1, odim),
    }


def stn3d_reference(x, p, out_size=3):
    """Pure-JAX f32 reference reproducing the PyTorch forward (with conv biases)."""
    xt = jnp.transpose(x, (0, 2, 1))  # (B, N, Cin)

    def cgr(h, w, b, gam, bet):
        y = jnp.einsum("bnc,cd->bnd", h, w) + b
        mu = jnp.mean(y, axis=1, keepdims=True)
        var = jnp.mean((y - mu) ** 2, axis=1, keepdims=True)
        return jnp.maximum((y - mu) / jnp.sqrt(var + EPS) * gam + bet, 0.0)

    h = cgr(xt, p["w1"], p["b1"], p["g1"], p["be1"])
    h = cgr(h, p["w2"], p["b2"], p["g2"], p["be2"])
    h = cgr(h, p["w3"], p["b3"], p["g3"], p["be3"])
    g = jnp.max(h, axis=1)  # (B, 1024//r)

    def fgr(v, w, b, gam, bet):
        y = v @ w + b
        yn = (y - y) / jnp.sqrt(0.0 + EPS)  # group size 1 -> zeros for finite y
        return jnp.maximum(yn * gam + bet, 0.0)

    f = fgr(g, p["wf1"], p["bf1"], p["gf1"], p["bef1"])
    f = fgr(f, p["wf2"], p["bf2"], p["gf2"], p["bef2"])
    o = f @ p["wo"] + p["bo"] + p["idt"]
    return o.reshape(x.shape[0], out_size, out_size)


if __name__ == "__main__":
    B, Cin, N = 16, 3, 64           # 16 point clouds, 3-D points, 64 points per cloud
    feature_channels = 128          # reduction = 4 -> channels 16/32/256, fcs 128/64
    out_size = 3

    key = jax.random.PRNGKey(0)
    kx, kp, kw = jax.random.split(key, 3)
    x = jax.random.normal(kx, (B, Cin, N), dtype=jnp.float32)
    params = init_params(kp, in_channels=Cin, out_size=out_size,
                         feature_channels=feature_channels)

    # max_rows_per_step=512 -> TB=8 samples/step (multiple of 8), grid=(2,),
    # 512-row MXU matmuls, dense (1, 8, 128) output stores.
    out = stn3d_forward(x, params, out_size=out_size, max_rows_per_step=512)
    out = jax.block_until_ready(out)

    ref = stn3d_reference(x, params, out_size=out_size)
    assert out.shape == (B, out_size, out_size)
    assert jnp.allclose(out, ref, atol=1e-5, rtol=1e-5), "kernel != reference"
    # With the module's zero-initialized `output` layer, the result is the identity.
    assert jnp.allclose(
        out, jnp.broadcast_to(jnp.eye(out_size), (B, out_size, out_size)), atol=1e-6)

    # Second check with a non-degenerate output tail (random fc2 beta / output layer)
    # so the comparison exercises the beta -> relu -> output-matmul path.
    k1, k2, k3 = jax.random.split(kw, 3)
    params2 = dict(params)
    params2["bef2"] = jax.random.normal(k1, params["bef2"].shape, jnp.float32)
    params2["wo"] = 0.1 * jax.random.normal(k2, params["wo"].shape, jnp.float32)
    params2["bo"] = 0.1 * jax.random.normal(k3, params["bo"].shape, jnp.float32)
    out2 = jax.block_until_ready(
        stn3d_forward(x, params2, out_size=out_size, max_rows_per_step=512))
    ref2 = stn3d_reference(x, params2, out_size=out_size)
    assert jnp.allclose(out2, ref2, atol=1e-4, rtol=1e-4), "kernel != reference (tail)"

    print("KERNEL_OK")
</pallas_src>

<mosaic_0001>
module attributes {stable_mosaic.version = 11 : i64} {
  func.func @stn3d_kernel(%arg0: i32, %arg1: memref<8x64x16xbf16, #tpu.memory_space<vmem>>, %arg2: memref<16x32xbf16, #tpu.memory_space<vmem>>, %arg3: memref<32x256xbf16, #tpu.memory_space<vmem>>, %arg4: memref<256x128xbf16, #tpu.memory_space<vmem>>, %arg5: memref<128x64xbf16, #tpu.memory_space<vmem>>, %arg6: memref<64x128xf32, #tpu.memory_space<vmem>>, %arg7: memref<2x16xf32, #tpu.memory_space<vmem>>, %arg8: memref<2x32xf32, #tpu.memory_space<vmem>>, %arg9: memref<2x256xf32, #tpu.memory_space<vmem>>, %arg10: memref<3x128xf32, #tpu.memory_space<vmem>>, %arg11: memref<3x64xf32, #tpu.memory_space<vmem>>, %arg12: memref<2x128xf32, #tpu.memory_space<vmem>>, %arg13: memref<1x8x128xf32, #tpu.memory_space<vmem>>) attributes {dimension_semantics = [#tpu.dimension_semantics<parallel>], iteration_bounds = array<i64: 2>, scalar_prefetch = 0 : i64, scratch_operands = 0 : i64, tpu.core_type = #tpu.core_type<tc>, window_params = [{transform_indices = @transform_0, window_bounds = array<i64: 8, 64, 16>}, {pipeline_mode = #tpu.pipeline_mode<synchronous>, transform_indices = @transform_1, window_bounds = array<i64: 16, 32>}, {pipeline_mode = #tpu.pipeline_mode<synchronous>, transform_indices = @transform_2, window_bounds = array<i64: 32, 256>}, {pipeline_mode = #tpu.pipeline_mode<synchronous>, transform_indices = @transform_3, window_bounds = array<i64: 256, 128>}, {pipeline_mode = #tpu.pipeline_mode<synchronous>, transform_indices = @transform_4, window_bounds = array<i64: 128, 64>}, {pipeline_mode = #tpu.pipeline_mode<synchronous>, transform_indices = @transform_5, window_bounds = array<i64: 64, 128>}, {pipeline_mode = #tpu.pipeline_mode<synchronous>, transform_indices = @transform_6, window_bounds = array<i64: 2, 16>}, {pipeline_mode = #tpu.pipeline_mode<synchronous>, transform_indices = @transform_7, window_bounds = array<i64: 2, 32>}, {pipeline_mode = #tpu.pipeline_mode<synchronous>, transform_indices = @transform_8, window_bounds = array<i64: 2, 256>}, {pipeline_mode = #tpu.pipeline_mode<synchronous>, transform_indices = @transform_9, window_bounds = array<i64: 3, 128>}, {pipeline_mode = #tpu.pipeline_mode<synchronous>, transform_indices = @transform_10, window_bounds = array<i64: 3, 64>}, {pipeline_mode = #tpu.pipeline_mode<synchronous>, transform_indices = @transform_11, window_bounds = array<i64: 2, 128>}, {transform_indices = @transform_12, window_bounds = array<i64: 1, 8, 128>}]} {
    %c0 = arith.constant 0 : index
    %c0_0 = arith.constant 0 : index
    %c0_1 = arith.constant 0 : index
    %0 = vector.load %arg1[%c0, %c0_0, %c0_1] : memref<8x64x16xbf16, #tpu.memory_space<vmem>>, vector<8x64x16xbf16>
    %1 = arith.extf %0 : vector<8x64x16xbf16> to vector<8x64x16xf32>
    %cst = arith.constant dense<0.000000e+00> : vector<8x16xf32>
    %2 = vector.multi_reduction <add>, %1, %cst [1] : vector<8x64x16xf32> to vector<8x16xf32>
    %3 = vector.shape_cast %2 : vector<8x16xf32> to vector<8x1x16xf32>
    %cst_2 = arith.constant 6.400000e+01 : f32
    %4 = vector.broadcast %cst_2 : f32 to vector<8x1x16xf32>
    %5 = arith.divf %3, %4 : vector<8x1x16xf32>
    %6 = arith.mulf %1, %1 : vector<8x64x16xf32>
    %cst_3 = arith.constant dense<0.000000e+00> : vector<8x16xf32>
    %7 = vector.multi_reduction <add>, %6, %cst_3 [1] : vector<8x64x16xf32> to vector<8x16xf32>
    %8 = vector.shape_cast %7 : vector<8x16xf32> to vector<8x1x16xf32>
    %cst_4 = arith.constant 6.400000e+01 : f32
    %9 = vector.broadcast %cst_4 : f32 to vector<8x1x16xf32>
    %10 = arith.divf %8, %9 : vector<8x1x16xf32>
    %11 = arith.mulf %5, %5 : vector<8x1x16xf32>
    %12 = arith.subf %10, %11 : vector<8x1x16xf32>
    %cst_5 = arith.constant 0.000000e+00 : f32
    %13 = vector.broadcast %cst_5 : f32 to vector<8x1x16xf32>
    %14 = arith.maximumf %12, %13 : vector<8x1x16xf32>
    %c0_6 = arith.constant 0 : index
    %c0_7 = arith.constant 0 : index
    %15 = vector.load %arg7[%c0_6, %c0_7] : memref<2x16xf32, #tpu.memory_space<vmem>>, vector<1x16xf32>
    %16 = vector.shape_cast %15 : vector<1x16xf32> to vector<1x1x16xf32>
    %cst_8 = arith.constant 9.99999974E-6 : f32
    %17 = vector.broadcast %cst_8 : f32 to vector<8x1x16xf32>
    %18 = arith.addf %14, %17 : vector<8x1x16xf32>
    %19 = math.rsqrt %18 : vector<8x1x16xf32>
    %20 = vector.broadcast %16 : vector<1x1x16xf32> to vector<8x1x16xf32>
    %21 = arith.mulf %20, %19 : vector<8x1x16xf32>
    %c1 = arith.constant 1 : index
    %c0_9 = arith.constant 0 : index
    %22 = vector.load %arg7[%c1, %c0_9] : memref<2x16xf32, #tpu.memory_space<vmem>>, vector<1x16xf32>
    %23 = vector.shape_cast %22 : vector<1x16xf32> to vector<1x1x16xf32>
    %24 = arith.mulf %5, %21 : vector<8x1x16xf32>
    %25 = vector.broadcast %23 : vector<1x1x16xf32> to vector<8x1x16xf32>
    %26 = arith.subf %25, %24 : vector<8x1x16xf32>
    %27 = vector.broadcast %21 : vector<8x1x16xf32> to vector<8x64x16xf32>
    %28 = arith.mulf %1, %27 : vector<8x64x16xf32>
    %29 = vector.broadcast %26 : vector<8x1x16xf32> to vector<8x64x16xf32>
    %30 = arith.addf %28, %29 : vector<8x64x16xf32>
    %cst_10 = arith.constant 0.000000e+00 : f32
    %31 = vector.broadcast %cst_10 : f32 to vector<8x64x16xf32>
    %32 = arith.maximumf %30, %31 : vector<8x64x16xf32>
    %33 = arith.truncf %32 : vector<8x64x16xf32> to vector<8x64x16xbf16>
    %34 = vector.shape_cast %33 : vector<8x64x16xbf16> to vector<512x16xbf16>
    %c0_11 = arith.constant 0 : index
    %c0_12 = arith.constant 0 : index
    %35 = vector.load %arg2[%c0_11, %c0_12] : memref<16x32xbf16, #tpu.memory_space<vmem>>, vector<16x32xbf16>
    %cst_13 = arith.constant dense<0.000000e+00> : vector<512x32xf32>
    %36 = tpu.matmul %34, %35, %cst_13 {dimension_numbers = #tpu.dot_dimension_numbers<[1], [0], [0], [1], [0, 0, 1, 1], [], []>} : vector<512x16xbf16>, vector<16x32xbf16>, vector<512x32xf32> -> vector<512x32xf32>
    %37 = vector.shape_cast %36 : vector<512x32xf32> to vector<8x64x32xf32>
    %cst_14 = arith.constant dense<0.000000e+00> : vector<8x32xf32>
    %38 = vector.multi_reduction <add>, %37, %cst_14 [1] : vector<8x64x32xf32> to vector<8x32xf32>
    %39 = vector.shape_cast %38 : vector<8x32xf32> to vector<8x1x32xf32>
    %cst_15 = arith.constant 6.400000e+01 : f32
    %40 = vector.broadcast %cst_15 : f32 to vector<8x1x32xf32>
    %41 = arith.divf %39, %40 : vector<8x1x32xf32>
    %42 = arith.mulf %37, %37 : vector<8x64x32xf32>
    %cst_16 = arith.constant dense<0.000000e+00> : vector<8x32xf32>
    %43 = vector.multi_reduction <add>, %42, %cst_16 [1] : vector<8x64x32xf32> to vector<8x32xf32>
    %44 = vector.shape_cast %43 : vector<8x32xf32> to vector<8x1x32xf32>
    %cst_17 = arith.constant 6.400000e+01 : f32
    %45 = vector.broadcast %cst_17 : f32 to vector<8x1x32xf32>
    %46 = arith.divf %44, %45 : vector<8x1x32xf32>
    %47 = arith.mulf %41, %41 : vector<8x1x32xf32>
    %48 = arith.subf %46, %47 : vector<8x1x32xf32>
    %cst_18 = arith.constant 0.000000e+00 : f32
    %49 = vector.broadcast %cst_18 : f32 to vector<8x1x32xf32>
    %50 = arith.maximumf %48, %49 : vector<8x1x32xf32>
    %c0_19 = arith.constant 0 : index
    %c0_20 = arith.constant 0 : index
    %51 = vector.load %arg8[%c0_19, %c0_20] : memref<2x32xf32, #tpu.memory_space<vmem>>, vector<1x32xf32>
    %52 = vector.shape_cast %51 : vector<1x32xf32> to vector<1x1x32xf32>
    %cst_21 = arith.constant 9.99999974E-6 : f32
    %53 = vector.broadcast %cst_21 : f32 to vector<8x1x32xf32>
    %54 = arith.addf %50, %53 : vector<8x1x32xf32>
    %55 = math.rsqrt %54 : vector<8x1x32xf32>
    %56 = vector.broadcast %52 : vector<1x1x32xf32> to vector<8x1x32xf32>
    %57 = arith.mulf %56, %55 : vector<8x1x32xf32>
    %c1_22 = arith.constant 1 : index
    %c0_23 = arith.constant 0 : index
    %58 = vector.load %arg8[%c1_22, %c0_23] : memref<2x32xf32, #tpu.memory_space<vmem>>, vector<1x32xf32>
    %59 = vector.shape_cast %58 : vector<1x32xf32> to vector<1x1x32xf32>
    %60 = arith.mulf %41, %57 : vector<8x1x32xf32>
    %61 = vector.broadcast %59 : vector<1x1x32xf32> to vector<8x1x32xf32>
    %62 = arith.subf %61, %60 : vector<8x1x32xf32>
    %63 = vector.broadcast %57 : vector<8x1x32xf32> to vector<8x64x32xf32>
    %64 = arith.mulf %37, %63 : vector<8x64x32xf32>
    %65 = vector.broadcast %62 : vector<8x1x32xf32> to vector<8x64x32xf32>
    %66 = arith.addf %64, %65 : vector<8x64x32xf32>
    %cst_24 = arith.constant 0.000000e+00 : f32
    %67 = vector.broadcast %cst_24 : f32 to vector<8x64x32xf32>
    %68 = arith.maximumf %66, %67 : vector<8x64x32xf32>
    %69 = arith.truncf %68 : vector<8x64x32xf32> to vector<8x64x32xbf16>
    %70 = vector.shape_cast %69 : vector<8x64x32xbf16> to vector<512x32xbf16>
    %c0_25 = arith.constant 0 : index
    %c0_26 = arith.constant 0 : index
    %71 = vector.load %arg3[%c0_25, %c0_26] : memref<32x256xbf16, #tpu.memory_space<vmem>>, vector<32x256xbf16>
    %cst_27 = arith.constant dense<0.000000e+00> : vector<512x256xf32>
    %72 = tpu.matmul %70, %71, %cst_27 {dimension_numbers = #tpu.dot_dimension_numbers<[1], [0], [0], [1], [0, 0, 1, 1], [], []>} : vector<512x32xbf16>, vector<32x256xbf16>, vector<512x256xf32> -> vector<512x256xf32>
    %73 = vector.shape_cast %72 : vector<512x256xf32> to vector<8x64x256xf32>
    %cst_28 = arith.constant dense<0.000000e+00> : vector<8x256xf32>
    %74 = vector.multi_reduction <add>, %73, %cst_28 [1] : vector<8x64x256xf32> to vector<8x256xf32>
    %75 = vector.shape_cast %74 : vector<8x256xf32> to vector<8x1x256xf32>
    %cst_29 = arith.constant 6.400000e+01 : f32
    %76 = vector.broadcast %cst_29 : f32 to vector<8x1x256xf32>
    %77 = arith.divf %75, %76 : vector<8x1x256xf32>
    %78 = arith.mulf %73, %73 : vector<8x64x256xf32>
    %cst_30 = arith.constant dense<0.000000e+00> : vector<8x256xf32>
    %79 = vector.multi_reduction <add>, %78, %cst_30 [1] : vector<8x64x256xf32> to vector<8x256xf32>
    %80 = vector.shape_cast %79 : vector<8x256xf32> to vector<8x1x256xf32>
    %cst_31 = arith.constant 6.400000e+01 : f32
    %81 = vector.broadcast %cst_31 : f32 to vector<8x1x256xf32>
    %82 = arith.divf %80, %81 : vector<8x1x256xf32>
    %83 = arith.mulf %77, %77 : vector<8x1x256xf32>
    %84 = arith.subf %82, %83 : vector<8x1x256xf32>
    %cst_32 = arith.constant 0.000000e+00 : f32
    %85 = vector.broadcast %cst_32 : f32 to vector<8x1x256xf32>
    %86 = arith.maximumf %84, %85 : vector<8x1x256xf32>
    %c0_33 = arith.constant 0 : index
    %c0_34 = arith.constant 0 : index
    %87 = vector.load %arg9[%c0_33, %c0_34] : memref<2x256xf32, #tpu.memory_space<vmem>>, vector<1x256xf32>
    %88 = vector.shape_cast %87 : vector<1x256xf32> to vector<1x1x256xf32>
    %cst_35 = arith.constant 9.99999974E-6 : f32
    %89 = vector.broadcast %cst_35 : f32 to vector<8x1x256xf32>
    %90 = arith.addf %86, %89 : vector<8x1x256xf32>
    %91 = math.rsqrt %90 : vector<8x1x256xf32>
    %92 = vector.broadcast %88 : vector<1x1x256xf32> to vector<8x1x256xf32>
    %93 = arith.mulf %92, %91 : vector<8x1x256xf32>
    %c1_36 = arith.constant 1 : index
    %c0_37 = arith.constant 0 : index
    %94 = vector.load %arg9[%c1_36, %c0_37] : memref<2x256xf32, #tpu.memory_space<vmem>>, vector<1x256xf32>
    %95 = vector.shape_cast %94 : vector<1x256xf32> to vector<1x1x256xf32>
    %96 = arith.mulf %77, %93 : vector<8x1x256xf32>
    %97 = vector.broadcast %95 : vector<1x1x256xf32> to vector<8x1x256xf32>
    %98 = arith.subf %97, %96 : vector<8x1x256xf32>
    %99 = vector.broadcast %93 : vector<8x1x256xf32> to vector<8x64x256xf32>
    %100 = arith.mulf %73, %99 : vector<8x64x256xf32>
    %101 = vector.broadcast %98 : vector<8x1x256xf32> to vector<8x64x256xf32>
    %102 = arith.addf %100, %101 : vector<8x64x256xf32>
    %cst_38 = arith.constant 0.000000e+00 : f32
    %103 = vector.broadcast %cst_38 : f32 to vector<8x64x256xf32>
    %104 = arith.maximumf %102, %103 : vector<8x64x256xf32>
    %105 = arith.truncf %104 : vector<8x64x256xf32> to vector<8x64x256xbf16>
    %cst_39 = arith.constant dense<0xFF80> : vector<8x256xbf16>
    %106 = vector.multi_reduction <maximumf>, %105, %cst_39 [1] : vector<8x64x256xbf16> to vector<8x256xbf16>
    %c0_40 = arith.constant 0 : index
    %c0_41 = arith.constant 0 : index
    %107 = vector.load %arg4[%c0_40, %c0_41] : memref<256x128xbf16, #tpu.memory_space<vmem>>, vector<256x128xbf16>
    %cst_42 = arith.constant dense<0.000000e+00> : vector<8x128xf32>
    %108 = tpu.matmul %106, %107, %cst_42 {dimension_numbers = #tpu.dot_dimension_numbers<[1], [0], [0], [1], [0, 0, 1, 1], [], []>} : vector<8x256xbf16>, vector<256x128xbf16>, vector<8x128xf32> -> vector<8x128xf32>
    %c0_43 = arith.constant 0 : index
    %c0_44 = arith.constant 0 : index
    %109 = vector.load %arg10[%c0_43, %c0_44] : memref<3x128xf32, #tpu.memory_space<vmem>>, vector<1x128xf32>
    %110 = vector.broadcast %109 : vector<1x128xf32> to vector<8x128xf32>
    %111 = arith.addf %108, %110 : vector<8x128xf32>
    %112 = arith.subf %111, %111 : vector<8x128xf32>
    %cst_45 = arith.constant 316.227753 : f32
    %113 = vector.broadcast %cst_45 : f32 to vector<8x128xf32>
    %114 = arith.mulf %112, %113 : vector<8x128xf32>
    %c1_46 = arith.constant 1 : index
    %c0_47 = arith.constant 0 : index
    %115 = vector.load %arg10[%c1_46, %c0_47] : memref<3x128xf32, #tpu.memory_space<vmem>>, vector<1x128xf32>
    %116 = vector.broadcast %115 : vector<1x128xf32> to vector<8x128xf32>
    %117 = arith.mulf %114, %116 : vector<8x128xf32>
    %c2 = arith.constant 2 : index
    %c0_48 = arith.constant 0 : index
    %118 = vector.load %arg10[%c2, %c0_48] : memref<3x128xf32, #tpu.memory_space<vmem>>, vector<1x128xf32>
    %119 = vector.broadcast %118 : vector<1x128xf32> to vector<8x128xf32>
    %120 = arith.addf %117, %119 : vector<8x128xf32>
    %cst_49 = arith.constant 0.000000e+00 : f32
    %121 = vector.broadcast %cst_49 : f32 to vector<8x128xf32>
    %122 = arith.maximumf %120, %121 : vector<8x128xf32>
    %123 = arith.truncf %122 : vector<8x128xf32> to vector<8x128xbf16>
    %c0_50 = arith.constant 0 : index
    %c0_51 = arith.constant 0 : index
    %124 = vector.load %arg5[%c0_50, %c0_51] : memref<128x64xbf16, #tpu.memory_space<vmem>>, vector<128x64xbf16>
    %cst_52 = arith.constant dense<0.000000e+00> : vector<8x64xf32>
    %125 = tpu.matmul %123, %124, %cst_52 {dimension_numbers = #tpu.dot_dimension_numbers<[1], [0], [0], [1], [0, 0, 1, 1], [], []>} : vector<8x128xbf16>, vector<128x64xbf16>, vector<8x64xf32> -> vector<8x64xf32>
    %c0_53 = arith.constant 0 : index
    %c0_54 = arith.constant 0 : index
    %126 = vector.load %arg11[%c0_53, %c0_54] : memref<3x64xf32, #tpu.memory_space<vmem>>, vector<1x64xf32>
    %127 = vector.broadcast %126 : vector<1x64xf32> to vector<8x64xf32>
    %128 = arith.addf %125, %127 : vector<8x64xf32>
    %129 = arith.subf %128, %128 : vector<8x64xf32>
    %cst_55 = arith.constant 316.227753 : f32
    %130 = vector.broadcast %cst_55 : f32 to vector<8x64xf32>
    %131 = arith.mulf %129, %130 : vector<8x64xf32>
    %c1_56 = arith.constant 1 : index
    %c0_57 = arith.constant 0 : index
    %132 = vector.load %arg11[%c1_56, %c0_57] : memref<3x64xf32, #tpu.memory_space<vmem>>, vector<1x64xf32>
    %133 = vector.broadcast %132 : vector<1x64xf32> to vector<8x64xf32>
    %134 = arith.mulf %131, %133 : vector<8x64xf32>
    %c2_58 = arith.constant 2 : index
    %c0_59 = arith.constant 0 : index
    %135 = vector.load %arg11[%c2_58, %c0_59] : memref<3x64xf32, #tpu.memory_space<vmem>>, vector<1x64xf32>
    %136 = vector.broadcast %135 : vector<1x64xf32> to vector<8x64xf32>
    %137 = arith.addf %134, %136 : vector<8x64xf32>
    %cst_60 = arith.constant 0.000000e+00 : f32
    %138 = vector.broadcast %cst_60 : f32 to vector<8x64xf32>
    %139 = arith.maximumf %137, %138 : vector<8x64xf32>
    %c0_61 = arith.constant 0 : index
    %c0_62 = arith.constant 0 : index
    %140 = vector.load %arg6[%c0_61, %c0_62] : memref<64x128xf32, #tpu.memory_space<vmem>>, vector<64x128xf32>
    %cst_63 = arith.constant dense<0.000000e+00> : vector<8x128xf32>
    %141 = tpu.matmul %139, %140, %cst_63 {dimension_numbers = #tpu.dot_dimension_numbers<[1], [0], [0], [1], [0, 0, 1, 1], [], []>} : vector<8x64xf32>, vector<64x128xf32>, vector<8x128xf32> -> vector<8x128xf32>
    %c0_64 = arith.constant 0 : index
    %c0_65 = arith.constant 0 : index
    %142 = vector.load %arg12[%c0_64, %c0_65] : memref<2x128xf32, #tpu.memory_space<vmem>>, vector<1x128xf32>
    %143 = vector.broadcast %142 : vector<1x128xf32> to vector<8x128xf32>
    %144 = arith.addf %141, %143 : vector<8x128xf32>
    %c1_66 = arith.constant 1 : index
    %c0_67 = arith.constant 0 : index
    %145 = vector.load %arg12[%c1_66, %c0_67] : memref<2x128xf32, #tpu.memory_space<vmem>>, vector<1x128xf32>
    %146 = vector.broadcast %145 : vector<1x128xf32> to vector<8x128xf32>
    %147 = arith.addf %144, %146 : vector<8x128xf32>
    %148 = vector.shape_cast %147 : vector<8x128xf32> to vector<1x8x128xf32>
    %c0_68 = arith.constant 0 : index
    %c0_69 = arith.constant 0 : index
    %c0_70 = arith.constant 0 : index
    %149 = vector.load %arg13[%c0_68, %c0_69, %c0_70] : memref<1x8x128xf32, #tpu.memory_space<vmem>>, vector<1x8x128xf32>
    tpu.vector_store %arg13[%c0_68, %c0_69, %c0_70], %148 {strides = array<i32>} : memref<1x8x128xf32, #tpu.memory_space<vmem>>, vector<1x8x128xf32>,
    return
  }
  func.func @transform_0(%arg0: i32) -> (i32, i32, i32) {
    %c0_i32 = arith.constant 0 : i32
    %c0_i32_0 = arith.constant 0 : i32
    %c0_i32_1 = arith.constant 0 : i32
    return %arg0, %c0_i32, %c0_i32_0 : i32, i32, i32
  }
  func.func @transform_1(%arg0: i32) -> (i32, i32) {
    %c0_i32 = arith.constant 0 : i32
    %c0_i32_0 = arith.constant 0 : i32
    %c0_i32_1 = arith.constant 0 : i32
    return %c0_i32, %c0_i32_0 : i32, i32
  }
  func.func @transform_2(%arg0: i32) -> (i32, i32) {
    %c0_i32 = arith.constant 0 : i32
    %c0_i32_0 = arith.constant 0 : i32
    %c0_i32_1 = arith.constant 0 : i32
    return %c0_i32, %c0_i32_0 : i32, i32
  }
  func.func @transform_3(%arg0: i32) -> (i32, i32) {
    %c0_i32 = arith.constant 0 : i32
    %c0_i32_0 = arith.constant 0 : i32
    %c0_i32_1 = arith.constant 0 : i32
    return %c0_i32, %c0_i32_0 : i32, i32
  }
  func.func @transform_4(%arg0: i32) -> (i32, i32) {
    %c0_i32 = arith.constant 0 : i32
    %c0_i32_0 = arith.constant 0 : i32
    %c0_i32_1 = arith.constant 0 : i32
    return %c0_i32, %c0_i32_0 : i32, i32
  }
  func.func @transform_5(%arg0: i32) -> (i32, i32) {
    %c0_i32 = arith.constant 0 : i32
    %c0_i32_0 = arith.constant 0 : i32
    %c0_i32_1 = arith.constant 0 : i32
    return %c0_i32, %c0_i32_0 : i32, i32
  }
  func.func @transform_6(%arg0: i32) -> (i32, i32) {
    %c0_i32 = arith.constant 0 : i32
    %c0_i32_0 = arith.constant 0 : i32
    %c0_i32_1 = arith.constant 0 : i32
    return %c0_i32, %c0_i32_0 : i32, i32
  }
  func.func @transform_7(%arg0: i32) -> (i32, i32) {
    %c0_i32 = arith.constant 0 : i32
    %c0_i32_0 = arith.constant 0 : i32
    %c0_i32_1 = arith.constant 0 : i32
    return %c0_i32, %c0_i32_0 : i32, i32
  }
  func.func @transform_8(%arg0: i32) -> (i32, i32) {
    %c0_i32 = arith.constant 0 : i32
    %c0_i32_0 = arith.constant 0 : i32
    %c0_i32_1 = arith.constant 0 : i32
    return %c0_i32, %c0_i32_0 : i32, i32
  }
  func.func @transform_9(%arg0: i32) -> (i32, i32) {
    %c0_i32 = arith.constant 0 : i32
    %c0_i32_0 = arith.constant 0 : i32
    %c0_i32_1 = arith.constant 0 : i32
    return %c0_i32, %c0_i32_0 : i32, i32
  }
  func.func @transform_10(%arg0: i32) -> (i32, i32) {
    %c0_i32 = arith.constant 0 : i32
    %c0_i32_0 = arith.constant 0 : i32
    %c0_i32_1 = arith.constant 0 : i32
    return %c0_i32, %c0_i32_0 : i32, i32
  }
  func.func @transform_11(%arg0: i32) -> (i32, i32) {
    %c0_i32 = arith.constant 0 : i32
    %c0_i32_0 = arith.constant 0 : i32
    %c0_i32_1 = arith.constant 0 : i32
    return %c0_i32, %c0_i32_0 : i32, i32
  }
  func.func @transform_12(%arg0: i32) -> (i32, i32, i32) {
    %c0_i32 = arith.constant 0 : i32
    %c0_i32_0 = arith.constant 0 : i32
    %c0_i32_1 = arith.constant 0 : i32
    return %arg0, %c0_i32, %c0_i32_0 : i32, i32, i32
  }
}

</mosaic_0001>

<llo_original>
// kernel: tpu_custom_call.1
$region0: #{tpu_custom_call.1}
  #allocation0 [shape = 'u32[]', space=smem, size = 0x4, offset = 0x4, fixed_abs, tag = 'smem constant byte address 0x4 - core index']
  #allocation1 [shape = 'u32[144,128]{1,0:T(1,128)}', space=vmem, size = 0x12000, scoped, tag = 'internal scratch']
  %s0 = inlined_call_operand.vmem [shape: bf16[16,64,16], index: 0, kind: input, shape index: {}]
  %s1 = inlined_call_operand.vmem [shape: bf16[16,32], index: 1, kind: input, shape index: {}]
  %s2 = inlined_call_operand.vmem [shape: bf16[32,256], index: 2, kind: input, shape index: {}]
  %s3 = inlined_call_operand.vmem [shape: bf16[256,128], index: 3, kind: input, shape index: {}]
  %s4 = inlined_call_operand.vmem [shape: bf16[128,64], index: 4, kind: input, shape index: {}]
  %s5 = inlined_call_operand.vmem [shape: f32[64,128], index: 5, kind: input, shape index: {}]
  %s6 = inlined_call_operand.vmem [shape: f32[2,16], index: 6, kind: input, shape index: {}]
  %s7 = inlined_call_operand.vmem [shape: f32[2,32], index: 7, kind: input, shape index: {}]
  %s8 = inlined_call_operand.vmem [shape: f32[2,256], index: 8, kind: input, shape index: {}]
  %s9 = inlined_call_operand.vmem [shape: f32[3,128], index: 9, kind: input, shape index: {}]
  %s10 = inlined_call_operand.vmem [shape: f32[3,64], index: 10, kind: input, shape index: {}]
  %s11 = inlined_call_operand.vmem [shape: f32[2,128], index: 11, kind: input, shape index: {}]
  %s12 = inlined_call_operand.hbm [shape: f32[2,8,128], index: 12, kind: output, shape index: {}]
  %s13 = sld [smem:[#allocation0]]
  $region81: #{tpu_custom_call.1} parent=0
    _
  %s15 = ssub.s32 1, %s13
  %s16 = scalar_select 0, %s15, %s13
  $region1: #{tpu_custom_call.1} parent=0
    #allocation2 [shape = 'u8[8192]{0}', space=vmem, size = 0x2000, scoped, tag = 'output window, operand 0']
    #allocation3 [shape = 's32[2]{0}', space=sflag, size = 0x8, scoped, tag = 'scoped memory for tpu_custom_call.1']
    %17 = vsyncpa [#allocation3], 0
    %s18 = scalar_lea.sflag [#allocation3], 1
    %19 = vsyncpa %s18, 0
    loop: start=0, step=1, limit=4
    $region2: #{tpu_custom_call.1} parent=1 // loop_pre_header
      _
    $region3: #{tpu_custom_call.1} parent=1 // loop_header
      %s21 = sphi 0, %s25
      %p22 = scmp.ge.s32.totalorder %s21, 4
      %s31 = sphi 0, %s33
      %s34 = sphi 0, %s31
      %s35 = sphi 0, %s34
      %s51 = sphi 0, %s35
      %s55 = sphi 0, %s55
      %s57 = sphi 0, %s55
      %s58 = sphi 0, %s57
      %s72 = sphi 0, %s58
      %s76 = sphi 0, %s76
      %s78 = sphi 0, %s76
      %s79 = sphi 0, %s78
      %s93 = sphi 0, %s79
      %s97 = sphi 0, %s97
      %s99 = sphi 0, %s97
      %s100 = sphi 0, %s99
      %s114 = sphi 0, %s100
      %s118 = sphi 0, %s118
      %s120 = sphi 0, %s118
      %s121 = sphi 0, %s120
      %s135 = sphi 0, %s121
      %s139 = sphi 0, %s139
      %s141 = sphi 0, %s139
      %s142 = sphi 0, %s141
      %s156 = sphi 0, %s142
      %s160 = sphi 0, %s160
      %s162 = sphi 0, %s160
      %s163 = sphi 0, %s162
      %s177 = sphi 0, %s163
      %s181 = sphi 0, %s181
      %s183 = sphi 0, %s181
      %s184 = sphi 0, %s183
      %s198 = sphi 0, %s184
      %s202 = sphi 0, %s202
      %s204 = sphi 0, %s202
      %s205 = sphi 0, %s204
      %s219 = sphi 0, %s205
      %s223 = sphi 0, %s223
      %s225 = sphi 0, %s223
      %s226 = sphi 0, %s225
      %s240 = sphi 0, %s226
      %s244 = sphi 0, %s244
      %s246 = sphi 0, %s244
      %s247 = sphi 0, %s246
      %s261 = sphi 0, %s247
      %s265 = sphi 0, %s265
      %s267 = sphi 0, %s265
      %s268 = sphi 0, %s267
      %s282 = sphi 0, %s268
      %s288 = sphi 0, %s290
      %s291 = sphi 0, %s288
      %s292 = sphi 0, %s291
      %s308 = sphi 0, %s292
    $region4: #{tpu_custom_call.1} parent=1 // loop_header_branch
      %24 = sbr.rel (%p22) target = $region8
    $region5: #{tpu_custom_call.1} parent=1 // loop_body
      %s26 = ssub.s32 %s21, 1
      %s27 = ssub.s32 %s21, 2
      %s28 = sadd.s32 %s21, 1
      %s29 = ssub.s32 %s21, %s28
      %p30 = scmp.eq.s32.totalorder %s29, 0
      %s32 = sadd.s32 %s31, 1
      %s33 = scalar_select %p30, %s31, %s32
      %p36 = pneg %p30
      %p37 = scmp.eq.s32.totalorder %s21, 1
      %p38 = por %p36, %p37
      %p39 = scmp.ne.s32.totalorder %s31, %s34
      %p40 = scmp.eq.s32.totalorder %s21, 0
      %p41 = por %p39, %p40
      %p42 = scmp.ne.s32.totalorder %s31, %s34
      %p43 = scmp.eq.s32.totalorder %s26, 1
      %p44 = por %p42, %p43
      %p45 = scmp.ne.s32.totalorder %s34, %s35
      %p46 = scmp.eq.s32.totalorder %s26, 0
      %p47 = por %p45, %p46
      %p48 = scmp.ne.s32.totalorder %s34, %s35
      %p49 = scmp.eq.s32.totalorder %s27, 1
      %p50 = por %p48, %p49
      %p52 = scmp.ne.s32.totalorder %s35, %s51
      %p53 = scmp.eq.s32.totalorder %s27, 0
      %p54 = por %p52, %p53
      %s56 = sadd.s32 %s55, 1
      %p59 = scmp.eq.s32.totalorder %s21, 1
      %p60 = scmp.ne.s32.totalorder %s55, %s57
      %p61 = scmp.eq.s32.totalorder %s21, 0
      %p62 = por %p60, %p61
      %p63 = scmp.ne.s32.totalorder %s55, %s57
      %p64 = scmp.eq.s32.totalorder %s26, 1
      %p65 = por %p63, %p64
      %p66 = scmp.ne.s32.totalorder %s57, %s58
      %p67 = scmp.eq.s32.totalorder %s26, 0
      %p68 = por %p66, %p67
      %p69 = scmp.ne.s32.totalorder %s57, %s58
      %p70 = scmp.eq.s32.totalorder %s27, 1
      %p71 = por %p69, %p70
      %p73 = scmp.ne.s32.totalorder %s58, %s72
      %p74 = scmp.eq.s32.totalorder %s27, 0
      %p75 = por %p73, %p74
      %s77 = sadd.s32 %s76, 1
      %p80 = scmp.eq.s32.totalorder %s21, 1
      %p81 = scmp.ne.s32.totalorder %s76, %s78
      %p82 = scmp.eq.s32.totalorder %s21, 0
      %p83 = por %p81, %p82
      %p84 = scmp.ne.s32.totalorder %s76, %s78
      %p85 = scmp.eq.s32.totalorder %s26, 1
      %p86 = por %p84, %p85
      %p87 = scmp.ne.s32.totalorder %s78, %s79
      %p88 = scmp.eq.s32.totalorder %s26, 0
      %p89 = por %p87, %p88
      %p90 = scmp.ne.s32.totalorder %s78, %s79
      %p91 = scmp.eq.s32.totalorder %s27, 1
      %p92 = por %p90, %p91
      %p94 = scmp.ne.s32.totalorder %s79, %s93
      %p95 = scmp.eq.s32.totalorder %s27, 0
      %p96 = por %p94, %p95
      %s98 = sadd.s32 %s97, 1
      %p101 = scmp.eq.s32.totalorder %s21, 1
      %p102 = scmp.ne.s32.totalorder %s97, %s99
      %p103 = scmp.eq.s32.totalorder %s21, 0
      %p104 = por %p102, %p103
      %p105 = scmp.ne.s32.totalorder %s97, %s99
      %p106 = scmp.eq.s32.totalorder %s26, 1
      %p107 = por %p105, %p106
      %p108 = scmp.ne.s32.totalorder %s99, %s100
      %p109 = scmp.eq.s32.totalorder %s26, 0
      %p110 = por %p108, %p109
      %p111 = scmp.ne.s32.totalorder %s99, %s100
      %p112 = scmp.eq.s32.totalorder %s27, 1
      %p113 = por %p111, %p112
      %p115 = scmp.ne.s32.totalorder %s100, %s114
      %p116 = scmp.eq.s32.totalorder %s27, 0
      %p117 = por %p115, %p116
      %s119 = sadd.s32 %s118, 1
      %p122 = scmp.eq.s32.totalorder %s21, 1
      %p123 = scmp.ne.s32.totalorder %s118, %s120
      %p124 = scmp.eq.s32.totalorder %s21, 0
      %p125 = por %p123, %p124
      %p126 = scmp.ne.s32.totalorder %s118, %s120
      %p127 = scmp.eq.s32.totalorder %s26, 1
      %p128 = por %p126, %p127
      %p129 = scmp.ne.s32.totalorder %s120, %s121
      %p130 = scmp.eq.s32.totalorder %s26, 0
      %p131 = por %p129, %p130
      %p132 = scmp.ne.s32.totalorder %s120, %s121
      %p133 = scmp.eq.s32.totalorder %s27, 1
      %p134 = por %p132, %p133
      %p136 = scmp.ne.s32.totalorder %s121, %s135
      %p137 = scmp.eq.s32.totalorder %s27, 0
      %p138 = por %p136, %p137
      %s140 = sadd.s32 %s139, 1
      %p143 = scmp.eq.s32.totalorder %s21, 1
      %p144 = scmp.ne.s32.totalorder %s139, %s141
      %p145 = scmp.eq.s32.totalorder %s21, 0
      %p146 = por %p144, %p145
      %p147 = scmp.ne.s32.totalorder %s139, %s141
      %p148 = scmp.eq.s32.totalorder %s26, 1
      %p149 = por %p147, %p148
      %p150 = scmp.ne.s32.totalorder %s141, %s142
      %p151 = scmp.eq.s32.totalorder %s26, 0
      %p152 = por %p150, %p151
      %p153 = scmp.ne.s32.totalorder %s141, %s142
      %p154 = scmp.eq.s32.totalorder %s27, 1
      %p155 = por %p153, %p154
      %p157 = scmp.ne.s32.totalorder %s142, %s156
      %p158 = scmp.eq.s32.totalorder %s27, 0
      %p159 = por %p157, %p158
      %s161 = sadd.s32 %s160, 1
      %p164 = scmp.eq.s32.totalorder %s21, 1
      %p165 = scmp.ne.s32.totalorder %s160, %s162
      %p166 = scmp.eq.s32.totalorder %s21, 0
      %p167 = por %p165, %p166
      %p168 = scmp.ne.s32.totalorder %s160, %s162
      %p169 = scmp.eq.s32.totalorder %s26, 1
      %p170 = por %p168, %p169
      %p171 = scmp.ne.s32.totalorder %s162, %s163
      %p172 = scmp.eq.s32.totalorder %s26, 0
      %p173 = por %p171, %p172
      %p174 = scmp.ne.s32.totalorder %s162, %s163
      %p175 = scmp.eq.s32.totalorder %s27, 1
      %p176 = por %p174, %p175
      %p178 = scmp.ne.s32.totalorder %s163, %s177
      %p179 = scmp.eq.s32.totalorder %s27, 0
      %p180 = por %p178, %p179
      %s182 = sadd.s32 %s181, 1
      %p185 = scmp.eq.s32.totalorder %s21, 1
      %p186 = scmp.ne.s32.totalorder %s181, %s183
      %p187 = scmp.eq.s32.totalorder %s21, 0
      %p188 = por %p186, %p187
      %p189 = scmp.ne.s32.totalorder %s181, %s183
      %p190 = scmp.eq.s32.totalorder %s26, 1
      %p191 = por %p189, %p190
      %p192 = scmp.ne.s32.totalorder %s183, %s184
      %p193 = scmp.eq.s32.totalorder %s26, 0
      %p194 = por %p192, %p193
      %p195 = scmp.ne.s32.totalorder %s183, %s184
      %p196 = scmp.eq.s32.totalorder %s27, 1
      %p197 = por %p195, %p196
      %p199 = scmp.ne.s32.totalorder %s184, %s198
      %p200 = scmp.eq.s32.totalorder %s27, 0
      %p201 = por %p199, %p200
      %s203 = sadd.s32 %s202, 1
      %p206 = scmp.eq.s32.totalorder %s21, 1
      %p207 = scmp.ne.s32.totalorder %s202, %s204
      %p208 = scmp.eq.s32.totalorder %s21, 0
      %p209 = por %p207, %p208
      %p210 = scmp.ne.s32.totalorder %s202, %s204
      %p211 = scmp.eq.s32.totalorder %s26, 1
      %p212 = por %p210, %p211
      %p213 = scmp.ne.s32.totalorder %s204, %s205
      %p214 = scmp.eq.s32.totalorder %s26, 0
      %p215 = por %p213, %p214
      %p216 = scmp.ne.s32.totalorder %s204, %s205
      %p217 = scmp.eq.s32.totalorder %s27, 1
      %p218 = por %p216, %p217
      %p220 = scmp.ne.s32.totalorder %s205, %s219
      %p221 = scmp.eq.s32.totalorder %s27, 0
      %p222 = por %p220, %p221
      %s224 = sadd.s32 %s223, 1
      %p227 = scmp.eq.s32.totalorder %s21, 1
      %p228 = scmp.ne.s32.totalorder %s223, %s225
      %p229 = scmp.eq.s32.totalorder %s21, 0
      %p230 = por %p228, %p229
      %p231 = scmp.ne.s32.totalorder %s223, %s225
      %p232 = scmp.eq.s32.totalorder %s26, 1
      %p233 = por %p231, %p232
      %p234 = scmp.ne.s32.totalorder %s225, %s226
      %p235 = scmp.eq.s32.totalorder %s26, 0
      %p236 = por %p234, %p235
      %p237 = scmp.ne.s32.totalorder %s225, %s226
      %p238 = scmp.eq.s32.totalorder %s27, 1
      %p239 = por %p237, %p238
      %p241 = scmp.ne.s32.totalorder %s226, %s240
      %p242 = scmp.eq.s32.totalorder %s27, 0
      %p243 = por %p241, %p242
      %s245 = sadd.s32 %s244, 1
      %p248 = scmp.eq.s32.totalorder %s21, 1
      %p249 = scmp.ne.s32.totalorder %s244, %s246
      %p250 = scmp.eq.s32.totalorder %s21, 0
      %p251 = por %p249, %p250
      %p252 = scmp.ne.s32.totalorder %s244, %s246
      %p253 = scmp.eq.s32.totalorder %s26, 1
      %p254 = por %p252, %p253
      %p255 = scmp.ne.s32.totalorder %s246, %s247
      %p256 = scmp.eq.s32.totalorder %s26, 0
      %p257 = por %p255, %p256
      %p258 = scmp.ne.s32.totalorder %s246, %s247
      %p259 = scmp.eq.s32.totalorder %s27, 1
      %p260 = por %p258, %p259
      %p262 = scmp.ne.s32.totalorder %s247, %s261
      %p263 = scmp.eq.s32.totalorder %s27, 0
      %p264 = por %p262, %p263
      %s266 = sadd.s32 %s265, 1
      %p269 = scmp.eq.s32.totalorder %s21, 1
      %p270 = scmp.ne.s32.totalorder %s265, %s267
      %p271 = scmp.eq.s32.totalorder %s21, 0
      %p272 = por %p270, %p271
      %p273 = scmp.ne.s32.totalorder %s265, %s267
      %p274 = scmp.eq.s32.totalorder %s26, 1
      %p275 = por %p273, %p274
      %p276 = scmp.ne.s32.totalorder %s267, %s268
      %p277 = scmp.eq.s32.totalorder %s26, 0
      %p278 = por %p276, %p277
      %p279 = scmp.ne.s32.totalorder %s267, %s268
      %p280 = scmp.eq.s32.totalorder %s27, 1
      %p281 = por %p279, %p280
      %p283 = scmp.ne.s32.totalorder %s268, %s282
      %p284 = scmp.eq.s32.totalorder %s27, 0
      %p285 = por %p283, %p284
      %s286 = ssub.s32 %s21, %s28
      %p287 = scmp.eq.s32.totalorder %s286, 0
      %s289 = sadd.s32 %s288, 1
      %s290 = scalar_select %p287, %s288, %s289
      %p293 = pneg %p287
      %p294 = scmp.eq.s32.totalorder %s21, 1
      %p295 = por %p293, %p294
      %p296 = scmp.ne.s32.totalorder %s288, %s291
      %p297 = scmp.eq.s32.totalorder %s21, 0
      %p298 = por %p296, %p297
      %p299 = scmp.ne.s32.totalorder %s288, %s291
      %p300 = scmp.eq.s32.totalorder %s26, 1
      %p301 = por %p299, %p300
      %p302 = scmp.ne.s32.totalorder %s291, %s292
      %p303 = scmp.eq.s32.totalorder %s26, 0
      %p304 = por %p302, %p303
      %p305 = scmp.ne.s32.totalorder %s291, %s292
      %p306 = scmp.eq.s32.totalorder %s27, 1
      %p307 = por %p305, %p306
      %p309 = scmp.ne.s32.totalorder %s292, %s308
      %p310 = scmp.eq.s32.totalorder %s27, 0
      %p311 = por %p309, %p310
      %p312 = scmp.le.s32.totalorder 1, %s21
      %p313 = scmp.lt.s32.totalorder %s21, 3
      %p314 = pnand %p312, %p313
      %p315 = pneg %p314
      // Predicated region
      $region9: #{tpu_custom_call.1} parent=5 // pred_check
        _
      $region10: #{tpu_custom_call.1} parent=5 // pred_check_branch
        %317 = sbr.rel (%p314) target = $region12
      $region11: #{tpu_custom_call.1} parent=5 // pred_region
        %s318 = ssub.s32 %s21, 1
        // Predicated region
        $region13: #{tpu_custom_call.1} parent=11 // pred_check
          %p319 = pneg %p68
        $region14: #{tpu_custom_call.1} parent=11 // pred_check_branch
          %321 = sbr.rel (%p319) target = $region16
        $region15: #{tpu_custom_call.1} parent=11 // pred_region
          _
        $region16: #{tpu_custom_call.1} parent=11 // pred_fallthru
          _
        // Predicated region
        $region17: #{tpu_custom_call.1} parent=11 // pred_check
          %p322 = pneg %p89
        $region18: #{tpu_custom_call.1} parent=11 // pred_check_branch
          %324 = sbr.rel (%p322) target = $region20
        $region19: #{tpu_custom_call.1} parent=11 // pred_region
          _
        $region20: #{tpu_custom_call.1} parent=11 // pred_fallthru
          _
        // Predicated region
        $region21: #{tpu_custom_call.1} parent=11 // pred_check
          %p325 = pneg %p110
        $region22: #{tpu_custom_call.1} parent=11 // pred_check_branch
          %327 = sbr.rel (%p325) target = $region24
        $region23: #{tpu_custom_call.1} parent=11 // pred_region
          _
        $region24: #{tpu_custom_call.1} parent=11 // pred_fallthru
          _
        // Predicated region
        $region25: #{tpu_custom_call.1} parent=11 // pred_check
          %p328 = pneg %p131
        $region26: #{tpu_custom_call.1} parent=11 // pred_check_branch
          %330 = sbr.rel (%p328) target = $region28
        $region27: #{tpu_custom_call.1} parent=11 // pred_region
          _
        $region28: #{tpu_custom_call.1} parent=11 // pred_fallthru
          _
        // Predicated region
        $region29: #{tpu_custom_call.1} parent=11 // pred_check
          %p331 = pneg %p152
        $region30: #{tpu_custom_call.1} parent=11 // pred_check_branch
          %333 = sbr.rel (%p331) target = $region32
        $region31: #{tpu_custom_call.1} parent=11 // pred_region
          _
        $region32: #{tpu_custom_call.1} parent=11 // pred_fallthru
          _
        // Predicated region
        $region33: #{tpu_custom_call.1} parent=11 // pred_check
          %p334 = pneg %p173
        $region34: #{tpu_custom_call.1} parent=11 // pred_check_branch
          %336 = sbr.rel (%p334) target = $region36
        $region35: #{tpu_custom_call.1} parent=11 // pred_region
          _
        $region36: #{tpu_custom_call.1} parent=11 // pred_fallthru
          _
        // Predicated region
        $region37: #{tpu_custom_call.1} parent=11 // pred_check
          %p337 = pneg %p194
        $region38: #{tpu_custom_call.1} parent=11 // pred_check_branch
          %339 = sbr.rel (%p337) target = $region40
        $region39: #{tpu_custom_call.1} parent=11 // pred_region
          _
        $region40: #{tpu_custom_call.1} parent=11 // pred_fallthru
          _
        // Predicated region
        $region41: #{tpu_custom_call.1} parent=11 // pred_check
          %p340 = pneg %p215
        $region42: #{tpu_custom_call.1} parent=11 // pred_check_branch
          %342 = sbr.rel (%p340) target = $region44
        $region43: #{tpu_custom_call.1} parent=11 // pred_region
          _
        $region44: #{tpu_custom_call.1} parent=11 // pred_fallthru
          _
        // Predicated region
        $region45: #{tpu_custom_call.1} parent=11 // pred_check
          %p343 = pneg %p236
        $region46: #{tpu_custom_call.1} parent=11 // pred_check_branch
          %345 = sbr.rel (%p343) target = $region48
        $region47: #{tpu_custom_call.1} parent=11 // pred_region
          _
        $region48: #{tpu_custom_call.1} parent=11 // pred_fallthru
          _
        // Predicated region
        $region49: #{tpu_custom_call.1} parent=11 // pred_check
          %p346 = pneg %p257
        $region50: #{tpu_custom_call.1} parent=11 // pred_check_branch
          %348 = sbr.rel (%p346) target = $region52
        $region51: #{tpu_custom_call.1} parent=11 // pred_region
          _
        $region52: #{tpu_custom_call.1} parent=11 // pred_fallthru
          _
        // Predicated region
        $region53: #{tpu_custom_call.1} parent=11 // pred_check
          %p349 = pneg %p278
        $region54: #{tpu_custom_call.1} parent=11 // pred_check_branch
          %351 = sbr.rel (%p349) target = $region56
        $region55: #{tpu_custom_call.1} parent=11 // pred_region
          _
        $region56: #{tpu_custom_call.1} parent=11 // pred_fallthru
          _
      $region12: #{tpu_custom_call.1} parent=5 // pred_fallthru
        _
      %p352 = scmp.lt.s32.totalorder %s21, 2
      // Predicated region
      $region57: #{tpu_custom_call.1} parent=5 // pred_check
        %p353 = pneg %p352
      $region58: #{tpu_custom_call.1} parent=5 // pred_check_branch
        %355 = sbr.rel (%p353) target = $region60
      $region59: #{tpu_custom_call.1} parent=5 // pred_region
        // Predicated region
        $region61: #{tpu_custom_call.1} parent=59 // pred_check
          %p356 = pneg %p41
        $region62: #{tpu_custom_call.1} parent=59 // pred_check_branch
          %358 = sbr.rel (%p356) target = $region64
        $region63: #{tpu_custom_call.1} parent=59 // pred_region
          %s359 = smul.u32 8, %s21
          %p360 = scmp.lt.s32.totalorder %s359, 15
          %s361 = scalar_select %p360, %s359, 15
          %s362 = smul.addr %s361, 8
          %s363 = smul.addr %s362, 4
          %s364 = scalar_lea.vmem %s0, %s363
          %s365 = smul.u32 8, %s21
        $region64: #{tpu_custom_call.1} parent=59 // pred_fallthru
          _
      $region60: #{tpu_custom_call.1} parent=5 // pred_fallthru
        _
      %p366 = scmp.le.s32.totalorder 1, %s21
      %p367 = scmp.lt.s32.totalorder %s21, 3
      %p368 = pnand %p366, %p367
      %p369 = pneg %p368
      // Predicated region
      $region65: #{tpu_custom_call.1} parent=5 // pred_check
        _
      $region66: #{tpu_custom_call.1} parent=5 // pred_check_branch
        %371 = sbr.rel (%p368) target = $region68
      $region67: #{tpu_custom_call.1} parent=5 // pred_region
        %s372 = ssub.s32 %s21, 1
        %s373 = smul.u32 8, %s26
        %p374 = scmp.lt.s32.totalorder %s373, 15
        %s375 = scalar_select %p374, %s373, 15
        %s376 = smul.addr %s375, 8
        %s377 = smul.addr %s376, 4
        %s378 = scalar_lea.vmem %s0, %s377
        %p379 = pneg %p47
        %p380 = pneg %p44
        %p381 = pneg %p68
        %p382 = pneg %p65
        %p383 = pneg %p89
        %p384 = pneg %p86
        %p385 = pneg %p110
        %p386 = pneg %p107
        %p387 = pneg %p131
        %p388 = pneg %p128
        %p389 = pneg %p152
        %p390 = pneg %p149
        %p391 = pneg %p173
        %p392 = pneg %p170
        %p393 = pneg %p194
        %p394 = pneg %p191
        %p395 = pneg %p215
        %p396 = pneg %p212
        %p397 = pneg %p236
        %p398 = pneg %p233
        %p399 = pneg %p257
        %p400 = pneg %p254
        %p401 = pneg %p278
        %p402 = pneg %p275
        %p403 = pneg %p304
        %p404 = pneg %p301
        %s405 = sand.u32 %s291, 1
        %s406 = scalar_lea.sflag [#allocation3], %s405
        %s407 = sand.u32 %s291, 1
        %s408 = smul.addr %s407, 8
        %s409 = scalar_lea.vmem [#allocation2], %s408
        %s410 = smul.u32 8, %s26
        %p411 = scmp.lt.s32.totalorder %s410, 15
        %s412 = scalar_select %p411, %s410, 15
        %s413 = smul.addr %s412, 8
        %s414 = smul.addr %s413, 4
        %s415 = scalar_lea.vmem %s0, %s414
        %s416 = smul.u32 8, %s26
        %v418 = vld [vmem:[%s415] sm:$0xf]
        %v419 = vld [vmem:[%s415 + $0x4] sm:$0xf]
        %v420 = vld [vmem:[%s415 + $0x8] sm:$0xf]
        %v421 = vld [vmem:[%s415 + $0xc] sm:$0xf]
        %v422 = vld [vmem:[%s415 + $0x10] sm:$0xf]
        %v423 = vld [vmem:[%s415 + $0x14] sm:$0xf]
        %v424 = vld [vmem:[%s415 + $0x18] sm:$0xf]
        %v425 = vld [vmem:[%s415 + $0x1c] sm:$0xf]
        %v426 = vld [vmem:[%s415 + $0x20] sm:$0xf]
        %v427 = vld [vmem:[%s415 + $0x24] sm:$0xf]
        %v428 = vld [vmem:[%s415 + $0x28] sm:$0xf]
        %v429 = vld [vmem:[%s415 + $0x2c] sm:$0xf]
        %v430 = vld [vmem:[%s415 + $0x30] sm:$0xf]
        %v431 = vld [vmem:[%s415 + $0x34] sm:$0xf]
        %v432 = vld [vmem:[%s415 + $0x38] sm:$0xf]
        %v433 = vld [vmem:[%s415 + $0x3c] sm:$0xf]
        %v434 = vld [vmem:[%s415 + $0x40] sm:$0xf]
        %v435 = vld [vmem:[%s415 + $0x44] sm:$0xf]
        %v436 = vld [vmem:[%s415 + $0x48] sm:$0xf]
        %v437 = vld [vmem:[%s415 + $0x4c] sm:$0xf]
        %v438 = vld [vmem:[%s415 + $0x50] sm:$0xf]
        %v439 = vld [vmem:[%s415 + $0x54] sm:$0xf]
        %v440 = vld [vmem:[%s415 + $0x58] sm:$0xf]
        %v441 = vld [vmem:[%s415 + $0x5c] sm:$0xf]
        %v442 = vld [vmem:[%s415 + $0x60] sm:$0xf]
        %v443 = vld [vmem:[%s415 + $0x64] sm:$0xf]
        %v444 = vld [vmem:[%s415 + $0x68] sm:$0xf]
        %v445 = vld [vmem:[%s415 + $0x6c] sm:$0xf]
        %v446 = vld [vmem:[%s415 + $0x70] sm:$0xf]
        %v447 = vld [vmem:[%s415 + $0x74] sm:$0xf]
        %v448 = vld [vmem:[%s415 + $0x78] sm:$0xf]
        %v449 = vld [vmem:[%s415 + $0x7c] sm:$0xf]
        %v450 = vld [vmem:[%s415 + $0x80] sm:$0xf]
        %v451 = vld [vmem:[%s415 + $0x84] sm:$0xf]
        %v452 = vld [vmem:[%s415 + $0x88] sm:$0xf]
        %v453 = vld [vmem:[%s415 + $0x8c] sm:$0xf]
        %v454 = vld [vmem:[%s415 + $0x90] sm:$0xf]
        %v455 = vld [vmem:[%s415 + $0x94] sm:$0xf]
        %v456 = vld [vmem:[%s415 + $0x98] sm:$0xf]
        %v457 = vld [vmem:[%s415 + $0x9c] sm:$0xf]
        %v458 = vld [vmem:[%s415 + $0xa0] sm:$0xf]
        %v459 = vld [vmem:[%s415 + $0xa4] sm:$0xf]
        %v460 = vld [vmem:[%s415 + $0xa8] sm:$0xf]
        %v461 = vld [vmem:[%s415 + $0xac] sm:$0xf]
        %v462 = vld [vmem:[%s415 + $0xb0] sm:$0xf]
        %v463 = vld [vmem:[%s415 + $0xb4] sm:$0xf]
        %v464 = vld [vmem:[%s415 + $0xb8] sm:$0xf]
        %v465 = vld [vmem:[%s415 + $0xbc] sm:$0xf]
        %v466 = vld [vmem:[%s415 + $0xc0] sm:$0xf]
        %v467 = vld [vmem:[%s415 + $0xc4] sm:$0xf]
        %v468 = vld [vmem:[%s415 + $0xc8] sm:$0xf]
        %v469 = vld [vmem:[%s415 + $0xcc] sm:$0xf]
        %v470 = vld [vmem:[%s415 + $0xd0] sm:$0xf]
        %v471 = vld [vmem:[%s415 + $0xd4] sm:$0xf]
        %v472 = vld [vmem:[%s415 + $0xd8] sm:$0xf]
        %v473 = vld [vmem:[%s415 + $0xdc] sm:$0xf]
        %v474 = vld [vmem:[%s415 + $0xe0] sm:$0xf]
        %v475 = vld [vmem:[%s415 + $0xe4] sm:$0xf]
        %v476 = vld [vmem:[%s415 + $0xe8] sm:$0xf]
        %v477 = vld [vmem:[%s415 + $0xec] sm:$0xf]
        %v478 = vld [vmem:[%s415 + $0xf0] sm:$0xf]
        %v479 = vld [vmem:[%s415 + $0xf4] sm:$0xf]
        %v480 = vld [vmem:[%s415 + $0xf8] sm:$0xf]
        %v481 = vld [vmem:[%s415 + $0xfc] sm:$0xf]
        %v482 = vunpack.c.l.bf16 %v418
        %v483 = vunpack.c.l.bf16 %v419
        %v484 = vunpack.c.l.bf16 %v420
        %v485 = vunpack.c.l.bf16 %v421
        %v486 = vunpack.c.l.bf16 %v422
        %v487 = vunpack.c.l.bf16 %v423
        %v488 = vunpack.c.l.bf16 %v424
        %v489 = vunpack.c.l.bf16 %v425
        %v490 = vunpack.c.l.bf16 %v426
        %v491 = vunpack.c.l.bf16 %v427
        %v492 = vunpack.c.l.bf16 %v428
        %v493 = vunpack.c.l.bf16 %v429
        %v494 = vunpack.c.l.bf16 %v430
        %v495 = vunpack.c.l.bf16 %v431
        %v496 = vunpack.c.l.bf16 %v432
        %v497 = vunpack.c.l.bf16 %v433
        %v498 = vunpack.c.l.bf16 %v434
        %v499 = vunpack.c.l.bf16 %v435
        %v500 = vunpack.c.l.bf16 %v436
        %v501 = vunpack.c.l.bf16 %v437
        %v502 = vunpack.c.l.bf16 %v438
        %v503 = vunpack.c.l.bf16 %v439
        %v504 = vunpack.c.l.bf16 %v440
        %v505 = vunpack.c.l.bf16 %v441
        %v506 = vunpack.c.l.bf16 %v442
        %v507 = vunpack.c.l.bf16 %v443
        %v508 = vunpack.c.l.bf16 %v444
        %v509 = vunpack.c.l.bf16 %v445
        %v510 = vunpack.c.l.bf16 %v446
        %v511 = vunpack.c.l.bf16 %v447
        %v512 = vunpack.c.l.bf16 %v448
        %v513 = vunpack.c.l.bf16 %v449
        %v514 = vunpack.c.l.bf16 %v450
        %v515 = vunpack.c.l.bf16 %v451
        %v516 = vunpack.c.l.bf16 %v452
        %v517 = vunpack.c.l.bf16 %v453
        %v518 = vunpack.c.l.bf16 %v454
        %v519 = vunpack.c.l.bf16 %v455
        %v520 = vunpack.c.l.bf16 %v456
        %v521 = vunpack.c.l.bf16 %v457
        %v522 = vunpack.c.l.bf16 %v458
        %v523 = vunpack.c.l.bf16 %v459
        %v524 = vunpack.c.l.bf16 %v460
        %v525 = vunpack.c.l.bf16 %v461
        %v526 = vunpack.c.l.bf16 %v462
        %v527 = vunpack.c.l.bf16 %v463
        %v528 = vunpack.c.l.bf16 %v464
        %v529 = vunpack.c.l.bf16 %v465
        %v530 = vunpack.c.l.bf16 %v466
        %v531 = vunpack.c.l.bf16 %v467
        %v532 = vunpack.c.l.bf16 %v468
        %v533 = vunpack.c.l.bf16 %v469
        %v534 = vunpack.c.l.bf16 %v470
        %v535 = vunpack.c.l.bf16 %v471
        %v536 = vunpack.c.l.bf16 %v472
        %v537 = vunpack.c.l.bf16 %v473
        %v538 = vunpack.c.l.bf16 %v474
        %v539 = vunpack.c.l.bf16 %v475
        %v540 = vunpack.c.l.bf16 %v476
        %v541 = vunpack.c.l.bf16 %v477
        %v542 = vunpack.c.l.bf16 %v478
        %v543 = vunpack.c.l.bf16 %v479
        %v544 = vunpack.c.l.bf16 %v480
        %v545 = vunpack.c.l.bf16 %v481
        %vm546 = vcmask 130048
        %v547 = vsel %vm546, %v482, 0.0
        %v548 = vsel %vm546, %v483, 0.0
        %v549 = vadd.f32 %v547, %v548
        %v550 = vsel %vm546, %v484, 0.0
        %v551 = vadd.f32 %v549, %v550
        %v552 = vsel %vm546, %v485, 0.0
        %v553 = vadd.f32 %v551, %v552
        %v554 = vsel %vm546, %v486, 0.0
        %v555 = vadd.f32 %v553, %v554
        %v556 = vsel %vm546, %v487, 0.0
        %v557 = vadd.f32 %v555, %v556
        %v558 = vsel %vm546, %v488, 0.0
        %v559 = vadd.f32 %v557, %v558
        %v560 = vsel %vm546, %v489, 0.0
        %v561 = vadd.f32 %v559, %v560
        %v562 = vrot.slane %v561, 4
        %v563 = vadd.f32 %v561, %v562
        %v564 = vrot.slane %v563, 2
        %v565 = vadd.f32 %v563, %v564
        %v566 = vrot.slane %v565, 1
        %v567 = vadd.f32 %v565, %v566
        %v568 = vsel %vm546, %v490, 0.0
        %v569 = vsel %vm546, %v491, 0.0
        %v570 = vadd.f32 %v568, %v569
        %v571 = vsel %vm546, %v492, 0.0
        %v572 = vadd.f32 %v570, %v571
        %v573 = vsel %vm546, %v493, 0.0
        %v574 = vadd.f32 %v572, %v573
        %v575 = vsel %vm546, %v494, 0.0
        %v576 = vadd.f32 %v574, %v575
        %v577 = vsel %vm546, %v495, 0.0
        %v578 = vadd.f32 %v576, %v577
        %v579 = vsel %vm546, %v496, 0.0
        %v580 = vadd.f32 %v578, %v579
        %v581 = vsel %vm546, %v497, 0.0
        %v582 = vadd.f32 %v580, %v581
        %v583 = vrot.slane %v582, 4
        %v584 = vadd.f32 %v582, %v583
        %v585 = vrot.slane %v584, 2
        %v586 = vadd.f32 %v584, %v585
        %v587 = vrot.slane %v586, 1
        %v588 = vadd.f32 %v586, %v587
        %v589 = vsel %vm546, %v498, 0.0
        %v590 = vsel %vm546, %v499, 0.0
        %v591 = vadd.f32 %v589, %v590
        %v592 = vsel %vm546, %v500, 0.0
        %v593 = vadd.f32 %v591, %v592
        %v594 = vsel %vm546, %v501, 0.0
        %v595 = vadd.f32 %v593, %v594
        %v596 = vsel %vm546, %v502, 0.0
        %v597 = vadd.f32 %v595, %v596
        %v598 = vsel %vm546, %v503, 0.0
        %v599 = vadd.f32 %v597, %v598
        %v600 = vsel %vm546, %v504, 0.0
        %v601 = vadd.f32 %v599, %v600
        %v602 = vsel %vm546, %v505, 0.0
        %v603 = vadd.f32 %v601, %v602
        %v604 = vrot.slane %v603, 4
        %v605 = vadd.f32 %v603, %v604
        %v606 = vrot.slane %v605, 2
        %v607 = vadd.f32 %v605, %v606
        %v608 = vrot.slane %v607, 1
        %v609 = vadd.f32 %v607, %v608
        %v610 = vsel %vm546, %v506, 0.0
        %v611 = vsel %vm546, %v507, 0.0
        %v612 = vadd.f32 %v610, %v611
        %v613 = vsel %vm546, %v508, 0.0
        %v614 = vadd.f32 %v612, %v613
        %v615 = vsel %vm546, %v509, 0.0
        %v616 = vadd.f32 %v614, %v615
        %v617 = vsel %vm546, %v510, 0.0
        %v618 = vadd.f32 %v616, %v617
        %v619 = vsel %vm546, %v511, 0.0
        %v620 = vadd.f32 %v618, %v619
        %v621 = vsel %vm546, %v512, 0.0
        %v622 = vadd.f32 %v620, %v621
        %v623 = vsel %vm546, %v513, 0.0
        %v624 = vadd.f32 %v622, %v623
        %v625 = vrot.slane %v624, 4
        %v626 = vadd.f32 %v624, %v625
        %v627 = vrot.slane %v626, 2
        %v628 = vadd.f32 %v626, %v627
        %v629 = vrot.slane %v628, 1
        %v630 = vadd.f32 %v628, %v629
        %v631 = vsel %vm546, %v514, 0.0
        %v632 = vsel %vm546, %v515, 0.0
        %v633 = vadd.f32 %v631, %v632
        %v634 = vsel %vm546, %v516, 0.0
        %v635 = vadd.f32 %v633, %v634
        %v636 = vsel %vm546, %v517, 0.0
        %v637 = vadd.f32 %v635, %v636
        %v638 = vsel %vm546, %v518, 0.0
        %v639 = vadd.f32 %v637, %v638
        %v640 = vsel %vm546, %v519, 0.0
        %v641 = vadd.f32 %v639, %v640
        %v642 = vsel %vm546, %v520, 0.0
        %v643 = vadd.f32 %v641, %v642
        %v644 = vsel %vm546, %v521, 0.0
        %v645 = vadd.f32 %v643, %v644
        %v646 = vrot.slane %v645, 4
        %v647 = vadd.f32 %v645, %v646
        %v648 = vrot.slane %v647, 2
        %v649 = vadd.f32 %v647, %v648
        %v650 = vrot.slane %v649, 1
        %v651 = vadd.f32 %v649, %v650
        %v652 = vsel %vm546, %v522, 0.0
        %v653 = vsel %vm546, %v523, 0.0
        %v654 = vadd.f32 %v652, %v653
        %v655 = vsel %vm546, %v524, 0.0
        %v656 = vadd.f32 %v654, %v655
        %v657 = vsel %vm546, %v525, 0.0
        %v658 = vadd.f32 %v656, %v657
        %v659 = vsel %vm546, %v526, 0.0
        %v660 = vadd.f32 %v658, %v659
        %v661 = vsel %vm546, %v527, 0.0
        %v662 = vadd.f32 %v660, %v661
        %v663 = vsel %vm546, %v528, 0.0
        %v664 = vadd.f32 %v662, %v663
        %v665 = vsel %vm546, %v529, 0.0
        %v666 = vadd.f32 %v664, %v665
        %v667 = vrot.slane %v666, 4
        %v668 = vadd.f32 %v666, %v667
        %v669 = vrot.slane %v668, 2
        %v670 = vadd.f32 %v668, %v669
        %v671 = vrot.slane %v670, 1
        %v672 = vadd.f32 %v670, %v671
        %v673 = vsel %vm546, %v530, 0.0
        %v674 = vsel %vm546, %v531, 0.0
        %v675 = vadd.f32 %v673, %v674
        %v676 = vsel %vm546, %v532, 0.0
        %v677 = vadd.f32 %v675, %v676
        %v678 = vsel %vm546, %v533, 0.0
        %v679 = vadd.f32 %v677, %v678
        %v680 = vsel %vm546, %v534, 0.0
        %v681 = vadd.f32 %v679, %v680
        %v682 = vsel %vm546, %v535, 0.0
        %v683 = vadd.f32 %v681, %v682
        %v684 = vsel %vm546, %v536, 0.0
        %v685 = vadd.f32 %v683, %v684
        %v686 = vsel %vm546, %v537, 0.0
        %v687 = vadd.f32 %v685, %v686
        %v688 = vrot.slane %v687, 4
        %v689 = vadd.f32 %v687, %v688
        %v690 = vrot.slane %v689, 2
        %v691 = vadd.f32 %v689, %v690
        %v692 = vrot.slane %v691, 1
        %v693 = vadd.f32 %v691, %v692
        %v694 = vsel %vm546, %v538, 0.0
        %v695 = vsel %vm546, %v539, 0.0
        %v696 = vadd.f32 %v694, %v695
        %v697 = vsel %vm546, %v540, 0.0
        %v698 = vadd.f32 %v696, %v697
        %v699 = vsel %vm546, %v541, 0.0
        %v700 = vadd.f32 %v698, %v699
        %v701 = vsel %vm546, %v542, 0.0
        %v702 = vadd.f32 %v700, %v701
        %v703 = vsel %vm546, %v543, 0.0
        %v704 = vadd.f32 %v702, %v703
        %v705 = vsel %vm546, %v544, 0.0
        %v706 = vadd.f32 %v704, %v705
        %v707 = vsel %vm546, %v545, 0.0
        %v708 = vadd.f32 %v706, %v707
        %v709 = vrot.slane %v708, 4
        %v710 = vadd.f32 %v708, %v709
        %v711 = vrot.slane %v710, 2
        %v712 = vadd.f32 %v710, %v711
        %v713 = vrot.slane %v712, 1
        %v714 = vadd.f32 %v712, %v713
        %v715 = vrcp.pop 64.0
        %v716 = vmul.f32 %v567, %v715
        %v717 = vmul.f32 %v588, %v715
        %v718 = vmul.f32 %v609, %v715
        %v719 = vmul.f32 %v630, %v715
        %v720 = vmul.f32 %v651, %v715
        %v721 = vmul.f32 %v672, %v715
        %v722 = vmul.f32 %v693, %v715
        %v723 = vmul.f32 %v714, %v715
        %v724 = vmul.f32 %v482, %v482
        %v725 = vmul.f32 %v483, %v483
        %v726 = vmul.f32 %v484, %v484
        %v727 = vmul.f32 %v485, %v485
        %v728 = vmul.f32 %v486, %v486
        %v729 = vmul.f32 %v487, %v487
        %v730 = vmul.f32 %v488, %v488
        %v731 = vmul.f32 %v489, %v489
        %v732 = vmul.f32 %v490, %v490
        %v733 = vmul.f32 %v491, %v491
        %v734 = vmul.f32 %v492, %v492
        %v735 = vmul.f32 %v493, %v493
        %v736 = vmul.f32 %v494, %v494
        %v737 = vmul.f32 %v495, %v495
        %v738 = vmul.f32 %v496, %v496
        %v739 = vmul.f32 %v497, %v497
        %v740 = vmul.f32 %v498, %v498
        %v741 = vmul.f32 %v499, %v499
        %v742 = vmul.f32 %v500, %v500
        %v743 = vmul.f32 %v501, %v501
        %v744 = vmul.f32 %v502, %v502
        %v745 = vmul.f32 %v503, %v503
        %v746 = vmul.f32 %v504, %v504
        %v747 = vmul.f32 %v505, %v505
        %v748 = vmul.f32 %v506, %v506
        %v749 = vmul.f32 %v507, %v507
        %v750 = vmul.f32 %v508, %v508
        %v751 = vmul.f32 %v509, %v509
        %v752 = vmul.f32 %v510, %v510
        %v753 = vmul.f32 %v511, %v511
        %v754 = vmul.f32 %v512, %v512
        %v755 = vmul.f32 %v513, %v513
        %v756 = vmul.f32 %v514, %v514
        %v757 = vmul.f32 %v515, %v515
        %v758 = vmul.f32 %v516, %v516
        %v759 = vmul.f32 %v517, %v517
        %v760 = vmul.f32 %v518, %v518
        %v761 = vmul.f32 %v519, %v519
        %v762 = vmul.f32 %v520, %v520
        %v763 = vmul.f32 %v521, %v521
        %v764 = vmul.f32 %v522, %v522
        %v765 = vmul.f32 %v523, %v523
        %v766 = vmul.f32 %v524, %v524
        %v767 = vmul.f32 %v525, %v525
        %v768 = vmul.f32 %v526, %v526
        %v769 = vmul.f32 %v527, %v527
        %v770 = vmul.f32 %v528, %v528
        %v771 = vmul.f32 %v529, %v529
        %v772 = vmul.f32 %v530, %v530
        %v773 = vmul.f32 %v531, %v531
        %v774 = vmul.f32 %v532, %v532
        %v775 = vmul.f32 %v533, %v533
        %v776 = vmul.f32 %v534, %v534
        %v777 = vmul.f32 %v535, %v535
        %v778 = vmul.f32 %v536, %v536
        %v779 = vmul.f32 %v537, %v537
        %v780 = vmul.f32 %v538, %v538
        %v781 = vmul.f32 %v539, %v539
        %v782 = vmul.f32 %v540, %v540
        %v783 = vmul.f32 %v541, %v541
        %v784 = vmul.f32 %v542, %v542
        %v785 = vmul.f32 %v543, %v543
        %v786 = vmul.f32 %v544, %v544
        %v787 = vmul.f32 %v545, %v545
        %v788 = vsel %vm546, %v724, 0.0
        %v789 = vsel %vm546, %v725, 0.0
        %v790 = vadd.f32 %v788, %v789
        %v791 = vsel %vm546, %v726, 0.0
        %v792 = vadd.f32 %v790, %v791
        %v793 = vsel %vm546, %v727, 0.0
        %v794 = vadd.f32 %v792, %v793
        %v795 = vsel %vm546, %v728, 0.0
        %v796 = vadd.f32 %v794, %v795
        %v797 = vsel %vm546, %v729, 0.0
        %v798 = vadd.f32 %v796, %v797
        %v799 = vsel %vm546, %v730, 0.0
        %v800 = vadd.f32 %v798, %v799
        %v801 = vsel %vm546, %v731, 0.0
        %v802 = vadd.f32 %v800, %v801
        %v803 = vrot.slane %v802, 4
        %v804 = vadd.f32 %v802, %v803
        %v805 = vrot.slane %v804, 2
        %v806 = vadd.f32 %v804, %v805
        %v807 = vrot.slane %v806, 1
        %v808 = vadd.f32 %v806, %v807
        %v809 = vsel %vm546, %v732, 0.0
        %v810 = vsel %vm546, %v733, 0.0
        %v811 = vadd.f32 %v809, %v810
        %v812 = vsel %vm546, %v734, 0.0
        %v813 = vadd.f32 %v811, %v812
        %v814 = vsel %vm546, %v735, 0.0
        %v815 = vadd.f32 %v813, %v814
        %v816 = vsel %vm546, %v736, 0.0
        %v817 = vadd.f32 %v815, %v816
        %v818 = vsel %vm546, %v737, 0.0
        %v819 = vadd.f32 %v817, %v818
        %v820 = vsel %vm546, %v738, 0.0
        %v821 = vadd.f32 %v819, %v820
        %v822 = vsel %vm546, %v739, 0.0
        %v823 = vadd.f32 %v821, %v822
        %v824 = vrot.slane %v823, 4
        %v825 = vadd.f32 %v823, %v824
        %v826 = vrot.slane %v825, 2
        %v827 = vadd.f32 %v825, %v826
        %v828 = vrot.slane %v827, 1
        %v829 = vadd.f32 %v827, %v828
        %v830 = vsel %vm546, %v740, 0.0
        %v831 = vsel %vm546, %v741, 0.0
        %v832 = vadd.f32 %v830, %v831
        %v833 = vsel %vm546, %v742, 0.0
        %v834 = vadd.f32 %v832, %v833
        %v835 = vsel %vm546, %v743, 0.0
        %v836 = vadd.f32 %v834, %v835
        %v837 = vsel %vm546, %v744, 0.0
        %v838 = vadd.f32 %v836, %v837
        %v839 = vsel %vm546, %v745, 0.0
        %v840 = vadd.f32 %v838, %v839
        %v841 = vsel %vm546, %v746, 0.0
        %v842 = vadd.f32 %v840, %v841
        %v843 = vsel %vm546, %v747, 0.0
        %v844 = vadd.f32 %v842, %v843
        %v845 = vrot.slane %v844, 4
        %v846 = vadd.f32 %v844, %v845
        %v847 = vrot.slane %v846, 2
        %v848 = vadd.f32 %v846, %v847
        %v849 = vrot.slane %v848, 1
        %v850 = vadd.f32 %v848, %v849
        %v851 = vsel %vm546, %v748, 0.0
        %v852 = vsel %vm546, %v749, 0.0
        %v853 = vadd.f32 %v851, %v852
        %v854 = vsel %vm546, %v750, 0.0
        %v855 = vadd.f32 %v853, %v854
        %v856 = vsel %vm546, %v751, 0.0
        %v857 = vadd.f32 %v855, %v856
        %v858 = vsel %vm546, %v752, 0.0
        %v859 = vadd.f32 %v857, %v858
        %v860 = vsel %vm546, %v753, 0.0
        %v861 = vadd.f32 %v859, %v860
        %v862 = vsel %vm546, %v754, 0.0
        %v863 = vadd.f32 %v861, %v862
        %v864 = vsel %vm546, %v755, 0.0
        %v865 = vadd.f32 %v863, %v864
        %v866 = vrot.slane %v865, 4
        %v867 = vadd.f32 %v865, %v866
        %v868 = vrot.slane %v867, 2
        %v869 = vadd.f32 %v867, %v868
        %v870 = vrot.slane %v869, 1
        %v871 = vadd.f32 %v869, %v870
        %v872 = vsel %vm546, %v756, 0.0
        %v873 = vsel %vm546, %v757, 0.0
        %v874 = vadd.f32 %v872, %v873
        %v875 = vsel %vm546, %v758, 0.0
        %v876 = vadd.f32 %v874, %v875
        %v877 = vsel %vm546, %v759, 0.0
        %v878 = vadd.f32 %v876, %v877
        %v879 = vsel %vm546, %v760, 0.0
        %v880 = vadd.f32 %v878, %v879
        %v881 = vsel %vm546, %v761, 0.0
        %v882 = vadd.f32 %v880, %v881
        %v883 = vsel %vm546, %v762, 0.0
        %v884 = vadd.f32 %v882, %v883
        %v885 = vsel %vm546, %v763, 0.0
        %v886 = vadd.f32 %v884, %v885
        %v887 = vrot.slane %v886, 4
        %v888 = vadd.f32 %v886, %v887
        %v889 = vrot.slane %v888, 2
        %v890 = vadd.f32 %v888, %v889
        %v891 = vrot.slane %v890, 1
        %v892 = vadd.f32 %v890, %v891
        %v893 = vsel %vm546, %v764, 0.0
        %v894 = vsel %vm546, %v765, 0.0
        %v895 = vadd.f32 %v893, %v894
        %v896 = vsel %vm546, %v766, 0.0
        %v897 = vadd.f32 %v895, %v896
        %v898 = vsel %vm546, %v767, 0.0
        %v899 = vadd.f32 %v897, %v898
        %v900 = vsel %vm546, %v768, 0.0
        %v901 = vadd.f32 %v899, %v900
        %v902 = vsel %vm546, %v769, 0.0
        %v903 = vadd.f32 %v901, %v902
        %v904 = vsel %vm546, %v770, 0.0
        %v905 = vadd.f32 %v903, %v904
        %v906 = vsel %vm546, %v771, 0.0
        %v907 = vadd.f32 %v905, %v906
        %v908 = vrot.slane %v907, 4
        %v909 = vadd.f32 %v907, %v908
        %v910 = vrot.slane %v909, 2
        %v911 = vadd.f32 %v909, %v910
        %v912 = vrot.slane %v911, 1
        %v913 = vadd.f32 %v911, %v912
        %v914 = vsel %vm546, %v772, 0.0
        %v915 = vsel %vm546, %v773, 0.0
        %v916 = vadd.f32 %v914, %v915
        %v917 = vsel %vm546, %v774, 0.0
        %v918 = vadd.f32 %v916, %v917
        %v919 = vsel %vm546, %v775, 0.0
        %v920 = vadd.f32 %v918, %v919
        %v921 = vsel %vm546, %v776, 0.0
        %v922 = vadd.f32 %v920, %v921
        %v923 = vsel %vm546, %v777, 0.0
        %v924 = vadd.f32 %v922, %v923
        %v925 = vsel %vm546, %v778, 0.0
        %v926 = vadd.f32 %v924, %v925
        %v927 = vsel %vm546, %v779, 0.0
        %v928 = vadd.f32 %v926, %v927
        %v929 = vrot.slane %v928, 4
        %v930 = vadd.f32 %v928, %v929
        %v931 = vrot.slane %v930, 2
        %v932 = vadd.f32 %v930, %v931
        %v933 = vrot.slane %v932, 1
        %v934 = vadd.f32 %v932, %v933
        %v935 = vsel %vm546, %v780, 0.0
        %v936 = vsel %vm546, %v781, 0.0
        %v937 = vadd.f32 %v935, %v936
        %v938 = vsel %vm546, %v782, 0.0
        %v939 = vadd.f32 %v937, %v938
        %v940 = vsel %vm546, %v783, 0.0
        %v941 = vadd.f32 %v939, %v940
        %v942 = vsel %vm546, %v784, 0.0
        %v943 = vadd.f32 %v941, %v942
        %v944 = vsel %vm546, %v785, 0.0
        %v945 = vadd.f32 %v943, %v944
        %v946 = vsel %vm546, %v786, 0.0
        %v947 = vadd.f32 %v945, %v946
        %v948 = vsel %vm546, %v787, 0.0
        %v949 = vadd.f32 %v947, %v948
        %v950 = vrot.slane %v949, 4
        %v951 = vadd.f32 %v949, %v950
        %v952 = vrot.slane %v951, 2
        %v953 = vadd.f32 %v951, %v952
        %v954 = vrot.slane %v953, 1
        %v955 = vadd.f32 %v953, %v954
        %v956 = vmul.f32 %v808, %v715
        %v957 = vmul.f32 %v829, %v715
        %v958 = vmul.f32 %v850, %v715
        %v959 = vmul.f32 %v871, %v715
        %v960 = vmul.f32 %v892, %v715
        %v961 = vmul.f32 %v913, %v715
        %v962 = vmul.f32 %v934, %v715
        %v963 = vmul.f32 %v955, %v715
        %v964 = vmul.f32 %v716, %v716
        %v965 = vmul.f32 %v717, %v717
        %v966 = vmul.f32 %v718, %v718
        %v967 = vmul.f32 %v719, %v719
        %v968 = vmul.f32 %v720, %v720
        %v969 = vmul.f32 %v721, %v721
        %v970 = vmul.f32 %v722, %v722
        %v971 = vmul.f32 %v723, %v723
        %v972 = vsub.f32 %v956, %v964
        %v973 = vsub.f32 %v957, %v965
        %v974 = vsub.f32 %v958, %v966
        %v975 = vsub.f32 %v959, %v967
        %v976 = vsub.f32 %v960, %v968
        %v977 = vsub.f32 %v961, %v969
        %v978 = vsub.f32 %v962, %v970
        %v979 = vsub.f32 %v963, %v971
        %v980 = vmax.f32 %v972, 0.0
        %v981 = vmax.f32 %v973, 0.0
        %v982 = vmax.f32 %v974, 0.0
        %v983 = vmax.f32 %v975, 0.0
        %v984 = vmax.f32 %v976, 0.0
        %v985 = vmax.f32 %v977, 0.0
        %v986 = vmax.f32 %v978, 0.0
        %v987 = vmax.f32 %v979, 0.0
        %v988 = vld [vmem:[%s6] sm:$0x1]
        %v989 = vadd.f32 %v980, 1e-05
        %v990 = vadd.f32 %v981, 1e-05
        %v991 = vadd.f32 %v982, 1e-05
        %v992 = vadd.f32 %v983, 1e-05
        %v993 = vadd.f32 %v984, 1e-05
        %v994 = vadd.f32 %v985, 1e-05
        %v995 = vadd.f32 %v986, 1e-05
        %v996 = vadd.f32 %v987, 1e-05
        %v997 = vrsqrt.pop %v989
        %v998 = vrsqrt.pop %v990
        %v999 = vrsqrt.pop %v991
        %v1000 = vrsqrt.pop %v992
        %v1001 = vrsqrt.pop %v993
        %v1002 = vrsqrt.pop %v994
        %v1003 = vrsqrt.pop %v995
        %v1004 = vrsqrt.pop %v996
        %v1005 = vmul.f32 %v988, %v997
        %v1006 = vmul.f32 %v988, %v998
        %v1007 = vmul.f32 %v988, %v999
        %v1008 = vmul.f32 %v988, %v1000
        %v1009 = vmul.f32 %v988, %v1001
        %v1010 = vmul.f32 %v988, %v1002
        %v1011 = vmul.f32 %v988, %v1003
        %v1012 = vmul.f32 %v988, %v1004
        %v1013 = vld [vmem:[%s6 + $0x1] sm:$0x1]
        %v1014 = vmul.f32 %v716, %v1005
        %v1015 = vmul.f32 %v717, %v1006
        %v1016 = vmul.f32 %v718, %v1007
        %v1017 = vmul.f32 %v719, %v1008
        %v1018 = vmul.f32 %v720, %v1009
        %v1019 = vmul.f32 %v721, %v1010
        %v1020 = vmul.f32 %v722, %v1011
        %v1021 = vmul.f32 %v723, %v1012
        %v1022 = vsub.f32 %v1013, %v1014
        %v1023 = vsub.f32 %v1013, %v1015
        %v1024 = vsub.f32 %v1013, %v1016
        %v1025 = vsub.f32 %v1013, %v1017
        %v1026 = vsub.f32 %v1013, %v1018
        %v1027 = vsub.f32 %v1013, %v1019
        %v1028 = vsub.f32 %v1013, %v1020
        %v1029 = vsub.f32 %v1013, %v1021
        %v1030 = vlaneseq
        %v1031 = vshrl.u32 %v1030, 7
        %v1032 = vsub.s32 0, %v1031
        %v1033 = vrot.slane %v1005, %v1032
        %v1034 = vlaneseq
        %v1035 = vshrl.u32 %v1034, 7
        %v1036 = vsub.s32 0, %v1035
        %v1037 = vrot.slane %v1006, %v1036
        %v1038 = vlaneseq
        %v1039 = vshrl.u32 %v1038, 7
        %v1040 = vsub.s32 0, %v1039
        %v1041 = vrot.slane %v1007, %v1040
        %v1042 = vlaneseq
        %v1043 = vshrl.u32 %v1042, 7
        %v1044 = vsub.s32 0, %v1043
        %v1045 = vrot.slane %v1008, %v1044
        %v1046 = vlaneseq
        %v1047 = vshrl.u32 %v1046, 7
        %v1048 = vsub.s32 0, %v1047
        %v1049 = vrot.slane %v1009, %v1048
        %v1050 = vlaneseq
        %v1051 = vshrl.u32 %v1050, 7
        %v1052 = vsub.s32 0, %v1051
        %v1053 = vrot.slane %v1010, %v1052
        %v1054 = vlaneseq
        %v1055 = vshrl.u32 %v1054, 7
        %v1056 = vsub.s32 0, %v1055
        %v1057 = vrot.slane %v1011, %v1056
        %v1058 = vlaneseq
        %v1059 = vshrl.u32 %v1058, 7
        %v1060 = vsub.s32 0, %v1059
        %v1061 = vrot.slane %v1012, %v1060
        %v1062 = vmul.f32 %v482, %v1033
        %v1063 = vmul.f32 %v483, %v1033
        %v1064 = vmul.f32 %v484, %v1033
        %v1065 = vmul.f32 %v485, %v1033
        %v1066 = vmul.f32 %v486, %v1033
        %v1067 = vmul.f32 %v487, %v1033
        %v1068 = vmul.f32 %v488, %v1033
        %v1069 = vmul.f32 %v489, %v1033
        %v1070 = vmul.f32 %v490, %v1037
        %v1071 = vmul.f32 %v491, %v1037
        %v1072 = vmul.f32 %v492, %v1037
        %v1073 = vmul.f32 %v493, %v1037
        %v1074 = vmul.f32 %v494, %v1037
        %v1075 = vmul.f32 %v495, %v1037
        %v1076 = vmul.f32 %v496, %v1037
        %v1077 = vmul.f32 %v497, %v1037
        %v1078 = vmul.f32 %v498, %v1041
        %v1079 = vmul.f32 %v499, %v1041
        %v1080 = vmul.f32 %v500, %v1041
        %v1081 = vmul.f32 %v501, %v1041
        %v1082 = vmul.f32 %v502, %v1041
        %v1083 = vmul.f32 %v503, %v1041
        %v1084 = vmul.f32 %v504, %v1041
        %v1085 = vmul.f32 %v505, %v1041
        %v1086 = vmul.f32 %v506, %v1045
        %v1087 = vmul.f32 %v507, %v1045
        %v1088 = vmul.f32 %v508, %v1045
        %v1089 = vmul.f32 %v509, %v1045
        %v1090 = vmul.f32 %v510, %v1045
        %v1091 = vmul.f32 %v511, %v1045
        %v1092 = vmul.f32 %v512, %v1045
        %v1093 = vmul.f32 %v513, %v1045
        %v1094 = vmul.f32 %v514, %v1049
        %v1095 = vmul.f32 %v515, %v1049
        %v1096 = vmul.f32 %v516, %v1049
        %v1097 = vmul.f32 %v517, %v1049
        %v1098 = vmul.f32 %v518, %v1049
        %v1099 = vmul.f32 %v519, %v1049
        %v1100 = vmul.f32 %v520, %v1049
        %v1101 = vmul.f32 %v521, %v1049
        %v1102 = vmul.f32 %v522, %v1053
        %v1103 = vmul.f32 %v523, %v1053
        %v1104 = vmul.f32 %v524, %v1053
        %v1105 = vmul.f32 %v525, %v1053
        %v1106 = vmul.f32 %v526, %v1053
        %v1107 = vmul.f32 %v527, %v1053
        %v1108 = vmul.f32 %v528, %v1053
        %v1109 = vmul.f32 %v529, %v1053
        %v1110 = vmul.f32 %v530, %v1057
        %v1111 = vmul.f32 %v531, %v1057
        %v1112 = vmul.f32 %v532, %v1057
        %v1113 = vmul.f32 %v533, %v1057
        %v1114 = vmul.f32 %v534, %v1057
        %v1115 = vmul.f32 %v535, %v1057
        %v1116 = vmul.f32 %v536, %v1057
        %v1117 = vmul.f32 %v537, %v1057
        %v1118 = vmul.f32 %v538, %v1061
        %v1119 = vmul.f32 %v539, %v1061
        %v1120 = vmul.f32 %v540, %v1061
        %v1121 = vmul.f32 %v541, %v1061
        %v1122 = vmul.f32 %v542, %v1061
        %v1123 = vmul.f32 %v543, %v1061
        %v1124 = vmul.f32 %v544, %v1061
        %v1125 = vmul.f32 %v545, %v1061
        %v1126 = vlaneseq
        %v1127 = vshrl.u32 %v1126, 7
        %v1128 = vsub.s32 0, %v1127
        %v1129 = vrot.slane %v1022, %v1128
        %v1130 = vlaneseq
        %v1131 = vshrl.u32 %v1130, 7
        %v1132 = vsub.s32 0, %v1131
        %v1133 = vrot.slane %v1023, %v1132
        %v1134 = vlaneseq
        %v1135 = vshrl.u32 %v1134, 7
        %v1136 = vsub.s32 0, %v1135
        %v1137 = vrot.slane %v1024, %v1136
        %v1138 = vlaneseq
        %v1139 = vshrl.u32 %v1138, 7
        %v1140 = vsub.s32 0, %v1139
        %v1141 = vrot.slane %v1025, %v1140
        %v1142 = vlaneseq
        %v1143 = vshrl.u32 %v1142, 7
        %v1144 = vsub.s32 0, %v1143
        %v1145 = vrot.slane %v1026, %v1144
        %v1146 = vlaneseq
        %v1147 = vshrl.u32 %v1146, 7
        %v1148 = vsub.s32 0, %v1147
        %v1149 = vrot.slane %v1027, %v1148
        %v1150 = vlaneseq
        %v1151 = vshrl.u32 %v1150, 7
        %v1152 = vsub.s32 0, %v1151
        %v1153 = vrot.slane %v1028, %v1152
        %v1154 = vlaneseq
        %v1155 = vshrl.u32 %v1154, 7
        %v1156 = vsub.s32 0, %v1155
        %v1157 = vrot.slane %v1029, %v1156
        %v1158 = vadd.f32 %v1062, %v1129
        %v1159 = vadd.f32 %v1063, %v1129
        %v1160 = vadd.f32 %v1064, %v1129
        %v1161 = vadd.f32 %v1065, %v1129
        %v1162 = vadd.f32 %v1066, %v1129
        %v1163 = vadd.f32 %v1067, %v1129
        %v1164 = vadd.f32 %v1068, %v1129
        %v1165 = vadd.f32 %v1069, %v1129
        %v1166 = vadd.f32 %v1070, %v1133
        %v1167 = vadd.f32 %v1071, %v1133
        %v1168 = vadd.f32 %v1072, %v1133
        %v1169 = vadd.f32 %v1073, %v1133
        %v1170 = vadd.f32 %v1074, %v1133
        %v1171 = vadd.f32 %v1075, %v1133
        %v1172 = vadd.f32 %v1076, %v1133
        %v1173 = vadd.f32 %v1077, %v1133
        %v1174 = vadd.f32 %v1078, %v1137
        %v1175 = vadd.f32 %v1079, %v1137
        %v1176 = vadd.f32 %v1080, %v1137
        %v1177 = vadd.f32 %v1081, %v1137
        %v1178 = vadd.f32 %v1082, %v1137
        %v1179 = vadd.f32 %v1083, %v1137
        %v1180 = vadd.f32 %v1084, %v1137
        %v1181 = vadd.f32 %v1085, %v1137
        %v1182 = vadd.f32 %v1086, %v1141
        %v1183 = vadd.f32 %v1087, %v1141
        %v1184 = vadd.f32 %v1088, %v1141
        %v1185 = vadd.f32 %v1089, %v1141
        %v1186 = vadd.f32 %v1090, %v1141
        %v1187 = vadd.f32 %v1091, %v1141
        %v1188 = vadd.f32 %v1092, %v1141
        %v1189 = vadd.f32 %v1093, %v1141
        %v1190 = vadd.f32 %v1094, %v1145
        %v1191 = vadd.f32 %v1095, %v1145
        %v1192 = vadd.f32 %v1096, %v1145
        %v1193 = vadd.f32 %v1097, %v1145
        %v1194 = vadd.f32 %v1098, %v1145
        %v1195 = vadd.f32 %v1099, %v1145
        %v1196 = vadd.f32 %v1100, %v1145
        %v1197 = vadd.f32 %v1101, %v1145
        %v1198 = vadd.f32 %v1102, %v1149
        %v1199 = vadd.f32 %v1103, %v1149
        %v1200 = vadd.f32 %v1104, %v1149
        %v1201 = vadd.f32 %v1105, %v1149
        %v1202 = vadd.f32 %v1106, %v1149
        %v1203 = vadd.f32 %v1107, %v1149
        %v1204 = vadd.f32 %v1108, %v1149
        %v1205 = vadd.f32 %v1109, %v1149
        %v1206 = vadd.f32 %v1110, %v1153
        %v1207 = vadd.f32 %v1111, %v1153
        %v1208 = vadd.f32 %v1112, %v1153
        %v1209 = vadd.f32 %v1113, %v1153
        %v1210 = vadd.f32 %v1114, %v1153
        %v1211 = vadd.f32 %v1115, %v1153
        %v1212 = vadd.f32 %v1116, %v1153
        %v1213 = vadd.f32 %v1117, %v1153
        %v1214 = vadd.f32 %v1118, %v1157
        %v1215 = vadd.f32 %v1119, %v1157
        %v1216 = vadd.f32 %v1120, %v1157
        %v1217 = vadd.f32 %v1121, %v1157
        %v1218 = vadd.f32 %v1122, %v1157
        %v1219 = vadd.f32 %v1123, %v1157
        %v1220 = vadd.f32 %v1124, %v1157
        %v1221 = vadd.f32 %v1125, %v1157
        %v1222 = vmax.f32 %v1158, 0.0
        %v1223 = vmax.f32 %v1159, 0.0
        %v1224 = vmax.f32 %v1160, 0.0
        %v1225 = vmax.f32 %v1161, 0.0
        %v1226 = vmax.f32 %v1162, 0.0
        %v1227 = vmax.f32 %v1163, 0.0
        %v1228 = vmax.f32 %v1164, 0.0
        %v1229 = vmax.f32 %v1165, 0.0
        %v1230 = vmax.f32 %v1166, 0.0
        %v1231 = vmax.f32 %v1167, 0.0
        %v1232 = vmax.f32 %v1168, 0.0
        %v1233 = vmax.f32 %v1169, 0.0
        %v1234 = vmax.f32 %v1170, 0.0
        %v1235 = vmax.f32 %v1171, 0.0
        %v1236 = vmax.f32 %v1172, 0.0
        %v1237 = vmax.f32 %v1173, 0.0
        %v1238 = vmax.f32 %v1174, 0.0
        %v1239 = vmax.f32 %v1175, 0.0
        %v1240 = vmax.f32 %v1176, 0.0
        %v1241 = vmax.f32 %v1177, 0.0
        %v1242 = vmax.f32 %v1178, 0.0
        %v1243 = vmax.f32 %v1179, 0.0
        %v1244 = vmax.f32 %v1180, 0.0
        %v1245 = vmax.f32 %v1181, 0.0
        %v1246 = vmax.f32 %v1182, 0.0
        %v1247 = vmax.f32 %v1183, 0.0
        %v1248 = vmax.f32 %v1184, 0.0
        %v1249 = vmax.f32 %v1185, 0.0
        %v1250 = vmax.f32 %v1186, 0.0
        %v1251 = vmax.f32 %v1187, 0.0
        %v1252 = vmax.f32 %v1188, 0.0
        %v1253 = vmax.f32 %v1189, 0.0
        %v1254 = vmax.f32 %v1190, 0.0
        %v1255 = vmax.f32 %v1191, 0.0
        %v1256 = vmax.f32 %v1192, 0.0
        %v1257 = vmax.f32 %v1193, 0.0
        %v1258 = vmax.f32 %v1194, 0.0
        %v1259 = vmax.f32 %v1195, 0.0
        %v1260 = vmax.f32 %v1196, 0.0
        %v1261 = vmax.f32 %v1197, 0.0
        %v1262 = vmax.f32 %v1198, 0.0
        %v1263 = vmax.f32 %v1199, 0.0
        %v1264 = vmax.f32 %v1200, 0.0
        %v1265 = vmax.f32 %v1201, 0.0
        %v1266 = vmax.f32 %v1202, 0.0
        %v1267 = vmax.f32 %v1203, 0.0
        %v1268 = vmax.f32 %v1204, 0.0
        %v1269 = vmax.f32 %v1205, 0.0
        %v1270 = vmax.f32 %v1206, 0.0
        %v1271 = vmax.f32 %v1207, 0.0
        %v1272 = vmax.f32 %v1208, 0.0
        %v1273 = vmax.f32 %v1209, 0.0
        %v1274 = vmax.f32 %v1210, 0.0
        %v1275 = vmax.f32 %v1211, 0.0
        %v1276 = vmax.f32 %v1212, 0.0
        %v1277 = vmax.f32 %v1213, 0.0
        %v1278 = vmax.f32 %v1214, 0.0
        %v1279 = vmax.f32 %v1215, 0.0
        %v1280 = vmax.f32 %v1216, 0.0
        %v1281 = vmax.f32 %v1217, 0.0
        %v1282 = vmax.f32 %v1218, 0.0
        %v1283 = vmax.f32 %v1219, 0.0
        %v1284 = vmax.f32 %v1220, 0.0
        %v1285 = vmax.f32 %v1221, 0.0
        %v1286 = vpack.c.bf16 %v1223, %v1222
        %v1287 = vpack.c.bf16 %v1225, %v1224
        %v1288 = vpack.c.bf16 %v1227, %v1226
        %v1289 = vpack.c.bf16 %v1229, %v1228
        %v1290 = vpack.c.bf16 %v1231, %v1230
        %v1291 = vpack.c.bf16 %v1233, %v1232
        %v1292 = vpack.c.bf16 %v1235, %v1234
        %v1293 = vpack.c.bf16 %v1237, %v1236
        %v1294 = vpack.c.bf16 %v1239, %v1238
        %v1295 = vpack.c.bf16 %v1241, %v1240
        %v1296 = vpack.c.bf16 %v1243, %v1242
        %v1297 = vpack.c.bf16 %v1245, %v1244
        %v1298 = vpack.c.bf16 %v1247, %v1246
        %v1299 = vpack.c.bf16 %v1249, %v1248
        %v1300 = vpack.c.bf16 %v1251, %v1250
        %v1301 = vpack.c.bf16 %v1253, %v1252
        %v1302 = vpack.c.bf16 %v1255, %v1254
        %v1303 = vpack.c.bf16 %v1257, %v1256
        %v1304 = vpack.c.bf16 %v1259, %v1258
        %v1305 = vpack.c.bf16 %v1261, %v1260
        %v1306 = vpack.c.bf16 %v1263, %v1262
        %v1307 = vpack.c.bf16 %v1265, %v1264
        %v1308 = vpack.c.bf16 %v1267, %v1266
        %v1309 = vpack.c.bf16 %v1269, %v1268
        %v1310 = vpack.c.bf16 %v1271, %v1270
        %v1311 = vpack.c.bf16 %v1273, %v1272
        %v1312 = vpack.c.bf16 %v1275, %v1274
        %v1313 = vpack.c.bf16 %v1277, %v1276
        %v1314 = vpack.c.bf16 %v1279, %v1278
        %v1315 = vpack.c.bf16 %v1281, %v1280
        %v1316 = vpack.c.bf16 %v1283, %v1282
        %v1317 = vpack.c.bf16 %v1285, %v1284
        %v1318 = vld [vmem:[%s1] sm:$0xf]
        %v1319 = vld [vmem:[%s1 + $0x4] sm:$0xf]
        %v1322 = vunpack.c.l.b16 %v1318
        %v1323 = vunpack.c.l.b16 %v1319
        %v1324 = vpack.c.b16 %v1323, %v1322
        %v1327 = vsel %vm546, %v1286, 0
        %v1330 = vsel %vm546, %v1287, 0
        %v1333 = vsel %vm546, %v1288, 0
        %v1336 = vsel %vm546, %v1289, 0
        %v1339 = vsel %vm546, %v1290, 0
        %v1342 = vsel %vm546, %v1291, 0
        %v1345 = vsel %vm546, %v1292, 0
        %v1348 = vsel %vm546, %v1293, 0
        %v1351 = vsel %vm546, %v1294, 0
        %v1354 = vsel %vm546, %v1295, 0
        %v1357 = vsel %vm546, %v1296, 0
        %v1360 = vsel %vm546, %v1297, 0
        %v1363 = vsel %vm546, %v1298, 0
        %v1366 = vsel %vm546, %v1299, 0
        %v1369 = vsel %vm546, %v1300, 0
        %v1372 = vsel %vm546, %v1301, 0
        %v1375 = vsel %vm546, %v1302, 0
        %v1378 = vsel %vm546, %v1303, 0
        %v1381 = vsel %vm546, %v1304, 0
        %v1384 = vsel %vm546, %v1305, 0
        %v1387 = vsel %vm546, %v1306, 0
        %v1390 = vsel %vm546, %v1307, 0
        %v1393 = vsel %vm546, %v1308, 0
        %v1396 = vsel %vm546, %v1309, 0
        %v1399 = vsel %vm546, %v1310, 0
        %v1402 = vsel %vm546, %v1311, 0
        %v1405 = vsel %vm546, %v1312, 0
        %v1408 = vsel %vm546, %v1313, 0
        %v1411 = vsel %vm546, %v1314, 0
        %v1414 = vsel %vm546, %v1315, 0
        %v1417 = vsel %vm546, %v1316, 0
        %v1420 = vsel %vm546, %v1317, 0
        %1422 = vmatprep.subr.bf16.mxu0 0
        %1423 = vmatpush1.bf16.msra.mxu0 %v1324
        %1424 = vmatprep.subr.bf16.mxu0 0
        %1425 = vmatpush1.bf16.msra.mxu0 0
        %1426 = vmatprep.subr.bf16.mxu0 0
        %1427 = vmatpush1.bf16.msra.mxu0 0
        %1428 = vmatprep.subr.bf16.mxu0 0
        %1429 = vmatpush1.bf16.msra.mxu0 0
        %1430 = vmatprep.subr.bf16.mxu0 0
        %1431 = vmatpush1.bf16.msra.mxu0 0
        %1432 = vmatprep.subr.bf16.mxu0 0
        %1433 = vmatpush1.bf16.msra.mxu0 0
        %1434 = vmatprep.subr.bf16.mxu0 0
        %1435 = vmatpush1.bf16.msra.mxu0 0
        %1436 = vmatprep.subr.bf16.mxu0 0
        %1437 = vmatpush1.bf16.msra.mxu0 0
        %1438 = vmatprep.subr.bf16.mxu0 0
        %1439 = vmatpush1.bf16.msra.mxu0 0
        %1440 = vmatprep.subr.bf16.mxu0 0
        %1441 = vmatpush1.bf16.msra.mxu0 0
        %1442 = vmatprep.subr.bf16.mxu0 0
        %1443 = vmatpush1.bf16.msra.mxu0 0
        %1444 = vmatprep.subr.bf16.mxu0 0
        %1445 = vmatpush1.bf16.msra.mxu0 0
        %1446 = vmatprep.subr.bf16.mxu0 0
        %1447 = vmatpush1.bf16.msra.mxu0 0
        %1448 = vmatprep.subr.bf16.mxu0 0
        %1449 = vmatpush1.bf16.msra.mxu0 0
        %1450 = vmatprep.subr.bf16.mxu0 0
        %1451 = vmatpush1.bf16.msra.mxu0 0
        %1452 = vmatprep.subr.bf16.mxu0 0
        %1453 = vmatpush1.bf16.msra.mxu0 0
        %1454 = vmatprep.mubr.bf16.mxu0 0
        %1455 = vmatmul.mubr.bf16.gmra.mrb[0].mxu0 %v1327
        %v1456 = vpop.f32.mrb[0].mxu0
        %v1457 = vadd.f32 0.0, %v1456
        %v1458 = vpop.f32.mrb[0].mxu0
        %v1459 = vpop.f32.mrb[0].mxu0
        %v1460 = vadd.f32 0.0, %v1459
        %v1461 = vpop.f32.mrb[0].mxu0
        %1462 = vmatprep.mubr.bf16.mxu0 0
        %1463 = vmatmul.mubr.bf16.gmra.mrb[0].mxu0 %v1330
        %v1464 = vpop.f32.mrb[0].mxu0
        %v1465 = vadd.f32 0.0, %v1464
        %v1466 = vpop.f32.mrb[0].mxu0
        %v1467 = vpop.f32.mrb[0].mxu0
        %v1468 = vadd.f32 0.0, %v1467
        %v1469 = vpop.f32.mrb[0].mxu0
        %1470 = vmatprep.mubr.bf16.mxu0 0
        %1471 = vmatmul.mubr.bf16.gmra.mrb[0].mxu0 %v1333
        %v1472 = vpop.f32.mrb[0].mxu0
        %v1473 = vadd.f32 0.0, %v1472
        %v1474 = vpop.f32.mrb[0].mxu0
        %v1475 = vpop.f32.mrb[0].mxu0
        %v1476 = vadd.f32 0.0, %v1475
        %v1477 = vpop.f32.mrb[0].mxu0
        %1478 = vmatprep.mubr.bf16.mxu0 0
        %1479 = vmatmul.mubr.bf16.gmra.mrb[0].mxu0 %v1336
        %v1480 = vpop.f32.mrb[0].mxu0
        %v1481 = vadd.f32 0.0, %v1480
        %v1482 = vpop.f32.mrb[0].mxu0
        %v1483 = vpop.f32.mrb[0].mxu0
        %v1484 = vadd.f32 0.0, %v1483
        %v1485 = vpop.f32.mrb[0].mxu0
        %1486 = vmatprep.mubr.bf16.mxu0 0
        %1487 = vmatmul.mubr.bf16.gmra.mrb[0].mxu0 %v1339
        %v1488 = vpop.f32.mrb[0].mxu0
        %v1489 = vadd.f32 0.0, %v1488
        %v1490 = vpop.f32.mrb[0].mxu0
        %v1491 = vpop.f32.mrb[0].mxu0
        %v1492 = vadd.f32 0.0, %v1491
        %v1493 = vpop.f32.mrb[0].mxu0
        %1494 = vmatprep.mubr.bf16.mxu0 0
        %1495 = vmatmul.mubr.bf16.gmra.mrb[0].mxu0 %v1342
        %v1496 = vpop.f32.mrb[0].mxu0
        %v1497 = vadd.f32 0.0, %v1496
        %v1498 = vpop.f32.mrb[0].mxu0
        %v1499 = vpop.f32.mrb[0].mxu0
        %v1500 = vadd.f32 0.0, %v1499
        %v1501 = vpop.f32.mrb[0].mxu0
        %1502 = vmatprep.mubr.bf16.mxu0 0
        %1503 = vmatmul.mubr.bf16.gmra.mrb[0].mxu0 %v1345
        %v1504 = vpop.f32.mrb[0].mxu0
        %v1505 = vadd.f32 0.0, %v1504
        %v1506 = vpop.f32.mrb[0].mxu0
        %v1507 = vpop.f32.mrb[0].mxu0
        %v1508 = vadd.f32 0.0, %v1507
        %v1509 = vpop.f32.mrb[0].mxu0
        %1510 = vmatprep.mubr.bf16.mxu0 0
        %1511 = vmatmul.mubr.bf16.gmra.mrb[0].mxu0 %v1348
        %v1512 = vpop.f32.mrb[0].mxu0
        %v1513 = vadd.f32 0.0, %v1512
        %v1514 = vpop.f32.mrb[0].mxu0
        %v1515 = vpop.f32.mrb[0].mxu0
        %v1516 = vadd.f32 0.0, %v1515
        %v1517 = vpop.f32.mrb[0].mxu0
        %1518 = vmatprep.mubr.bf16.mxu0 0
        %1519 = vmatmul.mubr.bf16.gmra.mrb[0].mxu0 %v1351
        %v1520 = vpop.f32.mrb[0].mxu0
        %v1521 = vadd.f32 0.0, %v1520
        %v1522 = vpop.f32.mrb[0].mxu0
        %v1523 = vpop.f32.mrb[0].mxu0
        %v1524 = vadd.f32 0.0, %v1523
        %v1525 = vpop.f32.mrb[0].mxu0
        %1526 = vmatprep.mubr.bf16.mxu0 0
        %1527 = vmatmul.mubr.bf16.gmra.mrb[0].mxu0 %v1354
        %v1528 = vpop.f32.mrb[0].mxu0
        %v1529 = vadd.f32 0.0, %v1528
        %v1530 = vpop.f32.mrb[0].mxu0
        %v1531 = vpop.f32.mrb[0].mxu0
        %v1532 = vadd.f32 0.0, %v1531
        %v1533 = vpop.f32.mrb[0].mxu0
        %1534 = vmatprep.mubr.bf16.mxu0 0
        %1535 = vmatmul.mubr.bf16.gmra.mrb[0].mxu0 %v1357
        %v1536 = vpop.f32.mrb[0].mxu0
        %v1537 = vadd.f32 0.0, %v1536
        %v1538 = vpop.f32.mrb[0].mxu0
        %v1539 = vpop.f32.mrb[0].mxu0
        %v1540 = vadd.f32 0.0, %v1539
        %v1541 = vpop.f32.mrb[0].mxu0
        %1542 = vmatprep.mubr.bf16.mxu0 0
        %1543 = vmatmul.mubr.bf16.gmra.mrb[0].mxu0 %v1360
        %v1544 = vpop.f32.mrb[0].mxu0
        %v1545 = vadd.f32 0.0, %v1544
        %v1546 = vpop.f32.mrb[0].mxu0
        %v1547 = vpop.f32.mrb[0].mxu0
        %v1548 = vadd.f32 0.0, %v1547
        %v1549 = vpop.f32.mrb[0].mxu0
        %1550 = vmatprep.mubr.bf16.mxu0 0
        %1551 = vmatmul.mubr.bf16.gmra.mrb[0].mxu0 %v1363
        %v1552 = vpop.f32.mrb[0].mxu0
        %v1553 = vadd.f32 0.0, %v1552
        %v1554 = vpop.f32.mrb[0].mxu0
        %v1555 = vpop.f32.mrb[0].mxu0
        %v1556 = vadd.f32 0.0, %v1555
        %v1557 = vpop.f32.mrb[0].mxu0
        %1558 = vmatprep.mubr.bf16.mxu0 0
        %1559 = vmatmul.mubr.bf16.gmra.mrb[0].mxu0 %v1366
        %v1560 = vpop.f32.mrb[0].mxu0
        %v1561 = vadd.f32 0.0, %v1560
        %v1562 = vpop.f32.mrb[0].mxu0
        %v1563 = vpop.f32.mrb[0].mxu0
        %v1564 = vadd.f32 0.0, %v1563
        %v1565 = vpop.f32.mrb[0].mxu0
        %1566 = vmatprep.mubr.bf16.mxu0 0
        %1567 = vmatmul.mubr.bf16.gmra.mrb[0].mxu0 %v1369
        %v1568 = vpop.f32.mrb[0].mxu0
        %v1569 = vadd.f32 0.0, %v1568
        %v1570 = vpop.f32.mrb[0].mxu0
        %v1571 = vpop.f32.mrb[0].mxu0
        %v1572 = vadd.f32 0.0, %v1571
        %v1573 = vpop.f32.mrb[0].mxu0
        %1574 = vmatprep.mubr.bf16.mxu0 0
        %1575 = vmatmul.mubr.bf16.gmra.mrb[0].mxu0 %v1372
        %v1576 = vpop.f32.mrb[0].mxu0
        %v1577 = vadd.f32 0.0, %v1576
        %v1578 = vpop.f32.mrb[0].mxu0
        %v1579 = vpop.f32.mrb[0].mxu0
        %v1580 = vadd.f32 0.0, %v1579
        %v1581 = vpop.f32.mrb[0].mxu0
        %1582 = vmatprep.mubr.bf16.mxu0 0
        %1583 = vmatmul.mubr.bf16.gmra.mrb[0].mxu0 %v1375
        %v1584 = vpop.f32.mrb[0].mxu0
        %v1585 = vadd.f32 0.0, %v1584
        %v1586 = vpop.f32.mrb[0].mxu0
        %v1587 = vpop.f32.mrb[0].mxu0
        %v1588 = vadd.f32 0.0, %v1587
        %v1589 = vpop.f32.mrb[0].mxu0
        %1590 = vmatprep.mubr.bf16.mxu0 0
        %1591 = vmatmul.mubr.bf16.gmra.mrb[0].mxu0 %v1378
        %v1592 = vpop.f32.mrb[0].mxu0
        %v1593 = vadd.f32 0.0, %v1592
        %v1594 = vpop.f32.mrb[0].mxu0
        %v1595 = vpop.f32.mrb[0].mxu0
        %v1596 = vadd.f32 0.0, %v1595
        %v1597 = vpop.f32.mrb[0].mxu0
        %1598 = vmatprep.mubr.bf16.mxu0 0
        %1599 = vmatmul.mubr.bf16.gmra.mrb[0].mxu0 %v1381
        %v1600 = vpop.f32.mrb[0].mxu0
        %v1601 = vadd.f32 0.0, %v1600
        %v1602 = vpop.f32.mrb[0].mxu0
        %v1603 = vpop.f32.mrb[0].mxu0
        %v1604 = vadd.f32 0.0, %v1603
        %v1605 = vpop.f32.mrb[0].mxu0
        %1606 = vmatprep.mubr.bf16.mxu0 0
        %1607 = vmatmul.mubr.bf16.gmra.mrb[0].mxu0 %v1384
        %v1608 = vpop.f32.mrb[0].mxu0
        %v1609 = vadd.f32 0.0, %v1608
        %v1610 = vpop.f32.mrb[0].mxu0
        %v1611 = vpop.f32.mrb[0].mxu0
        %v1612 = vadd.f32 0.0, %v1611
        %v1613 = vpop.f32.mrb[0].mxu0
        %1614 = vmatprep.mubr.bf16.mxu0 0
        %1615 = vmatmul.mubr.bf16.gmra.mrb[0].mxu0 %v1387
        %v1616 = vpop.f32.mrb[0].mxu0
        %v1617 = vadd.f32 0.0, %v1616
        %v1618 = vpop.f32.mrb[0].mxu0
        %v1619 = vpop.f32.mrb[0].mxu0
        %v1620 = vadd.f32 0.0, %v1619
        %v1621 = vpop.f32.mrb[0].mxu0
        %1622 = vmatprep.mubr.bf16.mxu0 0
        %1623 = vmatmul.mubr.bf16.gmra.mrb[0].mxu0 %v1390
        %v1624 = vpop.f32.mrb[0].mxu0
        %v1625 = vadd.f32 0.0, %v1624
        %v1626 = vpop.f32.mrb[0].mxu0
        %v1627 = vpop.f32.mrb[0].mxu0
        %v1628 = vadd.f32 0.0, %v1627
        %v1629 = vpop.f32.mrb[0].mxu0
        %1630 = vmatprep.mubr.bf16.mxu0 0
        %1631 = vmatmul.mubr.bf16.gmra.mrb[0].mxu0 %v1393
        %v1632 = vpop.f32.mrb[0].mxu0
        %v1633 = vadd.f32 0.0, %v1632
        %v1634 = vpop.f32.mrb[0].mxu0
        %v1635 = vpop.f32.mrb[0].mxu0
        %v1636 = vadd.f32 0.0, %v1635
        %v1637 = vpop.f32.mrb[0].mxu0
        %1638 = vmatprep.mubr.bf16.mxu0 0
        %1639 = vmatmul.mubr.bf16.gmra.mrb[0].mxu0 %v1396
        %v1640 = vpop.f32.mrb[0].mxu0
        %v1641 = vadd.f32 0.0, %v1640
        %v1642 = vpop.f32.mrb[0].mxu0
        %v1643 = vpop.f32.mrb[0].mxu0
        %v1644 = vadd.f32 0.0, %v1643
        %v1645 = vpop.f32.mrb[0].mxu0
        %1646 = vmatprep.mubr.bf16.mxu0 0
        %1647 = vmatmul.mubr.bf16.gmra.mrb[0].mxu0 %v1399
        %v1648 = vpop.f32.mrb[0].mxu0
        %v1649 = vadd.f32 0.0, %v1648
        %v1650 = vpop.f32.mrb[0].mxu0
        %v1651 = vpop.f32.mrb[0].mxu0
        %v1652 = vadd.f32 0.0, %v1651
        %v1653 = vpop.f32.mrb[0].mxu0
        %1654 = vmatprep.mubr.bf16.mxu0 0
        %1655 = vmatmul.mubr.bf16.gmra.mrb[0].mxu0 %v1402
        %v1656 = vpop.f32.mrb[0].mxu0
        %v1657 = vadd.f32 0.0, %v1656
        %v1658 = vpop.f32.mrb[0].mxu0
        %v1659 = vpop.f32.mrb[0].mxu0
        %v1660 = vadd.f32 0.0, %v1659
        %v1661 = vpop.f32.mrb[0].mxu0
        %1662 = vmatprep.mubr.bf16.mxu0 0
        %1663 = vmatmul.mubr.bf16.gmra.mrb[0].mxu0 %v1405
        %v1664 = vpop.f32.mrb[0].mxu0
        %v1665 = vadd.f32 0.0, %v1664
        %v1666 = vpop.f32.mrb[0].mxu0
        %v1667 = vpop.f32.mrb[0].mxu0
        %v1668 = vadd.f32 0.0, %v1667
        %v1669 = vpop.f32.mrb[0].mxu0
        %1670 = vmatprep.mubr.bf16.mxu0 0
        %1671 = vmatmul.mubr.bf16.gmra.mrb[0].mxu0 %v1408
        %v1672 = vpop.f32.mrb[0].mxu0
        %v1673 = vadd.f32 0.0, %v1672
        %v1674 = vpop.f32.mrb[0].mxu0
        %v1675 = vpop.f32.mrb[0].mxu0
        %v1676 = vadd.f32 0.0, %v1675
        %v1677 = vpop.f32.mrb[0].mxu0
        %1678 = vmatprep.mubr.bf16.mxu0 0
        %1679 = vmatmul.mubr.bf16.gmra.mrb[0].mxu0 %v1411
        %v1680 = vpop.f32.mrb[0].mxu0
        %v1681 = vadd.f32 0.0, %v1680
        %v1682 = vpop.f32.mrb[0].mxu0
        %v1683 = vpop.f32.mrb[0].mxu0
        %v1684 = vadd.f32 0.0, %v1683
        %v1685 = vpop.f32.mrb[0].mxu0
        %1686 = vmatprep.mubr.bf16.mxu0 0
        %1687 = vmatmul.mubr.bf16.gmra.mrb[0].mxu0 %v1414
        %v1688 = vpop.f32.mrb[0].mxu0
        %v1689 = vadd.f32 0.0, %v1688
        %v1690 = vpop.f32.mrb[0].mxu0
        %v1691 = vpop.f32.mrb[0].mxu0
        %v1692 = vadd.f32 0.0, %v1691
        %v1693 = vpop.f32.mrb[0].mxu0
        %1694 = vmatprep.mubr.bf16.mxu0 0
        %1695 = vmatmul.mubr.bf16.gmra.mrb[0].mxu0 %v1417
        %v1696 = vpop.f32.mrb[0].mxu0
        %v1697 = vadd.f32 0.0, %v1696
        %v1698 = vpop.f32.mrb[0].mxu0
        %v1699 = vpop.f32.mrb[0].mxu0
        %v1700 = vadd.f32 0.0, %v1699
        %v1701 = vpop.f32.mrb[0].mxu0
        %1702 = vmatprep.mubr.bf16.mxu0 0
        %1703 = vmatmul.mubr.bf16.gmra.mrb[0].mxu0 %v1420
        %v1704 = vpop.f32.mrb[0].mxu0
        %v1705 = vadd.f32 0.0, %v1704
        %v1706 = vpop.f32.mrb[0].mxu0
        %v1707 = vpop.f32.mrb[0].mxu0
        %v1708 = vadd.f32 0.0, %v1707
        %v1709 = vpop.f32.mrb[0].mxu0
        %1710 = vdwg.mxu0
        %vm1711 = vcmask 261120
        %v1712 = vsel %vm1711, %v1457, 0.0
        %v1713 = vsel %vm1711, %v1460, 0.0
        %v1714 = vadd.f32 %v1712, %v1713
        %v1715 = vsel %vm1711, %v1465, 0.0
        %v1716 = vadd.f32 %v1714, %v1715
        %v1717 = vsel %vm1711, %v1468, 0.0
        %v1718 = vadd.f32 %v1716, %v1717
        %v1719 = vsel %vm1711, %v1473, 0.0
        %v1720 = vadd.f32 %v1718, %v1719
        %v1721 = vsel %vm1711, %v1476, 0.0
        %v1722 = vadd.f32 %v1720, %v1721
        %v1723 = vsel %vm1711, %v1481, 0.0
        %v1724 = vadd.f32 %v1722, %v1723
        %v1725 = vsel %vm1711, %v1484, 0.0
        %v1726 = vadd.f32 %v1724, %v1725
        %v1727 = vrot.slane %v1726, 4
        %v1728 = vadd.f32 %v1726, %v1727
        %v1729 = vrot.slane %v1728, 2
        %v1730 = vadd.f32 %v1728, %v1729
        %v1731 = vrot.slane %v1730, 1
        %v1732 = vadd.f32 %v1730, %v1731
        %v1733 = vsel %vm1711, %v1489, 0.0
        %v1734 = vsel %vm1711, %v1492, 0.0
        %v1735 = vadd.f32 %v1733, %v1734
        %v1736 = vsel %vm1711, %v1497, 0.0
        %v1737 = vadd.f32 %v1735, %v1736
        %v1738 = vsel %vm1711, %v1500, 0.0
        %v1739 = vadd.f32 %v1737, %v1738
        %v1740 = vsel %vm1711, %v1505, 0.0
        %v1741 = vadd.f32 %v1739, %v1740
        %v1742 = vsel %vm1711, %v1508, 0.0
        %v1743 = vadd.f32 %v1741, %v1742
        %v1744 = vsel %vm1711, %v1513, 0.0
        %v1745 = vadd.f32 %v1743, %v1744
        %v1746 = vsel %vm1711, %v1516, 0.0
        %v1747 = vadd.f32 %v1745, %v1746
        %v1748 = vrot.slane %v1747, 4
        %v1749 = vadd.f32 %v1747, %v1748
        %v1750 = vrot.slane %v1749, 2
        %v1751 = vadd.f32 %v1749, %v1750
        %v1752 = vrot.slane %v1751, 1
        %v1753 = vadd.f32 %v1751, %v1752
        %v1754 = vsel %vm1711, %v1521, 0.0
        %v1755 = vsel %vm1711, %v1524, 0.0
        %v1756 = vadd.f32 %v1754, %v1755
        %v1757 = vsel %vm1711, %v1529, 0.0
        %v1758 = vadd.f32 %v1756, %v1757
        %v1759 = vsel %vm1711, %v1532, 0.0
        %v1760 = vadd.f32 %v1758, %v1759
        %v1761 = vsel %vm1711, %v1537, 0.0
        %v1762 = vadd.f32 %v1760, %v1761
        %v1763 = vsel %vm1711, %v1540, 0.0
        %v1764 = vadd.f32 %v1762, %v1763
        %v1765 = vsel %vm1711, %v1545, 0.0
        %v1766 = vadd.f32 %v1764, %v1765
        %v1767 = vsel %vm1711, %v1548, 0.0
        %v1768 = vadd.f32 %v1766, %v1767
        %v1769 = vrot.slane %v1768, 4
        %v1770 = vadd.f32 %v1768, %v1769
        %v1771 = vrot.slane %v1770, 2
        %v1772 = vadd.f32 %v1770, %v1771
        %v1773 = vrot.slane %v1772, 1
        %v1774 = vadd.f32 %v1772, %v1773
        %v1775 = vsel %vm1711, %v1553, 0.0
        %v1776 = vsel %vm1711, %v1556, 0.0
        %v1777 = vadd.f32 %v1775, %v1776
        %v1778 = vsel %vm1711, %v1561, 0.0
        %v1779 = vadd.f32 %v1777, %v1778
        %v1780 = vsel %vm1711, %v1564, 0.0
        %v1781 = vadd.f32 %v1779, %v1780
        %v1782 = vsel %vm1711, %v1569, 0.0
        %v1783 = vadd.f32 %v1781, %v1782
        %v1784 = vsel %vm1711, %v1572, 0.0
        %v1785 = vadd.f32 %v1783, %v1784
        %v1786 = vsel %vm1711, %v1577, 0.0
        %v1787 = vadd.f32 %v1785, %v1786
        %v1788 = vsel %vm1711, %v1580, 0.0
        %v1789 = vadd.f32 %v1787, %v1788
        %v1790 = vrot.slane %v1789, 4
        %v1791 = vadd.f32 %v1789, %v1790
        %v1792 = vrot.slane %v1791, 2
        %v1793 = vadd.f32 %v1791, %v1792
        %v1794 = vrot.slane %v1793, 1
        %v1795 = vadd.f32 %v1793, %v1794
        %v1796 = vsel %vm1711, %v1585, 0.0
        %v1797 = vsel %vm1711, %v1588, 0.0
        %v1798 = vadd.f32 %v1796, %v1797
        %v1799 = vsel %vm1711, %v1593, 0.0
        %v1800 = vadd.f32 %v1798, %v1799
        %v1801 = vsel %vm1711, %v1596, 0.0
        %v1802 = vadd.f32 %v1800, %v1801
        %v1803 = vsel %vm1711, %v1601, 0.0
        %v1804 = vadd.f32 %v1802, %v1803
        %v1805 = vsel %vm1711, %v1604, 0.0
        %v1806 = vadd.f32 %v1804, %v1805
        %v1807 = vsel %vm1711, %v1609, 0.0
        %v1808 = vadd.f32 %v1806, %v1807
        %v1809 = vsel %vm1711, %v1612, 0.0
        %v1810 = vadd.f32 %v1808, %v1809
        %v1811 = vrot.slane %v1810, 4
        %v1812 = vadd.f32 %v1810, %v1811
        %v1813 = vrot.slane %v1812, 2
        %v1814 = vadd.f32 %v1812, %v1813
        %v1815 = vrot.slane %v1814, 1
        %v1816 = vadd.f32 %v1814, %v1815
        %v1817 = vsel %vm1711, %v1617, 0.0
        %v1818 = vsel %vm1711, %v1620, 0.0
        %v1819 = vadd.f32 %v1817, %v1818
        %v1820 = vsel %vm1711, %v1625, 0.0
        %v1821 = vadd.f32 %v1819, %v1820
        %v1822 = vsel %vm1711, %v1628, 0.0
        %v1823 = vadd.f32 %v1821, %v1822
        %v1824 = vsel %vm1711, %v1633, 0.0
        %v1825 = vadd.f32 %v1823, %v1824
        %v1826 = vsel %vm1711, %v1636, 0.0
        %v1827 = vadd.f32 %v1825, %v1826
        %v1828 = vsel %vm1711, %v1641, 0.0
        %v1829 = vadd.f32 %v1827, %v1828
        %v1830 = vsel %vm1711, %v1644, 0.0
        %v1831 = vadd.f32 %v1829, %v1830
        %v1832 = vrot.slane %v1831, 4
        %v1833 = vadd.f32 %v1831, %v1832
        %v1834 = vrot.slane %v1833, 2
        %v1835 = vadd.f32 %v1833, %v1834
        %v1836 = vrot.slane %v1835, 1
        %v1837 = vadd.f32 %v1835, %v1836
        %v1838 = vsel %vm1711, %v1649, 0.0
        %v1839 = vsel %vm1711, %v1652, 0.0
        %v1840 = vadd.f32 %v1838, %v1839
        %v1841 = vsel %vm1711, %v1657, 0.0
        %v1842 = vadd.f32 %v1840, %v1841
        %v1843 = vsel %vm1711, %v1660, 0.0
        %v1844 = vadd.f32 %v1842, %v1843
        %v1845 = vsel %vm1711, %v1665, 0.0
        %v1846 = vadd.f32 %v1844, %v1845
        %v1847 = vsel %vm1711, %v1668, 0.0
        %v1848 = vadd.f32 %v1846, %v1847
        %v1849 = vsel %vm1711, %v1673, 0.0
        %v1850 = vadd.f32 %v1848, %v1849
        %v1851 = vsel %vm1711, %v1676, 0.0
        %v1852 = vadd.f32 %v1850, %v1851
        %v1853 = vrot.slane %v1852, 4
        %v1854 = vadd.f32 %v1852, %v1853
        %v1855 = vrot.slane %v1854, 2
        %v1856 = vadd.f32 %v1854, %v1855
        %v1857 = vrot.slane %v1856, 1
        %v1858 = vadd.f32 %v1856, %v1857
        %v1859 = vsel %vm1711, %v1681, 0.0
        %v1860 = vsel %vm1711, %v1684, 0.0
        %v1861 = vadd.f32 %v1859, %v1860
        %v1862 = vsel %vm1711, %v1689, 0.0
        %v1863 = vadd.f32 %v1861, %v1862
        %v1864 = vsel %vm1711, %v1692, 0.0
        %v1865 = vadd.f32 %v1863, %v1864
        %v1866 = vsel %vm1711, %v1697, 0.0
        %v1867 = vadd.f32 %v1865, %v1866
        %v1868 = vsel %vm1711, %v1700, 0.0
        %v1869 = vadd.f32 %v1867, %v1868
        %v1870 = vsel %vm1711, %v1705, 0.0
        %v1871 = vadd.f32 %v1869, %v1870
        %v1872 = vsel %vm1711, %v1708, 0.0
        %v1873 = vadd.f32 %v1871, %v1872
        %v1874 = vrot.slane %v1873, 4
        %v1875 = vadd.f32 %v1873, %v1874
        %v1876 = vrot.slane %v1875, 2
        %v1877 = vadd.f32 %v1875, %v1876
        %v1878 = vrot.slane %v1877, 1
        %v1879 = vadd.f32 %v1877, %v1878
        %v1880 = vmul.f32 %v1732, %v715
        %v1881 = vmul.f32 %v1753, %v715
        %v1882 = vmul.f32 %v1774, %v715
        %v1883 = vmul.f32 %v1795, %v715
        %v1884 = vmul.f32 %v1816, %v715
        %v1885 = vmul.f32 %v1837, %v715
        %v1886 = vmul.f32 %v1858, %v715
        %v1887 = vmul.f32 %v1879, %v715
        %v1888 = vmul.f32 %v1457, %v1457
        %v1889 = vmul.f32 %v1460, %v1460
        %v1890 = vmul.f32 %v1465, %v1465
        %v1891 = vmul.f32 %v1468, %v1468
        %v1892 = vmul.f32 %v1473, %v1473
        %v1893 = vmul.f32 %v1476, %v1476
        %v1894 = vmul.f32 %v1481, %v1481
        %v1895 = vmul.f32 %v1484, %v1484
        %v1896 = vmul.f32 %v1489, %v1489
        %v1897 = vmul.f32 %v1492, %v1492
        %v1898 = vmul.f32 %v1497, %v1497
        %v1899 = vmul.f32 %v1500, %v1500
        %v1900 = vmul.f32 %v1505, %v1505
        %v1901 = vmul.f32 %v1508, %v1508
        %v1902 = vmul.f32 %v1513, %v1513
        %v1903 = vmul.f32 %v1516, %v1516
        %v1904 = vmul.f32 %v1521, %v1521
        %v1905 = vmul.f32 %v1524, %v1524
        %v1906 = vmul.f32 %v1529, %v1529
        %v1907 = vmul.f32 %v1532, %v1532
        %v1908 = vmul.f32 %v1537, %v1537
        %v1909 = vmul.f32 %v1540, %v1540
        %v1910 = vmul.f32 %v1545, %v1545
        %v1911 = vmul.f32 %v1548, %v1548
        %v1912 = vmul.f32 %v1553, %v1553
        %v1913 = vmul.f32 %v1556, %v1556
        %v1914 = vmul.f32 %v1561, %v1561
        %v1915 = vmul.f32 %v1564, %v1564
        %v1916 = vmul.f32 %v1569, %v1569
        %v1917 = vmul.f32 %v1572, %v1572
        %v1918 = vmul.f32 %v1577, %v1577
        %v1919 = vmul.f32 %v1580, %v1580
        %v1920 = vmul.f32 %v1585, %v1585
        %v1921 = vmul.f32 %v1588, %v1588
        %v1922 = vmul.f32 %v1593, %v1593
        %v1923 = vmul.f32 %v1596, %v1596
        %v1924 = vmul.f32 %v1601, %v1601
        %v1925 = vmul.f32 %v1604, %v1604
        %v1926 = vmul.f32 %v1609, %v1609
        %v1927 = vmul.f32 %v1612, %v1612
        %v1928 = vmul.f32 %v1617, %v1617
        %v1929 = vmul.f32 %v1620, %v1620
        %v1930 = vmul.f32 %v1625, %v1625
        %v1931 = vmul.f32 %v1628, %v1628
        %v1932 = vmul.f32 %v1633, %v1633
        %v1933 = vmul.f32 %v1636, %v1636
        %v1934 = vmul.f32 %v1641, %v1641
        %v1935 = vmul.f32 %v1644, %v1644
        %v1936 = vmul.f32 %v1649, %v1649
        %v1937 = vmul.f32 %v1652, %v1652
        %v1938 = vmul.f32 %v1657, %v1657
        %v1939 = vmul.f32 %v1660, %v1660
        %v1940 = vmul.f32 %v1665, %v1665
        %v1941 = vmul.f32 %v1668, %v1668
        %v1942 = vmul.f32 %v1673, %v1673
        %v1943 = vmul.f32 %v1676, %v1676
        %v1944 = vmul.f32 %v1681, %v1681
        %v1945 = vmul.f32 %v1684, %v1684
        %v1946 = vmul.f32 %v1689, %v1689
        %v1947 = vmul.f32 %v1692, %v1692
        %v1948 = vmul.f32 %v1697, %v1697
        %v1949 = vmul.f32 %v1700, %v1700
        %v1950 = vmul.f32 %v1705, %v1705
        %v1951 = vmul.f32 %v1708, %v1708
        %v1952 = vsel %vm1711, %v1888, 0.0
        %v1953 = vsel %vm1711, %v1889, 0.0
        %v1954 = vadd.f32 %v1952, %v1953
        %v1955 = vsel %vm1711, %v1890, 0.0
        %v1956 = vadd.f32 %v1954, %v1955
        %v1957 = vsel %vm1711, %v1891, 0.0
        %v1958 = vadd.f32 %v1956, %v1957
        %v1959 = vsel %vm1711, %v1892, 0.0
        %v1960 = vadd.f32 %v1958, %v1959
        %v1961 = vsel %vm1711, %v1893, 0.0
        %v1962 = vadd.f32 %v1960, %v1961
        %v1963 = vsel %vm1711, %v1894, 0.0
        %v1964 = vadd.f32 %v1962, %v1963
        %v1965 = vsel %vm1711, %v1895, 0.0
        %v1966 = vadd.f32 %v1964, %v1965
        %v1967 = vrot.slane %v1966, 4
        %v1968 = vadd.f32 %v1966, %v1967
        %v1969 = vrot.slane %v1968, 2
        %v1970 = vadd.f32 %v1968, %v1969
        %v1971 = vrot.slane %v1970, 1
        %v1972 = vadd.f32 %v1970, %v1971
        %v1973 = vsel %vm1711, %v1896, 0.0
        %v1974 = vsel %vm1711, %v1897, 0.0
        %v1975 = vadd.f32 %v1973, %v1974
        %v1976 = vsel %vm1711, %v1898, 0.0
        %v1977 = vadd.f32 %v1975, %v1976
        %v1978 = vsel %vm1711, %v1899, 0.0
        %v1979 = vadd.f32 %v1977, %v1978
        %v1980 = vsel %vm1711, %v1900, 0.0
        %v1981 = vadd.f32 %v1979, %v1980
        %v1982 = vsel %vm1711, %v1901, 0.0
        %v1983 = vadd.f32 %v1981, %v1982
        %v1984 = vsel %vm1711, %v1902, 0.0
        %v1985 = vadd.f32 %v1983, %v1984
        %v1986 = vsel %vm1711, %v1903, 0.0
        %v1987 = vadd.f32 %v1985, %v1986
        %v1988 = vrot.slane %v1987, 4
        %v1989 = vadd.f32 %v1987, %v1988
        %v1990 = vrot.slane %v1989, 2
        %v1991 = vadd.f32 %v1989, %v1990
        %v1992 = vrot.slane %v1991, 1
        %v1993 = vadd.f32 %v1991, %v1992
        %v1994 = vsel %vm1711, %v1904, 0.0
        %v1995 = vsel %vm1711, %v1905, 0.0
        %v1996 = vadd.f32 %v1994, %v1995
        %v1997 = vsel %vm1711, %v1906, 0.0
        %v1998 = vadd.f32 %v1996, %v1997
        %v1999 = vsel %vm1711, %v1907, 0.0
        %v2000 = vadd.f32 %v1998, %v1999
        %v2001 = vsel %vm1711, %v1908, 0.0
        %v2002 = vadd.f32 %v2000, %v2001
        %v2003 = vsel %vm1711, %v1909, 0.0
        %v2004 = vadd.f32 %v2002, %v2003
        %v2005 = vsel %vm1711, %v1910, 0.0
        %v2006 = vadd.f32 %v2004, %v2005
        %v2007 = vsel %vm1711, %v1911, 0.0
        %v2008 = vadd.f32 %v2006, %v2007
        %v2009 = vrot.slane %v2008, 4
        %v2010 = vadd.f32 %v2008, %v2009
        %v2011 = vrot.slane %v2010, 2
        %v2012 = vadd.f32 %v2010, %v2011
        %v2013 = vrot.slane %v2012, 1
        %v2014 = vadd.f32 %v2012, %v2013
        %v2015 = vsel %vm1711, %v1912, 0.0
        %v2016 = vsel %vm1711, %v1913, 0.0
        %v2017 = vadd.f32 %v2015, %v2016
        %v2018 = vsel %vm1711, %v1914, 0.0
        %v2019 = vadd.f32 %v2017, %v2018
        %v2020 = vsel %vm1711, %v1915, 0.0
        %v2021 = vadd.f32 %v2019, %v2020
        %v2022 = vsel %vm1711, %v1916, 0.0
        %v2023 = vadd.f32 %v2021, %v2022
        %v2024 = vsel %vm1711, %v1917, 0.0
        %v2025 = vadd.f32 %v2023, %v2024
        %v2026 = vsel %vm1711, %v1918, 0.0
        %v2027 = vadd.f32 %v2025, %v2026
        %v2028 = vsel %vm1711, %v1919, 0.0
        %v2029 = vadd.f32 %v2027, %v2028
        %v2030 = vrot.slane %v2029, 4
        %v2031 = vadd.f32 %v2029, %v2030
        %v2032 = vrot.slane %v2031, 2
        %v2033 = vadd.f32 %v2031, %v2032
        %v2034 = vrot.slane %v2033, 1
        %v2035 = vadd.f32 %v2033, %v2034
        %v2036 = vsel %vm1711, %v1920, 0.0
        %v2037 = vsel %vm1711, %v1921, 0.0
        %v2038 = vadd.f32 %v2036, %v2037
        %v2039 = vsel %vm1711, %v1922, 0.0
        %v2040 = vadd.f32 %v2038, %v2039
        %v2041 = vsel %vm1711, %v1923, 0.0
        %v2042 = vadd.f32 %v2040, %v2041
        %v2043 = vsel %vm1711, %v1924, 0.0
        %v2044 = vadd.f32 %v2042, %v2043
        %v2045 = vsel %vm1711, %v1925, 0.0
        %v2046 = vadd.f32 %v2044, %v2045
        %v2047 = vsel %vm1711, %v1926, 0.0
        %v2048 = vadd.f32 %v2046, %v2047
        %v2049 = vsel %vm1711, %v1927, 0.0
        %v2050 = vadd.f32 %v2048, %v2049
        %v2051 = vrot.slane %v2050, 4
        %v2052 = vadd.f32 %v2050, %v2051
        %v2053 = vrot.slane %v2052, 2
        %v2054 = vadd.f32 %v2052, %v2053
        %v2055 = vrot.slane %v2054, 1
        %v2056 = vadd.f32 %v2054, %v2055
        %v2057 = vsel %vm1711, %v1928, 0.0
        %v2058 = vsel %vm1711, %v1929, 0.0
        %v2059 = vadd.f32 %v2057, %v2058
        %v2060 = vsel %vm1711, %v1930, 0.0
        %v2061 = vadd.f32 %v2059, %v2060
        %v2062 = vsel %vm1711, %v1931, 0.0
        %v2063 = vadd.f32 %v2061, %v2062
        %v2064 = vsel %vm1711, %v1932, 0.0
        %v2065 = vadd.f32 %v2063, %v2064
        %v2066 = vsel %vm1711, %v1933, 0.0
        %v2067 = vadd.f32 %v2065, %v2066
        %v2068 = vsel %vm1711, %v1934, 0.0
        %v2069 = vadd.f32 %v2067, %v2068
        %v2070 = vsel %vm1711, %v1935, 0.0
        %v2071 = vadd.f32 %v2069, %v2070
        %v2072 = vrot.slane %v2071, 4
        %v2073 = vadd.f32 %v2071, %v2072
        %v2074 = vrot.slane %v2073, 2
        %v2075 = vadd.f32 %v2073, %v2074
        %v2076 = vrot.slane %v2075, 1
        %v2077 = vadd.f32 %v2075, %v2076
        %v2078 = vsel %vm1711, %v1936, 0.0
        %v2079 = vsel %vm1711, %v1937, 0.0
        %v2080 = vadd.f32 %v2078, %v2079
        %v2081 = vsel %vm1711, %v1938, 0.0
        %v2082 = vadd.f32 %v2080, %v2081
        %v2083 = vsel %vm1711, %v1939, 0.0
        %v2084 = vadd.f32 %v2082, %v2083
        %v2085 = vsel %vm1711, %v1940, 0.0
        %v2086 = vadd.f32 %v2084, %v2085
        %v2087 = vsel %vm1711, %v1941, 0.0
        %v2088 = vadd.f32 %v2086, %v2087
        %v2089 = vsel %vm1711, %v1942, 0.0
        %v2090 = vadd.f32 %v2088, %v2089
        %v2091 = vsel %vm1711, %v1943, 0.0
        %v2092 = vadd.f32 %v2090, %v2091
        %v2093 = vrot.slane %v2092, 4
        %v2094 = vadd.f32 %v2092, %v2093
        %v2095 = vrot.slane %v2094, 2
        %v2096 = vadd.f32 %v2094, %v2095
        %v2097 = vrot.slane %v2096, 1
        %v2098 = vadd.f32 %v2096, %v2097
        %v2099 = vsel %vm1711, %v1944, 0.0
        %v2100 = vsel %vm1711, %v1945, 0.0
        %v2101 = vadd.f32 %v2099, %v2100
        %v2102 = vsel %vm1711, %v1946, 0.0
        %v2103 = vadd.f32 %v2101, %v2102
        %v2104 = vsel %vm1711, %v1947, 0.0
        %v2105 = vadd.f32 %v2103, %v2104
        %v2106 = vsel %vm1711, %v1948, 0.0
        %v2107 = vadd.f32 %v2105, %v2106
        %v2108 = vsel %vm1711, %v1949, 0.0
        %v2109 = vadd.f32 %v2107, %v2108
        %v2110 = vsel %vm1711, %v1950, 0.0
        %v2111 = vadd.f32 %v2109, %v2110
        %v2112 = vsel %vm1711, %v1951, 0.0
        %v2113 = vadd.f32 %v2111, %v2112
        %v2114 = vrot.slane %v2113, 4
        %v2115 = vadd.f32 %v2113, %v2114
        %v2116 = vrot.slane %v2115, 2
        %v2117 = vadd.f32 %v2115, %v2116
        %v2118 = vrot.slane %v2117, 1
        %v2119 = vadd.f32 %v2117, %v2118
        %v2120 = vmul.f32 %v1972, %v715
        %v2121 = vmul.f32 %v1993, %v715
        %v2122 = vmul.f32 %v2014, %v715
        %v2123 = vmul.f32 %v2035, %v715
        %v2124 = vmul.f32 %v2056, %v715
        %v2125 = vmul.f32 %v2077, %v715
        %v2126 = vmul.f32 %v2098, %v715
        %v2127 = vmul.f32 %v2119, %v715
        %v2128 = vmul.f32 %v1880, %v1880
        %v2129 = vmul.f32 %v1881, %v1881
        %v2130 = vmul.f32 %v1882, %v1882
        %v2131 = vmul.f32 %v1883, %v1883
        %v2132 = vmul.f32 %v1884, %v1884
        %v2133 = vmul.f32 %v1885, %v1885
        %v2134 = vmul.f32 %v1886, %v1886
        %v2135 = vmul.f32 %v1887, %v1887
        %v2136 = vsub.f32 %v2120, %v2128
        %v2137 = vsub.f32 %v2121, %v2129
        %v2138 = vsub.f32 %v2122, %v2130
        %v2139 = vsub.f32 %v2123, %v2131
        %v2140 = vsub.f32 %v2124, %v2132
        %v2141 = vsub.f32 %v2125, %v2133
        %v2142 = vsub.f32 %v2126, %v2134
        %v2143 = vsub.f32 %v2127, %v2135
        %v2144 = vmax.f32 %v2136, 0.0
        %v2145 = vmax.f32 %v2137, 0.0
        %v2146 = vmax.f32 %v2138, 0.0
        %v2147 = vmax.f32 %v2139, 0.0
        %v2148 = vmax.f32 %v2140, 0.0
        %v2149 = vmax.f32 %v2141, 0.0
        %v2150 = vmax.f32 %v2142, 0.0
        %v2151 = vmax.f32 %v2143, 0.0
        %v2152 = vld [vmem:[%s7] sm:$0x1]
        %v2153 = vadd.f32 %v2144, 1e-05
        %v2154 = vadd.f32 %v2145, 1e-05
        %v2155 = vadd.f32 %v2146, 1e-05
        %v2156 = vadd.f32 %v2147, 1e-05
        %v2157 = vadd.f32 %v2148, 1e-05
        %v2158 = vadd.f32 %v2149, 1e-05
        %v2159 = vadd.f32 %v2150, 1e-05
        %v2160 = vadd.f32 %v2151, 1e-05
        %v2161 = vrsqrt.pop %v2153
        %v2162 = vrsqrt.pop %v2154
        %v2163 = vrsqrt.pop %v2155
        %v2164 = vrsqrt.pop %v2156
        %v2165 = vrsqrt.pop %v2157
        %v2166 = vrsqrt.pop %v2158
        %v2167 = vrsqrt.pop %v2159
        %v2168 = vrsqrt.pop %v2160
        %v2169 = vmul.f32 %v2152, %v2161
        %v2170 = vmul.f32 %v2152, %v2162
        %v2171 = vmul.f32 %v2152, %v2163
        %v2172 = vmul.f32 %v2152, %v2164
        %v2173 = vmul.f32 %v2152, %v2165
        %v2174 = vmul.f32 %v2152, %v2166
        %v2175 = vmul.f32 %v2152, %v2167
        %v2176 = vmul.f32 %v2152, %v2168
        %v2177 = vld [vmem:[%s7 + $0x1] sm:$0x1]
        %v2178 = vmul.f32 %v1880, %v2169
        %v2179 = vmul.f32 %v1881, %v2170
        %v2180 = vmul.f32 %v1882, %v2171
        %v2181 = vmul.f32 %v1883, %v2172
        %v2182 = vmul.f32 %v1884, %v2173
        %v2183 = vmul.f32 %v1885, %v2174
        %v2184 = vmul.f32 %v1886, %v2175
        %v2185 = vmul.f32 %v1887, %v2176
        %v2186 = vsub.f32 %v2177, %v2178
        %v2187 = vsub.f32 %v2177, %v2179
        %v2188 = vsub.f32 %v2177, %v2180
        %v2189 = vsub.f32 %v2177, %v2181
        %v2190 = vsub.f32 %v2177, %v2182
        %v2191 = vsub.f32 %v2177, %v2183
        %v2192 = vsub.f32 %v2177, %v2184
        %v2193 = vsub.f32 %v2177, %v2185
        %v2194 = vlaneseq
        %v2195 = vshrl.u32 %v2194, 7
        %v2196 = vsub.s32 0, %v2195
        %v2197 = vrot.slane %v2169, %v2196
        %v2198 = vlaneseq
        %v2199 = vshrl.u32 %v2198, 7
        %v2200 = vsub.s32 0, %v2199
        %v2201 = vrot.slane %v2170, %v2200
        %v2202 = vlaneseq
        %v2203 = vshrl.u32 %v2202, 7
        %v2204 = vsub.s32 0, %v2203
        %v2205 = vrot.slane %v2171, %v2204
        %v2206 = vlaneseq
        %v2207 = vshrl.u32 %v2206, 7
        %v2208 = vsub.s32 0, %v2207
        %v2209 = vrot.slane %v2172, %v2208
        %v2210 = vlaneseq
        %v2211 = vshrl.u32 %v2210, 7
        %v2212 = vsub.s32 0, %v2211
        %v2213 = vrot.slane %v2173, %v2212
        %v2214 = vlaneseq
        %v2215 = vshrl.u32 %v2214, 7
        %v2216 = vsub.s32 0, %v2215
        %v2217 = vrot.slane %v2174, %v2216
        %v2218 = vlaneseq
        %v2219 = vshrl.u32 %v2218, 7
        %v2220 = vsub.s32 0, %v2219
        %v2221 = vrot.slane %v2175, %v2220
        %v2222 = vlaneseq
        %v2223 = vshrl.u32 %v2222, 7
        %v2224 = vsub.s32 0, %v2223
        %v2225 = vrot.slane %v2176, %v2224
        %v2226 = vmul.f32 %v1457, %v2197
        %v2227 = vmul.f32 %v1460, %v2197
        %v2228 = vmul.f32 %v1465, %v2197
        %v2229 = vmul.f32 %v1468, %v2197
        %v2230 = vmul.f32 %v1473, %v2197
        %v2231 = vmul.f32 %v1476, %v2197
        %v2232 = vmul.f32 %v1481, %v2197
        %v2233 = vmul.f32 %v1484, %v2197
        %v2234 = vmul.f32 %v1489, %v2201
        %v2235 = vmul.f32 %v1492, %v2201
        %v2236 = vmul.f32 %v1497, %v2201
        %v2237 = vmul.f32 %v1500, %v2201
        %v2238 = vmul.f32 %v1505, %v2201
        %v2239 = vmul.f32 %v1508, %v2201
        %v2240 = vmul.f32 %v1513, %v2201
        %v2241 = vmul.f32 %v1516, %v2201
        %v2242 = vmul.f32 %v1521, %v2205
        %v2243 = vmul.f32 %v1524, %v2205
        %v2244 = vmul.f32 %v1529, %v2205
        %v2245 = vmul.f32 %v1532, %v2205
        %v2246 = vmul.f32 %v1537, %v2205
        %v2247 = vmul.f32 %v1540, %v2205
        %v2248 = vmul.f32 %v1545, %v2205
        %v2249 = vmul.f32 %v1548, %v2205
        %v2250 = vmul.f32 %v1553, %v2209
        %v2251 = vmul.f32 %v1556, %v2209
        %v2252 = vmul.f32 %v1561, %v2209
        %v2253 = vmul.f32 %v1564, %v2209
        %v2254 = vmul.f32 %v1569, %v2209
        %v2255 = vmul.f32 %v1572, %v2209
        %v2256 = vmul.f32 %v1577, %v2209
        %v2257 = vmul.f32 %v1580, %v2209
        %v2258 = vmul.f32 %v1585, %v2213
        %v2259 = vmul.f32 %v1588, %v2213
        %v2260 = vmul.f32 %v1593, %v2213
        %v2261 = vmul.f32 %v1596, %v2213
        %v2262 = vmul.f32 %v1601, %v2213
        %v2263 = vmul.f32 %v1604, %v2213
        %v2264 = vmul.f32 %v1609, %v2213
        %v2265 = vmul.f32 %v1612, %v2213
        %v2266 = vmul.f32 %v1617, %v2217
        %v2267 = vmul.f32 %v1620, %v2217
        %v2268 = vmul.f32 %v1625, %v2217
        %v2269 = vmul.f32 %v1628, %v2217
        %v2270 = vmul.f32 %v1633, %v2217
        %v2271 = vmul.f32 %v1636, %v2217
        %v2272 = vmul.f32 %v1641, %v2217
        %v2273 = vmul.f32 %v1644, %v2217
        %v2274 = vmul.f32 %v1649, %v2221
        %v2275 = vmul.f32 %v1652, %v2221
        %v2276 = vmul.f32 %v1657, %v2221
        %v2277 = vmul.f32 %v1660, %v2221
        %v2278 = vmul.f32 %v1665, %v2221
        %v2279 = vmul.f32 %v1668, %v2221
        %v2280 = vmul.f32 %v1673, %v2221
        %v2281 = vmul.f32 %v1676, %v2221
        %v2282 = vmul.f32 %v1681, %v2225
        %v2283 = vmul.f32 %v1684, %v2225
        %v2284 = vmul.f32 %v1689, %v2225
        %v2285 = vmul.f32 %v1692, %v2225
        %v2286 = vmul.f32 %v1697, %v2225
        %v2287 = vmul.f32 %v1700, %v2225
        %v2288 = vmul.f32 %v1705, %v2225
        %v2289 = vmul.f32 %v1708, %v2225
        %v2290 = vlaneseq
        %v2291 = vshrl.u32 %v2290, 7
        %v2292 = vsub.s32 0, %v2291
        %v2293 = vrot.slane %v2186, %v2292
        %v2294 = vlaneseq
        %v2295 = vshrl.u32 %v2294, 7
        %v2296 = vsub.s32 0, %v2295
        %v2297 = vrot.slane %v2187, %v2296
        %v2298 = vlaneseq
        %v2299 = vshrl.u32 %v2298, 7
        %v2300 = vsub.s32 0, %v2299
        %v2301 = vrot.slane %v2188, %v2300
        %v2302 = vlaneseq
        %v2303 = vshrl.u32 %v2302, 7
        %v2304 = vsub.s32 0, %v2303
        %v2305 = vrot.slane %v2189, %v2304
        %v2306 = vlaneseq
        %v2307 = vshrl.u32 %v2306, 7
        %v2308 = vsub.s32 0, %v2307
        %v2309 = vrot.slane %v2190, %v2308
        %v2310 = vlaneseq
        %v2311 = vshrl.u32 %v2310, 7
        %v2312 = vsub.s32 0, %v2311
        %v2313 = vrot.slane %v2191, %v2312
        %v2314 = vlaneseq
        %v2315 = vshrl.u32 %v2314, 7
        %v2316 = vsub.s32 0, %v2315
        %v2317 = vrot.slane %v2192, %v2316
        %v2318 = vlaneseq
        %v2319 = vshrl.u32 %v2318, 7
        %v2320 = vsub.s32 0, %v2319
        %v2321 = vrot.slane %v2193, %v2320
        %v2322 = vadd.f32 %v2226, %v2293
        %v2323 = vadd.f32 %v2227, %v2293
        %v2324 = vadd.f32 %v2228, %v2293
        %v2325 = vadd.f32 %v2229, %v2293
        %v2326 = vadd.f32 %v2230, %v2293
        %v2327 = vadd.f32 %v2231, %v2293
        %v2328 = vadd.f32 %v2232, %v2293
        %v2329 = vadd.f32 %v2233, %v2293
        %v2330 = vadd.f32 %v2234, %v2297
        %v2331 = vadd.f32 %v2235, %v2297
        %v2332 = vadd.f32 %v2236, %v2297
        %v2333 = vadd.f32 %v2237, %v2297
        %v2334 = vadd.f32 %v2238, %v2297
        %v2335 = vadd.f32 %v2239, %v2297
        %v2336 = vadd.f32 %v2240, %v2297
        %v2337 = vadd.f32 %v2241, %v2297
        %v2338 = vadd.f32 %v2242, %v2301
        %v2339 = vadd.f32 %v2243, %v2301
        %v2340 = vadd.f32 %v2244, %v2301
        %v2341 = vadd.f32 %v2245, %v2301
        %v2342 = vadd.f32 %v2246, %v2301
        %v2343 = vadd.f32 %v2247, %v2301
        %v2344 = vadd.f32 %v2248, %v2301
        %v2345 = vadd.f32 %v2249, %v2301
        %v2346 = vadd.f32 %v2250, %v2305
        %v2347 = vadd.f32 %v2251, %v2305
        %v2348 = vadd.f32 %v2252, %v2305
        %v2349 = vadd.f32 %v2253, %v2305
        %v2350 = vadd.f32 %v2254, %v2305
        %v2351 = vadd.f32 %v2255, %v2305
        %v2352 = vadd.f32 %v2256, %v2305
        %v2353 = vadd.f32 %v2257, %v2305
        %v2354 = vadd.f32 %v2258, %v2309
        %v2355 = vadd.f32 %v2259, %v2309
        %v2356 = vadd.f32 %v2260, %v2309
        %v2357 = vadd.f32 %v2261, %v2309
        %v2358 = vadd.f32 %v2262, %v2309
        %v2359 = vadd.f32 %v2263, %v2309
        %v2360 = vadd.f32 %v2264, %v2309
        %v2361 = vadd.f32 %v2265, %v2309
        %v2362 = vadd.f32 %v2266, %v2313
        %v2363 = vadd.f32 %v2267, %v2313
        %v2364 = vadd.f32 %v2268, %v2313
        %v2365 = vadd.f32 %v2269, %v2313
        %v2366 = vadd.f32 %v2270, %v2313
        %v2367 = vadd.f32 %v2271, %v2313
        %v2368 = vadd.f32 %v2272, %v2313
        %v2369 = vadd.f32 %v2273, %v2313
        %v2370 = vadd.f32 %v2274, %v2317
        %v2371 = vadd.f32 %v2275, %v2317
        %v2372 = vadd.f32 %v2276, %v2317
        %v2373 = vadd.f32 %v2277, %v2317
        %v2374 = vadd.f32 %v2278, %v2317
        %v2375 = vadd.f32 %v2279, %v2317
        %v2376 = vadd.f32 %v2280, %v2317
        %v2377 = vadd.f32 %v2281, %v2317
        %v2378 = vadd.f32 %v2282, %v2321
        %v2379 = vadd.f32 %v2283, %v2321
        %v2380 = vadd.f32 %v2284, %v2321
        %v2381 = vadd.f32 %v2285, %v2321
        %v2382 = vadd.f32 %v2286, %v2321
        %v2383 = vadd.f32 %v2287, %v2321
        %v2384 = vadd.f32 %v2288, %v2321
        %v2385 = vadd.f32 %v2289, %v2321
        %v2386 = vmax.f32 %v2322, 0.0
        %v2387 = vmax.f32 %v2323, 0.0
        %v2388 = vmax.f32 %v2324, 0.0
        %v2389 = vmax.f32 %v2325, 0.0
        %v2390 = vmax.f32 %v2326, 0.0
        %v2391 = vmax.f32 %v2327, 0.0
        %v2392 = vmax.f32 %v2328, 0.0
        %v2393 = vmax.f32 %v2329, 0.0
        %v2394 = vmax.f32 %v2330, 0.0
        %v2395 = vmax.f32 %v2331, 0.0
        %v2396 = vmax.f32 %v2332, 0.0
        %v2397 = vmax.f32 %v2333, 0.0
        %v2398 = vmax.f32 %v2334, 0.0
        %v2399 = vmax.f32 %v2335, 0.0
        %v2400 = vmax.f32 %v2336, 0.0
        %v2401 = vmax.f32 %v2337, 0.0
        %v2402 = vmax.f32 %v2338, 0.0
        %v2403 = vmax.f32 %v2339, 0.0
        %v2404 = vmax.f32 %v2340, 0.0
        %v2405 = vmax.f32 %v2341, 0.0
        %v2406 = vmax.f32 %v2342, 0.0
        %v2407 = vmax.f32 %v2343, 0.0
        %v2408 = vmax.f32 %v2344, 0.0
        %v2409 = vmax.f32 %v2345, 0.0
        %v2410 = vmax.f32 %v2346, 0.0
        %v2411 = vmax.f32 %v2347, 0.0
        %v2412 = vmax.f32 %v2348, 0.0
        %v2413 = vmax.f32 %v2349, 0.0
        %v2414 = vmax.f32 %v2350, 0.0
        %v2415 = vmax.f32 %v2351, 0.0
        %v2416 = vmax.f32 %v2352, 0.0
        %v2417 = vmax.f32 %v2353, 0.0
        %v2418 = vmax.f32 %v2354, 0.0
        %v2419 = vmax.f32 %v2355, 0.0
        %v2420 = vmax.f32 %v2356, 0.0
        %v2421 = vmax.f32 %v2357, 0.0
        %v2422 = vmax.f32 %v2358, 0.0
        %v2423 = vmax.f32 %v2359, 0.0
        %v2424 = vmax.f32 %v2360, 0.0
        %v2425 = vmax.f32 %v2361, 0.0
        %v2426 = vmax.f32 %v2362, 0.0
        %v2427 = vmax.f32 %v2363, 0.0
        %v2428 = vmax.f32 %v2364, 0.0
        %v2429 = vmax.f32 %v2365, 0.0
        %v2430 = vmax.f32 %v2366, 0.0
        %v2431 = vmax.f32 %v2367, 0.0
        %v2432 = vmax.f32 %v2368, 0.0
        %v2433 = vmax.f32 %v2369, 0.0
        %v2434 = vmax.f32 %v2370, 0.0
        %v2435 = vmax.f32 %v2371, 0.0
        %v2436 = vmax.f32 %v2372, 0.0
        %v2437 = vmax.f32 %v2373, 0.0
        %v2438 = vmax.f32 %v2374, 0.0
        %v2439 = vmax.f32 %v2375, 0.0
        %v2440 = vmax.f32 %v2376, 0.0
        %v2441 = vmax.f32 %v2377, 0.0
        %v2442 = vmax.f32 %v2378, 0.0
        %v2443 = vmax.f32 %v2379, 0.0
        %v2444 = vmax.f32 %v2380, 0.0
        %v2445 = vmax.f32 %v2381, 0.0
        %v2446 = vmax.f32 %v2382, 0.0
        %v2447 = vmax.f32 %v2383, 0.0
        %v2448 = vmax.f32 %v2384, 0.0
        %v2449 = vmax.f32 %v2385, 0.0
        %v2450 = vpack.c.bf16 %v2387, %v2386
        %v2451 = vpack.c.bf16 %v2389, %v2388
        %v2452 = vpack.c.bf16 %v2391, %v2390
        %v2453 = vpack.c.bf16 %v2393, %v2392
        %v2454 = vpack.c.bf16 %v2395, %v2394
        %v2455 = vpack.c.bf16 %v2397, %v2396
        %v2456 = vpack.c.bf16 %v2399, %v2398
        %v2457 = vpack.c.bf16 %v2401, %v2400
        %v2458 = vpack.c.bf16 %v2403, %v2402
        %v2459 = vpack.c.bf16 %v2405, %v2404
        %v2460 = vpack.c.bf16 %v2407, %v2406
        %v2461 = vpack.c.bf16 %v2409, %v2408
        %v2462 = vpack.c.bf16 %v2411, %v2410
        %v2463 = vpack.c.bf16 %v2413, %v2412
        %v2464 = vpack.c.bf16 %v2415, %v2414
        %v2465 = vpack.c.bf16 %v2417, %v2416
        %v2466 = vpack.c.bf16 %v2419, %v2418
        %v2467 = vpack.c.bf16 %v2421, %v2420
        %v2468 = vpack.c.bf16 %v2423, %v2422
        %v2469 = vpack.c.bf16 %v2425, %v2424
        %v2470 = vpack.c.bf16 %v2427, %v2426
        %v2471 = vpack.c.bf16 %v2429, %v2428
        %v2472 = vpack.c.bf16 %v2431, %v2430
        %v2473 = vpack.c.bf16 %v2433, %v2432
        %v2474 = vpack.c.bf16 %v2435, %v2434
        %v2475 = vpack.c.bf16 %v2437, %v2436
        %v2476 = vpack.c.bf16 %v2439, %v2438
        %v2477 = vpack.c.bf16 %v2441, %v2440
        %v2478 = vpack.c.bf16 %v2443, %v2442
        %v2479 = vpack.c.bf16 %v2445, %v2444
        %v2480 = vpack.c.bf16 %v2447, %v2446
        %v2481 = vpack.c.bf16 %v2449, %v2448
        %v2482 = vld [vmem:[%s2] sm:$0xff]
        %v2483 = vld [vmem:[%s2 + $0x8] sm:$0xff]
        %v2484 = vld [vmem:[%s2 + $0x10] sm:$0xff]
        %v2485 = vld [vmem:[%s2 + $0x18] sm:$0xff]
        %v2490 = vunpack.c.l.b16 %v2482
        %v2491 = vunpack.c.h.b16 %v2482
        %v2492 = vunpack.c.l.b16 %v2483
        %v2493 = vunpack.c.h.b16 %v2483
        %v2494 = vunpack.c.l.b16 %v2484
        %v2495 = vunpack.c.h.b16 %v2484
        %v2496 = vunpack.c.l.b16 %v2485
        %v2497 = vunpack.c.h.b16 %v2485
        %v2498 = vpack.c.b16 %v2492, %v2490
        %v2499 = vpack.c.b16 %v2493, %v2491
        %v2500 = vpack.c.b16 %v2496, %v2494
        %v2501 = vpack.c.b16 %v2497, %v2495
        %v2507 = vsel %vm1711, %v2450, 0
        %v2510 = vsel %vm1711, %v2451, 0
        %v2513 = vsel %vm1711, %v2452, 0
        %v2516 = vsel %vm1711, %v2453, 0
        %v2519 = vsel %vm1711, %v2454, 0
        %v2522 = vsel %vm1711, %v2455, 0
        %v2525 = vsel %vm1711, %v2456, 0
        %v2528 = vsel %vm1711, %v2457, 0
        %v2531 = vsel %vm1711, %v2458, 0
        %v2534 = vsel %vm1711, %v2459, 0
        %v2537 = vsel %vm1711, %v2460, 0
        %v2540 = vsel %vm1711, %v2461, 0
        %v2543 = vsel %vm1711, %v2462, 0
        %v2546 = vsel %vm1711, %v2463, 0
        %v2549 = vsel %vm1711, %v2464, 0
        %v2552 = vsel %vm1711, %v2465, 0
        %v2555 = vsel %vm1711, %v2466, 0
        %v2558 = vsel %vm1711, %v2467, 0
        %v2561 = vsel %vm1711, %v2468, 0
        %v2564 = vsel %vm1711, %v2469, 0
        %v2567 = vsel %vm1711, %v2470, 0
        %v2570 = vsel %vm1711, %v2471, 0
        %v2573 = vsel %vm1711, %v2472, 0
        %v2576 = vsel %vm1711, %v2473, 0
        %v2579 = vsel %vm1711, %v2474, 0
        %v2582 = vsel %vm1711, %v2475, 0
        %v2585 = vsel %vm1711, %v2476, 0
        %v2588 = vsel %vm1711, %v2477, 0
        %v2591 = vsel %vm1711, %v2478, 0
        %v2594 = vsel %vm1711, %v2479, 0
        %v2597 = vsel %vm1711, %v2480, 0
        %v2600 = vsel %vm1711, %v2481, 0
        %2602 = vmatprep.subr.bf16.mxu0 %v2499
        %2603 = vmatpush1.bf16.msra.mxu0 %v2498
        %2604 = vmatprep.subr.bf16.mxu0 %v2501
        %2605 = vmatpush1.bf16.msra.mxu0 %v2500
        %2606 = vmatprep.subr.bf16.mxu0 0
        %2607 = vmatpush1.bf16.msra.mxu0 0
        %2608 = vmatprep.subr.bf16.mxu0 0
        %2609 = vmatpush1.bf16.msra.mxu0 0
        %2610 = vmatprep.subr.bf16.mxu0 0
        %2611 = vmatpush1.bf16.msra.mxu0 0
        %2612 = vmatprep.subr.bf16.mxu0 0
        %2613 = vmatpush1.bf16.msra.mxu0 0
        %2614 = vmatprep.subr.bf16.mxu0 0
        %2615 = vmatpush1.bf16.msra.mxu0 0
        %2616 = vmatprep.subr.bf16.mxu0 0
        %2617 = vmatpush1.bf16.msra.mxu0 0
        %2618 = vmatprep.subr.bf16.mxu0 0
        %2619 = vmatpush1.bf16.msra.mxu0 0
        %2620 = vmatprep.subr.bf16.mxu0 0
        %2621 = vmatpush1.bf16.msra.mxu0 0
        %2622 = vmatprep.subr.bf16.mxu0 0
        %2623 = vmatpush1.bf16.msra.mxu0 0
        %2624 = vmatprep.subr.bf16.mxu0 0
        %2625 = vmatpush1.bf16.msra.mxu0 0
        %2626 = vmatprep.subr.bf16.mxu0 0
        %2627 = vmatpush1.bf16.msra.mxu0 0
        %2628 = vmatprep.subr.bf16.mxu0 0
        %2629 = vmatpush1.bf16.msra.mxu0 0
        %2630 = vmatprep.subr.bf16.mxu0 0
        %2631 = vmatpush1.bf16.msra.mxu0 0
        %2632 = vmatprep.subr.bf16.mxu0 0
        %2633 = vmatpush1.bf16.msra.mxu0 0
        %2634 = vmatprep.mubr.bf16.mxu0 0
        %2635 = vmatmul.mubr.bf16.gmra.mrb[0].mxu0 %v2507
        %v2636 = vpop.f32.mrb[0].mxu0
        %v2637 = vadd.f32 0.0, %v2636
        %v2638 = vpop.f32.mrb[0].mxu0
        %v2639 = vadd.f32 0.0, %v2638
        %v2640 = vpop.f32.mrb[0].mxu0
        %v2641 = vadd.f32 0.0, %v2640
        %v2642 = vpop.f32.mrb[0].mxu0
        %v2643 = vadd.f32 0.0, %v2642
        %2644 = vmatprep.mubr.bf16.mxu0 0
        %2645 = vmatmul.mubr.bf16.gmra.mrb[0].mxu0 %v2510
        %v2646 = vpop.f32.mrb[0].mxu0
        %v2647 = vadd.f32 0.0, %v2646
        %v2648 = vpop.f32.mrb[0].mxu0
        %v2649 = vadd.f32 0.0, %v2648
        %v2650 = vpop.f32.mrb[0].mxu0
        %v2651 = vadd.f32 0.0, %v2650
        %v2652 = vpop.f32.mrb[0].mxu0
        %v2653 = vadd.f32 0.0, %v2652
        %2654 = vmatprep.mubr.bf16.mxu0 0
        %2655 = vmatmul.mubr.bf16.gmra.mrb[0].mxu0 %v2513
        %v2656 = vpop.f32.mrb[0].mxu0
        %v2657 = vadd.f32 0.0, %v2656
        %v2658 = vpop.f32.mrb[0].mxu0
        %v2659 = vadd.f32 0.0, %v2658
        %v2660 = vpop.f32.mrb[0].mxu0
        %v2661 = vadd.f32 0.0, %v2660
        %v2662 = vpop.f32.mrb[0].mxu0
        %v2663 = vadd.f32 0.0, %v2662
        %2664 = vmatprep.mubr.bf16.mxu0 0
        %2665 = vmatmul.mubr.bf16.gmra.mrb[0].mxu0 %v2516
        %v2666 = vpop.f32.mrb[0].mxu0
        %v2667 = vadd.f32 0.0, %v2666
        %v2668 = vpop.f32.mrb[0].mxu0
        %v2669 = vadd.f32 0.0, %v2668
        %v2670 = vpop.f32.mrb[0].mxu0
        %v2671 = vadd.f32 0.0, %v2670
        %v2672 = vpop.f32.mrb[0].mxu0
        %v2673 = vadd.f32 0.0, %v2672
        %2674 = vmatprep.mubr.bf16.mxu0 0
        %2675 = vmatmul.mubr.bf16.gmra.mrb[0].mxu0 %v2519
        %v2676 = vpop.f32.mrb[0].mxu0
        %v2677 = vadd.f32 0.0, %v2676
        %v2678 = vpop.f32.mrb[0].mxu0
        %v2679 = vadd.f32 0.0, %v2678
        %v2680 = vpop.f32.mrb[0].mxu0
        %v2681 = vadd.f32 0.0, %v2680
        %v2682 = vpop.f32.mrb[0].mxu0
        %v2683 = vadd.f32 0.0, %v2682
        %2684 = vmatprep.mubr.bf16.mxu0 0
        %2685 = vmatmul.mubr.bf16.gmra.mrb[0].mxu0 %v2522
        %v2686 = vpop.f32.mrb[0].mxu0
        %v2687 = vadd.f32 0.0, %v2686
        %v2688 = vpop.f32.mrb[0].mxu0
        %v2689 = vadd.f32 0.0, %v2688
        %v2690 = vpop.f32.mrb[0].mxu0
        %v2691 = vadd.f32 0.0, %v2690
        %v2692 = vpop.f32.mrb[0].mxu0
        %v2693 = vadd.f32 0.0, %v2692
        %2694 = vmatprep.mubr.bf16.mxu0 0
        %2695 = vmatmul.mubr.bf16.gmra.mrb[0].mxu0 %v2525
        %v2696 = vpop.f32.mrb[0].mxu0
        %v2697 = vadd.f32 0.0, %v2696
        %v2698 = vpop.f32.mrb[0].mxu0
        %v2699 = vadd.f32 0.0, %v2698
        %v2700 = vpop.f32.mrb[0].mxu0
        %v2701 = vadd.f32 0.0, %v2700
        %v2702 = vpop.f32.mrb[0].mxu0
        %v2703 = vadd.f32 0.0, %v2702
        %2704 = vmatprep.mubr.bf16.mxu0 0
        %2705 = vmatmul.mubr.bf16.gmra.mrb[0].mxu0 %v2528
        %v2706 = vpop.f32.mrb[0].mxu0
        %v2707 = vadd.f32 0.0, %v2706
        %v2708 = vpop.f32.mrb[0].mxu0
        %v2709 = vadd.f32 0.0, %v2708
        %v2710 = vpop.f32.mrb[0].mxu0
        %v2711 = vadd.f32 0.0, %v2710
        %v2712 = vpop.f32.mrb[0].mxu0
        %v2713 = vadd.f32 0.0, %v2712
        %2714 = vmatprep.mubr.bf16.mxu0 0
        %2715 = vmatmul.mubr.bf16.gmra.mrb[0].mxu0 %v2531
        %v2716 = vpop.f32.mrb[0].mxu0
        %v2717 = vadd.f32 0.0, %v2716
        %v2718 = vpop.f32.mrb[0].mxu0
        %v2719 = vadd.f32 0.0, %v2718
        %v2720 = vpop.f32.mrb[0].mxu0
        %v2721 = vadd.f32 0.0, %v2720
        %v2722 = vpop.f32.mrb[0].mxu0
        %v2723 = vadd.f32 0.0, %v2722
        %2724 = vmatprep.mubr.bf16.mxu0 0
        %2725 = vmatmul.mubr.bf16.gmra.mrb[0].mxu0 %v2534
        %v2726 = vpop.f32.mrb[0].mxu0
        %v2727 = vadd.f32 0.0, %v2726
        %v2728 = vpop.f32.mrb[0].mxu0
        %v2729 = vadd.f32 0.0, %v2728
        %v2730 = vpop.f32.mrb[0].mxu0
        %v2731 = vadd.f32 0.0, %v2730
        %v2732 = vpop.f32.mrb[0].mxu0
        %v2733 = vadd.f32 0.0, %v2732
        %2734 = vmatprep.mubr.bf16.mxu0 0
        %2735 = vmatmul.mubr.bf16.gmra.mrb[0].mxu0 %v2537
        %v2736 = vpop.f32.mrb[0].mxu0
        %v2737 = vadd.f32 0.0, %v2736
        %v2738 = vpop.f32.mrb[0].mxu0
        %v2739 = vadd.f32 0.0, %v2738
        %v2740 = vpop.f32.mrb[0].mxu0
        %v2741 = vadd.f32 0.0, %v2740
        %v2742 = vpop.f32.mrb[0].mxu0
        %v2743 = vadd.f32 0.0, %v2742
        %2744 = vmatprep.mubr.bf16.mxu0 0
        %2745 = vmatmul.mubr.bf16.gmra.mrb[0].mxu0 %v2540
        %v2746 = vpop.f32.mrb[0].mxu0
        %v2747 = vadd.f32 0.0, %v2746
        %v2748 = vpop.f32.mrb[0].mxu0
        %v2749 = vadd.f32 0.0, %v2748
        %v2750 = vpop.f32.mrb[0].mxu0
        %v2751 = vadd.f32 0.0, %v2750
        %v2752 = vpop.f32.mrb[0].mxu0
        %v2753 = vadd.f32 0.0, %v2752
        %2754 = vmatprep.mubr.bf16.mxu0 0
        %2755 = vmatmul.mubr.bf16.gmra.mrb[0].mxu0 %v2543
        %v2756 = vpop.f32.mrb[0].mxu0
        %v2757 = vadd.f32 0.0, %v2756
        %v2758 = vpop.f32.mrb[0].mxu0
        %v2759 = vadd.f32 0.0, %v2758
        %v2760 = vpop.f32.mrb[0].mxu0
        %v2761 = vadd.f32 0.0, %v2760
        %v2762 = vpop.f32.mrb[0].mxu0
        %v2763 = vadd.f32 0.0, %v2762
        %2764 = vmatprep.mubr.bf16.mxu0 0
        %2765 = vmatmul.mubr.bf16.gmra.mrb[0].mxu0 %v2546
        %v2766 = vpop.f32.mrb[0].mxu0
        %v2767 = vadd.f32 0.0, %v2766
        %v2768 = vpop.f32.mrb[0].mxu0
        %v2769 = vadd.f32 0.0, %v2768
        %v2770 = vpop.f32.mrb[0].mxu0
        %v2771 = vadd.f32 0.0, %v2770
        %v2772 = vpop.f32.mrb[0].mxu0
        %v2773 = vadd.f32 0.0, %v2772
        %2774 = vmatprep.mubr.bf16.mxu0 0
        %2775 = vmatmul.mubr.bf16.gmra.mrb[0].mxu0 %v2549
        %v2776 = vpop.f32.mrb[0].mxu0
        %v2777 = vadd.f32 0.0, %v2776
        %v2778 = vpop.f32.mrb[0].mxu0
        %v2779 = vadd.f32 0.0, %v2778
        %v2780 = vpop.f32.mrb[0].mxu0
        %v2781 = vadd.f32 0.0, %v2780
        %v2782 = vpop.f32.mrb[0].mxu0
        %v2783 = vadd.f32 0.0, %v2782
        %2784 = vmatprep.mubr.bf16.mxu0 0
        %2785 = vmatmul.mubr.bf16.gmra.mrb[0].mxu0 %v2552
        %v2786 = vpop.f32.mrb[0].mxu0
        %v2787 = vadd.f32 0.0, %v2786
        %v2788 = vpop.f32.mrb[0].mxu0
        %v2789 = vadd.f32 0.0, %v2788
        %v2790 = vpop.f32.mrb[0].mxu0
        %v2791 = vadd.f32 0.0, %v2790
        %v2792 = vpop.f32.mrb[0].mxu0
        %v2793 = vadd.f32 0.0, %v2792
        %2794 = vmatprep.mubr.bf16.mxu0 0
        %2795 = vmatmul.mubr.bf16.gmra.mrb[0].mxu0 %v2555
        %v2796 = vpop.f32.mrb[0].mxu0
        %v2797 = vadd.f32 0.0, %v2796
        %v2798 = vpop.f32.mrb[0].mxu0
        %v2799 = vadd.f32 0.0, %v2798
        %v2800 = vpop.f32.mrb[0].mxu0
        %v2801 = vadd.f32 0.0, %v2800
        %v2802 = vpop.f32.mrb[0].mxu0
        %v2803 = vadd.f32 0.0, %v2802
        %2804 = vmatprep.mubr.bf16.mxu0 0
        %2805 = vmatmul.mubr.bf16.gmra.mrb[0].mxu0 %v2558
        %v2806 = vpop.f32.mrb[0].mxu0
        %v2807 = vadd.f32 0.0, %v2806
        %v2808 = vpop.f32.mrb[0].mxu0
        %v2809 = vadd.f32 0.0, %v2808
        %v2810 = vpop.f32.mrb[0].mxu0
        %v2811 = vadd.f32 0.0, %v2810
        %v2812 = vpop.f32.mrb[0].mxu0
        %v2813 = vadd.f32 0.0, %v2812
        %2814 = vmatprep.mubr.bf16.mxu0 0
        %2815 = vmatmul.mubr.bf16.gmra.mrb[0].mxu0 %v2561
        %v2816 = vpop.f32.mrb[0].mxu0
        %v2817 = vadd.f32 0.0, %v2816
        %v2818 = vpop.f32.mrb[0].mxu0
        %v2819 = vadd.f32 0.0, %v2818
        %v2820 = vpop.f32.mrb[0].mxu0
        %v2821 = vadd.f32 0.0, %v2820
        %v2822 = vpop.f32.mrb[0].mxu0
        %v2823 = vadd.f32 0.0, %v2822
        %2824 = vmatprep.mubr.bf16.mxu0 0
        %2825 = vmatmul.mubr.bf16.gmra.mrb[0].mxu0 %v2564
        %v2826 = vpop.f32.mrb[0].mxu0
        %v2827 = vadd.f32 0.0, %v2826
        %v2828 = vpop.f32.mrb[0].mxu0
        %v2829 = vadd.f32 0.0, %v2828
        %v2830 = vpop.f32.mrb[0].mxu0
        %v2831 = vadd.f32 0.0, %v2830
        %v2832 = vpop.f32.mrb[0].mxu0
        %v2833 = vadd.f32 0.0, %v2832
        %2834 = vmatprep.mubr.bf16.mxu0 0
        %2835 = vmatmul.mubr.bf16.gmra.mrb[0].mxu0 %v2567
        %v2836 = vpop.f32.mrb[0].mxu0
        %v2837 = vadd.f32 0.0, %v2836
        %v2838 = vpop.f32.mrb[0].mxu0
        %v2839 = vadd.f32 0.0, %v2838
        %v2840 = vpop.f32.mrb[0].mxu0
        %v2841 = vadd.f32 0.0, %v2840
        %v2842 = vpop.f32.mrb[0].mxu0
        %v2843 = vadd.f32 0.0, %v2842
        %2844 = vmatprep.mubr.bf16.mxu0 0
        %2845 = vmatmul.mubr.bf16.gmra.mrb[0].mxu0 %v2570
        %v2846 = vpop.f32.mrb[0].mxu0
        %v2847 = vadd.f32 0.0, %v2846
        %v2848 = vpop.f32.mrb[0].mxu0
        %v2849 = vadd.f32 0.0, %v2848
        %v2850 = vpop.f32.mrb[0].mxu0
        %v2851 = vadd.f32 0.0, %v2850
        %v2852 = vpop.f32.mrb[0].mxu0
        %v2853 = vadd.f32 0.0, %v2852
        %2854 = vmatprep.mubr.bf16.mxu0 0
        %2855 = vmatmul.mubr.bf16.gmra.mrb[0].mxu0 %v2573
        %v2856 = vpop.f32.mrb[0].mxu0
        %v2857 = vadd.f32 0.0, %v2856
        %v2858 = vpop.f32.mrb[0].mxu0
        %v2859 = vadd.f32 0.0, %v2858
        %v2860 = vpop.f32.mrb[0].mxu0
        %v2861 = vadd.f32 0.0, %v2860
        %v2862 = vpop.f32.mrb[0].mxu0
        %v2863 = vadd.f32 0.0, %v2862
        %2864 = vmatprep.mubr.bf16.mxu0 0
        %2865 = vmatmul.mubr.bf16.gmra.mrb[0].mxu0 %v2576
        %v2866 = vpop.f32.mrb[0].mxu0
        %v2867 = vadd.f32 0.0, %v2866
        %v2868 = vpop.f32.mrb[0].mxu0
        %v2869 = vadd.f32 0.0, %v2868
        %v2870 = vpop.f32.mrb[0].mxu0
        %v2871 = vadd.f32 0.0, %v2870
        %v2872 = vpop.f32.mrb[0].mxu0
        %v2873 = vadd.f32 0.0, %v2872
        %2874 = vmatprep.mubr.bf16.mxu0 0
        %2875 = vmatmul.mubr.bf16.gmra.mrb[0].mxu0 %v2579
        %v2876 = vpop.f32.mrb[0].mxu0
        %v2877 = vadd.f32 0.0, %v2876
        %v2878 = vpop.f32.mrb[0].mxu0
        %v2879 = vadd.f32 0.0, %v2878
        %v2880 = vpop.f32.mrb[0].mxu0
        %v2881 = vadd.f32 0.0, %v2880
        %v2882 = vpop.f32.mrb[0].mxu0
        %v2883 = vadd.f32 0.0, %v2882
        %2884 = vmatprep.mubr.bf16.mxu0 0
        %2885 = vmatmul.mubr.bf16.gmra.mrb[0].mxu0 %v2582
        %v2886 = vpop.f32.mrb[0].mxu0
        %v2887 = vadd.f32 0.0, %v2886
        %v2888 = vpop.f32.mrb[0].mxu0
        %v2889 = vadd.f32 0.0, %v2888
        %v2890 = vpop.f32.mrb[0].mxu0
        %v2891 = vadd.f32 0.0, %v2890
        %v2892 = vpop.f32.mrb[0].mxu0
        %v2893 = vadd.f32 0.0, %v2892
        %2894 = vmatprep.mubr.bf16.mxu0 0
        %2895 = vmatmul.mubr.bf16.gmra.mrb[0].mxu0 %v2585
        %v2896 = vpop.f32.mrb[0].mxu0
        %v2897 = vadd.f32 0.0, %v2896
        %v2898 = vpop.f32.mrb[0].mxu0
        %v2899 = vadd.f32 0.0, %v2898
        %v2900 = vpop.f32.mrb[0].mxu0
        %v2901 = vadd.f32 0.0, %v2900
        %v2902 = vpop.f32.mrb[0].mxu0
        %v2903 = vadd.f32 0.0, %v2902
        %2904 = vmatprep.mubr.bf16.mxu0 0
        %2905 = vmatmul.mubr.bf16.gmra.mrb[0].mxu0 %v2588
        %v2906 = vpop.f32.mrb[0].mxu0
        %v2907 = vadd.f32 0.0, %v2906
        %v2908 = vpop.f32.mrb[0].mxu0
        %v2909 = vadd.f32 0.0, %v2908
        %v2910 = vpop.f32.mrb[0].mxu0
        %v2911 = vadd.f32 0.0, %v2910
        %v2912 = vpop.f32.mrb[0].mxu0
        %v2913 = vadd.f32 0.0, %v2912
        %2914 = vmatprep.mubr.bf16.mxu0 0
        %2915 = vmatmul.mubr.bf16.gmra.mrb[0].mxu0 %v2591
        %v2916 = vpop.f32.mrb[0].mxu0
        %v2917 = vadd.f32 0.0, %v2916
        %v2918 = vpop.f32.mrb[0].mxu0
        %v2919 = vadd.f32 0.0, %v2918
        %v2920 = vpop.f32.mrb[0].mxu0
        %v2921 = vadd.f32 0.0, %v2920
        %v2922 = vpop.f32.mrb[0].mxu0
        %v2923 = vadd.f32 0.0, %v2922
        %2924 = vmatprep.mubr.bf16.mxu0 0
        %2925 = vmatmul.mubr.bf16.gmra.mrb[0].mxu0 %v2594
        %v2926 = vpop.f32.mrb[0].mxu0
        %v2927 = vadd.f32 0.0, %v2926
        %v2928 = vpop.f32.mrb[0].mxu0
        %v2929 = vadd.f32 0.0, %v2928
        %v2930 = vpop.f32.mrb[0].mxu0
        %v2931 = vadd.f32 0.0, %v2930
        %v2932 = vpop.f32.mrb[0].mxu0
        %v2933 = vadd.f32 0.0, %v2932
        %2934 = vmatprep.mubr.bf16.mxu0 0
        %2935 = vmatmul.mubr.bf16.gmra.mrb[0].mxu0 %v2597
        %v2936 = vpop.f32.mrb[0].mxu0
        %v2937 = vadd.f32 0.0, %v2936
        %v2938 = vpop.f32.mrb[0].mxu0
        %v2939 = vadd.f32 0.0, %v2938
        %v2940 = vpop.f32.mrb[0].mxu0
        %v2941 = vadd.f32 0.0, %v2940
        %v2942 = vpop.f32.mrb[0].mxu0
        %v2943 = vadd.f32 0.0, %v2942
        %2944 = vmatprep.mubr.bf16.mxu0 0
        %2945 = vmatmul.mubr.bf16.gmra.mrb[0].mxu0 %v2600
        %v2946 = vpop.f32.mrb[0].mxu0
        %v2947 = vadd.f32 0.0, %v2946
        %v2948 = vpop.f32.mrb[0].mxu0
        %v2949 = vadd.f32 0.0, %v2948
        %v2950 = vpop.f32.mrb[0].mxu0
        %v2951 = vadd.f32 0.0, %v2950
        %v2952 = vpop.f32.mrb[0].mxu0
        %v2953 = vadd.f32 0.0, %v2952
        %2954 = vdwg.mxu0
        %v2955 = vadd.f32 %v2637, %v2641
        %v2956 = vadd.f32 %v2955, %v2647
        %v2957 = vadd.f32 %v2956, %v2651
        %v2958 = vadd.f32 %v2957, %v2657
        %v2959 = vadd.f32 %v2958, %v2661
        %v2960 = vadd.f32 %v2959, %v2667
        %v2961 = vadd.f32 %v2960, %v2671
        %v2962 = vrot.slane %v2961, 4
        %v2963 = vadd.f32 %v2961, %v2962
        %v2964 = vrot.slane %v2963, 2
        %v2965 = vadd.f32 %v2963, %v2964
        %v2966 = vrot.slane %v2965, 1
        %v2967 = vadd.f32 %v2965, %v2966
        %v2968 = vadd.f32 %v2639, %v2643
        %v2969 = vadd.f32 %v2968, %v2649
        %v2970 = vadd.f32 %v2969, %v2653
        %v2971 = vadd.f32 %v2970, %v2659
        %v2972 = vadd.f32 %v2971, %v2663
        %v2973 = vadd.f32 %v2972, %v2669
        %v2974 = vadd.f32 %v2973, %v2673
        %v2975 = vrot.slane %v2974, 4
        %v2976 = vadd.f32 %v2974, %v2975
        %v2977 = vrot.slane %v2976, 2
        %v2978 = vadd.f32 %v2976, %v2977
        %v2979 = vrot.slane %v2978, 1
        %v2980 = vadd.f32 %v2978, %v2979
        %v2981 = vadd.f32 %v2677, %v2681
        %v2982 = vadd.f32 %v2981, %v2687
        %v2983 = vadd.f32 %v2982, %v2691
        %v2984 = vadd.f32 %v2983, %v2697
        %v2985 = vadd.f32 %v2984, %v2701
        %v2986 = vadd.f32 %v2985, %v2707
        %v2987 = vadd.f32 %v2986, %v2711
        %v2988 = vrot.slane %v2987, 4
        %v2989 = vadd.f32 %v2987, %v2988
        %v2990 = vrot.slane %v2989, 2
        %v2991 = vadd.f32 %v2989, %v2990
        %v2992 = vrot.slane %v2991, 1
        %v2993 = vadd.f32 %v2991, %v2992
        %v2994 = vadd.f32 %v2679, %v2683
        %v2995 = vadd.f32 %v2994, %v2689
        %v2996 = vadd.f32 %v2995, %v2693
        %v2997 = vadd.f32 %v2996, %v2699
        %v2998 = vadd.f32 %v2997, %v2703
        %v2999 = vadd.f32 %v2998, %v2709
        %v3000 = vadd.f32 %v2999, %v2713
        %v3001 = vrot.slane %v3000, 4
        %v3002 = vadd.f32 %v3000, %v3001
        %v3003 = vrot.slane %v3002, 2
        %v3004 = vadd.f32 %v3002, %v3003
        %v3005 = vrot.slane %v3004, 1
        %v3006 = vadd.f32 %v3004, %v3005
        %v3007 = vadd.f32 %v2717, %v2721
        %v3008 = vadd.f32 %v3007, %v2727
        %v3009 = vadd.f32 %v3008, %v2731
        %v3010 = vadd.f32 %v3009, %v2737
        %v3011 = vadd.f32 %v3010, %v2741
        %v3012 = vadd.f32 %v3011, %v2747
        %v3013 = vadd.f32 %v3012, %v2751
        %v3014 = vrot.slane %v3013, 4
        %v3015 = vadd.f32 %v3013, %v3014
        %v3016 = vrot.slane %v3015, 2
        %v3017 = vadd.f32 %v3015, %v3016
        %v3018 = vrot.slane %v3017, 1
        %v3019 = vadd.f32 %v3017, %v3018
        %v3020 = vadd.f32 %v2719, %v2723
        %v3021 = vadd.f32 %v3020, %v2729
        %v3022 = vadd.f32 %v3021, %v2733
        %v3023 = vadd.f32 %v3022, %v2739
        %v3024 = vadd.f32 %v3023, %v2743
        %v3025 = vadd.f32 %v3024, %v2749
        %v3026 = vadd.f32 %v3025, %v2753
        %v3027 = vrot.slane %v3026, 4
        %v3028 = vadd.f32 %v3026, %v3027
        %v3029 = vrot.slane %v3028, 2
        %v3030 = vadd.f32 %v3028, %v3029
        %v3031 = vrot.slane %v3030, 1
        %v3032 = vadd.f32 %v3030, %v3031
        %v3033 = vadd.f32 %v2757, %v2761
        %v3034 = vadd.f32 %v3033, %v2767
        %v3035 = vadd.f32 %v3034, %v2771
        %v3036 = vadd.f32 %v3035, %v2777
        %v3037 = vadd.f32 %v3036, %v2781
        %v3038 = vadd.f32 %v3037, %v2787
        %v3039 = vadd.f32 %v3038, %v2791
        %v3040 = vrot.slane %v3039, 4
        %v3041 = vadd.f32 %v3039, %v3040
        %v3042 = vrot.slane %v3041, 2
        %v3043 = vadd.f32 %v3041, %v3042
        %v3044 = vrot.slane %v3043, 1
        %v3045 = vadd.f32 %v3043, %v3044
        %v3046 = vadd.f32 %v2759, %v2763
        %v3047 = vadd.f32 %v3046, %v2769
        %v3048 = vadd.f32 %v3047, %v2773
        %v3049 = vadd.f32 %v3048, %v2779
        %v3050 = vadd.f32 %v3049, %v2783
        %v3051 = vadd.f32 %v3050, %v2789
        %v3052 = vadd.f32 %v3051, %v2793
        %v3053 = vrot.slane %v3052, 4
        %v3054 = vadd.f32 %v3052, %v3053
        %v3055 = vrot.slane %v3054, 2
        %v3056 = vadd.f32 %v3054, %v3055
        %v3057 = vrot.slane %v3056, 1
        %v3058 = vadd.f32 %v3056, %v3057
        %v3059 = vadd.f32 %v2797, %v2801
        %v3060 = vadd.f32 %v3059, %v2807
        %v3061 = vadd.f32 %v3060, %v2811
        %v3062 = vadd.f32 %v3061, %v2817
        %v3063 = vadd.f32 %v3062, %v2821
        %v3064 = vadd.f32 %v3063, %v2827
        %v3065 = vadd.f32 %v3064, %v2831
        %v3066 = vrot.slane %v3065, 4
        %v3067 = vadd.f32 %v3065, %v3066
        %v3068 = vrot.slane %v3067, 2
        %v3069 = vadd.f32 %v3067, %v3068
        %v3070 = vrot.slane %v3069, 1
        %v3071 = vadd.f32 %v3069, %v3070
        %v3072 = vadd.f32 %v2799, %v2803
        %v3073 = vadd.f32 %v3072, %v2809
        %v3074 = vadd.f32 %v3073, %v2813
        %v3075 = vadd.f32 %v3074, %v2819
        %v3076 = vadd.f32 %v3075, %v2823
        %v3077 = vadd.f32 %v3076, %v2829
        %v3078 = vadd.f32 %v3077, %v2833
        %v3079 = vrot.slane %v3078, 4
        %v3080 = vadd.f32 %v3078, %v3079
        %v3081 = vrot.slane %v3080, 2
        %v3082 = vadd.f32 %v3080, %v3081
        %v3083 = vrot.slane %v3082, 1
        %v3084 = vadd.f32 %v3082, %v3083
        %v3085 = vadd.f32 %v2837, %v2841
        %v3086 = vadd.f32 %v3085, %v2847
        %v3087 = vadd.f32 %v3086, %v2851
        %v3088 = vadd.f32 %v3087, %v2857
        %v3089 = vadd.f32 %v3088, %v2861
        %v3090 = vadd.f32 %v3089, %v2867
        %v3091 = vadd.f32 %v3090, %v2871
        %v3092 = vrot.slane %v3091, 4
        %v3093 = vadd.f32 %v3091, %v3092
        %v3094 = vrot.slane %v3093, 2
        %v3095 = vadd.f32 %v3093, %v3094
        %v3096 = vrot.slane %v3095, 1
        %v3097 = vadd.f32 %v3095, %v3096
        %v3098 = vadd.f32 %v2839, %v2843
        %v3099 = vadd.f32 %v3098, %v2849
        %v3100 = vadd.f32 %v3099, %v2853
        %v3101 = vadd.f32 %v3100, %v2859
        %v3102 = vadd.f32 %v3101, %v2863
        %v3103 = vadd.f32 %v3102, %v2869
        %v3104 = vadd.f32 %v3103, %v2873
        %v3105 = vrot.slane %v3104, 4
        %v3106 = vadd.f32 %v3104, %v3105
        %v3107 = vrot.slane %v3106, 2
        %v3108 = vadd.f32 %v3106, %v3107
        %v3109 = vrot.slane %v3108, 1
        %v3110 = vadd.f32 %v3108, %v3109
        %v3111 = vadd.f32 %v2877, %v2881
        %v3112 = vadd.f32 %v3111, %v2887
        %v3113 = vadd.f32 %v3112, %v2891
        %v3114 = vadd.f32 %v3113, %v2897
        %v3115 = vadd.f32 %v3114, %v2901
        %v3116 = vadd.f32 %v3115, %v2907
        %v3117 = vadd.f32 %v3116, %v2911
        %v3118 = vrot.slane %v3117, 4
        %v3119 = vadd.f32 %v3117, %v3118
        %v3120 = vrot.slane %v3119, 2
        %v3121 = vadd.f32 %v3119, %v3120
        %v3122 = vrot.slane %v3121, 1
        %v3123 = vadd.f32 %v3121, %v3122
        %v3124 = vadd.f32 %v2879, %v2883
        %v3125 = vadd.f32 %v3124, %v2889
        %v3126 = vadd.f32 %v3125, %v2893
        %v3127 = vadd.f32 %v3126, %v2899
        %v3128 = vadd.f32 %v3127, %v2903
        %v3129 = vadd.f32 %v3128, %v2909
        %v3130 = vadd.f32 %v3129, %v2913
        %v3131 = vrot.slane %v3130, 4
        %v3132 = vadd.f32 %v3130, %v3131
        %v3133 = vrot.slane %v3132, 2
        %v3134 = vadd.f32 %v3132, %v3133
        %v3135 = vrot.slane %v3134, 1
        %v3136 = vadd.f32 %v3134, %v3135
        %v3137 = vadd.f32 %v2917, %v2921
        %v3138 = vadd.f32 %v3137, %v2927
        %v3139 = vadd.f32 %v3138, %v2931
        %v3140 = vadd.f32 %v3139, %v2937
        %v3141 = vadd.f32 %v3140, %v2941
        %v3142 = vadd.f32 %v3141, %v2947
        %v3143 = vadd.f32 %v3142, %v2951
        %v3144 = vrot.slane %v3143, 4
        %v3145 = vadd.f32 %v3143, %v3144
        %v3146 = vrot.slane %v3145, 2
        %v3147 = vadd.f32 %v3145, %v3146
        %v3148 = vrot.slane %v3147, 1
        %v3149 = vadd.f32 %v3147, %v3148
        %v3150 = vadd.f32 %v2919, %v2923
        %v3151 = vadd.f32 %v3150, %v2929
        %v3152 = vadd.f32 %v3151, %v2933
        %v3153 = vadd.f32 %v3152, %v2939
        %v3154 = vadd.f32 %v3153, %v2943
        %v3155 = vadd.f32 %v3154, %v2949
        %v3156 = vadd.f32 %v3155, %v2953
        %v3157 = vrot.slane %v3156, 4
        %v3158 = vadd.f32 %v3156, %v3157
        %v3159 = vrot.slane %v3158, 2
        %v3160 = vadd.f32 %v3158, %v3159
        %v3161 = vrot.slane %v3160, 1
        %v3162 = vadd.f32 %v3160, %v3161
        %v3163 = vmul.f32 %v2967, %v715
        %v3164 = vmul.f32 %v2980, %v715
        %v3165 = vmul.f32 %v2993, %v715
        %v3166 = vmul.f32 %v3006, %v715
        %v3167 = vmul.f32 %v3019, %v715
        %v3168 = vmul.f32 %v3032, %v715
        %v3169 = vmul.f32 %v3045, %v715
        %v3170 = vmul.f32 %v3058, %v715
        %v3171 = vmul.f32 %v3071, %v715
        %v3172 = vmul.f32 %v3084, %v715
        %v3173 = vmul.f32 %v3097, %v715
        %v3174 = vmul.f32 %v3110, %v715
        %v3175 = vmul.f32 %v3123, %v715
        %v3176 = vmul.f32 %v3136, %v715
        %v3177 = vmul.f32 %v3149, %v715
        %v3178 = vmul.f32 %v3162, %v715
        %v3179 = vmul.f32 %v2637, %v2637
        %v3180 = vmul.f32 %v2639, %v2639
        %v3181 = vmul.f32 %v2641, %v2641
        %v3182 = vmul.f32 %v2643, %v2643
        %v3183 = vmul.f32 %v2647, %v2647
        %v3184 = vmul.f32 %v2649, %v2649
        %v3185 = vmul.f32 %v2651, %v2651
        %v3186 = vmul.f32 %v2653, %v2653
        %v3187 = vmul.f32 %v2657, %v2657
        %v3188 = vmul.f32 %v2659, %v2659
        %v3189 = vmul.f32 %v2661, %v2661
        %v3190 = vmul.f32 %v2663, %v2663
        %v3191 = vmul.f32 %v2667, %v2667
        %v3192 = vmul.f32 %v2669, %v2669
        %v3193 = vmul.f32 %v2671, %v2671
        %v3194 = vmul.f32 %v2673, %v2673
        %v3195 = vmul.f32 %v2677, %v2677
        %v3196 = vmul.f32 %v2679, %v2679
        %v3197 = vmul.f32 %v2681, %v2681
        %v3198 = vmul.f32 %v2683, %v2683
        %v3199 = vmul.f32 %v2687, %v2687
        %v3200 = vmul.f32 %v2689, %v2689
        %v3201 = vmul.f32 %v2691, %v2691
        %v3202 = vmul.f32 %v2693, %v2693
        %v3203 = vmul.f32 %v2697, %v2697
        %v3204 = vmul.f32 %v2699, %v2699
        %v3205 = vmul.f32 %v2701, %v2701
        %v3206 = vmul.f32 %v2703, %v2703
        %v3207 = vmul.f32 %v2707, %v2707
        %v3208 = vmul.f32 %v2709, %v2709
        %v3209 = vmul.f32 %v2711, %v2711
        %v3210 = vmul.f32 %v2713, %v2713
        %v3211 = vmul.f32 %v2717, %v2717
        %v3212 = vmul.f32 %v2719, %v2719
        %v3213 = vmul.f32 %v2721, %v2721
        %v3214 = vmul.f32 %v2723, %v2723
        %v3215 = vmul.f32 %v2727, %v2727
        %v3216 = vmul.f32 %v2729, %v2729
        %v3217 = vmul.f32 %v2731, %v2731
        %v3218 = vmul.f32 %v2733, %v2733
        %v3219 = vmul.f32 %v2737, %v2737
        %v3220 = vmul.f32 %v2739, %v2739
        %v3221 = vmul.f32 %v2741, %v2741
        %v3222 = vmul.f32 %v2743, %v2743
        %v3223 = vmul.f32 %v2747, %v2747
        %v3224 = vmul.f32 %v2749, %v2749
        %v3225 = vmul.f32 %v2751, %v2751
        %v3226 = vmul.f32 %v2753, %v2753
        %v3227 = vmul.f32 %v2757, %v2757
        %v3228 = vmul.f32 %v2759, %v2759
        %v3229 = vmul.f32 %v2761, %v2761
        %v3230 = vmul.f32 %v2763, %v2763
        %v3231 = vmul.f32 %v2767, %v2767
        %v3232 = vmul.f32 %v2769, %v2769
        %v3233 = vmul.f32 %v2771, %v2771
        %v3234 = vmul.f32 %v2773, %v2773
        %v3235 = vmul.f32 %v2777, %v2777
        %v3236 = vmul.f32 %v2779, %v2779
        %v3237 = vmul.f32 %v2781, %v2781
        %v3238 = vmul.f32 %v2783, %v2783
        %v3239 = vmul.f32 %v2787, %v2787
        %v3240 = vmul.f32 %v2789, %v2789
        %v3241 = vmul.f32 %v2791, %v2791
        %v3242 = vmul.f32 %v2793, %v2793
        %v3243 = vmul.f32 %v2797, %v2797
        %v3244 = vmul.f32 %v2799, %v2799
        %v3245 = vmul.f32 %v2801, %v2801
        %v3246 = vmul.f32 %v2803, %v2803
        %v3247 = vmul.f32 %v2807, %v2807
        %v3248 = vmul.f32 %v2809, %v2809
        %v3249 = vmul.f32 %v2811, %v2811
        %v3250 = vmul.f32 %v2813, %v2813
        %v3251 = vmul.f32 %v2817, %v2817
        %v3252 = vmul.f32 %v2819, %v2819
        %v3253 = vmul.f32 %v2821, %v2821
        %v3254 = vmul.f32 %v2823, %v2823
        %v3255 = vmul.f32 %v2827, %v2827
        %v3256 = vmul.f32 %v2829, %v2829
        %v3257 = vmul.f32 %v2831, %v2831
        %v3258 = vmul.f32 %v2833, %v2833
        %v3259 = vmul.f32 %v2837, %v2837
        %v3260 = vmul.f32 %v2839, %v2839
        %v3261 = vmul.f32 %v2841, %v2841
        %v3262 = vmul.f32 %v2843, %v2843
        %v3263 = vmul.f32 %v2847, %v2847
        %v3264 = vmul.f32 %v2849, %v2849
        %v3265 = vmul.f32 %v2851, %v2851
        %v3266 = vmul.f32 %v2853, %v2853
        %v3267 = vmul.f32 %v2857, %v2857
        %v3268 = vmul.f32 %v2859, %v2859
        %v3269 = vmul.f32 %v2861, %v2861
        %v3270 = vmul.f32 %v2863, %v2863
        %v3271 = vmul.f32 %v2867, %v2867
        %v3272 = vmul.f32 %v2869, %v2869
        %v3273 = vmul.f32 %v2871, %v2871
        %v3274 = vmul.f32 %v2873, %v2873
        %v3275 = vmul.f32 %v2877, %v2877
        %v3276 = vmul.f32 %v2879, %v2879
        %v3277 = vmul.f32 %v2881, %v2881
        %v3278 = vmul.f32 %v2883, %v2883
        %v3279 = vmul.f32 %v2887, %v2887
        %v3280 = vmul.f32 %v2889, %v2889
        %v3281 = vmul.f32 %v2891, %v2891
        %v3282 = vmul.f32 %v2893, %v2893
        %v3283 = vmul.f32 %v2897, %v2897
        %v3284 = vmul.f32 %v2899, %v2899
        %v3285 = vmul.f32 %v2901, %v2901
        %v3286 = vmul.f32 %v2903, %v2903
        %v3287 = vmul.f32 %v2907, %v2907
        %v3288 = vmul.f32 %v2909, %v2909
        %v3289 = vmul.f32 %v2911, %v2911
        %v3290 = vmul.f32 %v2913, %v2913
        %v3291 = vmul.f32 %v2917, %v2917
        %v3292 = vmul.f32 %v2919, %v2919
        %v3293 = vmul.f32 %v2921, %v2921
        %v3294 = vmul.f32 %v2923, %v2923
        %v3295 = vmul.f32 %v2927, %v2927
        %v3296 = vmul.f32 %v2929, %v2929
        %v3297 = vmul.f32 %v2931, %v2931
        %v3298 = vmul.f32 %v2933, %v2933
        %v3299 = vmul.f32 %v2937, %v2937
        %v3300 = vmul.f32 %v2939, %v2939
        %v3301 = vmul.f32 %v2941, %v2941
        %v3302 = vmul.f32 %v2943, %v2943
        %v3303 = vmul.f32 %v2947, %v2947
        %v3304 = vmul.f32 %v2949, %v2949
        %v3305 = vmul.f32 %v2951, %v2951
        %v3306 = vmul.f32 %v2953, %v2953
        %v3307 = vadd.f32 %v3179, %v3181
        %v3308 = vadd.f32 %v3307, %v3183
        %v3309 = vadd.f32 %v3308, %v3185
        %v3310 = vadd.f32 %v3309, %v3187
        %v3311 = vadd.f32 %v3310, %v3189
        %v3312 = vadd.f32 %v3311, %v3191
        %v3313 = vadd.f32 %v3312, %v3193
        %v3314 = vrot.slane %v3313, 4
        %v3315 = vadd.f32 %v3313, %v3314
        %v3316 = vrot.slane %v3315, 2
        %v3317 = vadd.f32 %v3315, %v3316
        %v3318 = vrot.slane %v3317, 1
        %v3319 = vadd.f32 %v3317, %v3318
        %v3320 = vadd.f32 %v3180, %v3182
        %v3321 = vadd.f32 %v3320, %v3184
        %v3322 = vadd.f32 %v3321, %v3186
        %v3323 = vadd.f32 %v3322, %v3188
        %v3324 = vadd.f32 %v3323, %v3190
        %v3325 = vadd.f32 %v3324, %v3192
        %v3326 = vadd.f32 %v3325, %v3194
        %v3327 = vrot.slane %v3326, 4
        %v3328 = vadd.f32 %v3326, %v3327
        %v3329 = vrot.slane %v3328, 2
        %v3330 = vadd.f32 %v3328, %v3329
        %v3331 = vrot.slane %v3330, 1
        %v3332 = vadd.f32 %v3330, %v3331
        %v3333 = vadd.f32 %v3195, %v3197
        %v3334 = vadd.f32 %v3333, %v3199
        %v3335 = vadd.f32 %v3334, %v3201
        %v3336 = vadd.f32 %v3335, %v3203
        %v3337 = vadd.f32 %v3336, %v3205
        %v3338 = vadd.f32 %v3337, %v3207
        %v3339 = vadd.f32 %v3338, %v3209
        %v3340 = vrot.slane %v3339, 4
        %v3341 = vadd.f32 %v3339, %v3340
        %v3342 = vrot.slane %v3341, 2
        %v3343 = vadd.f32 %v3341, %v3342
        %v3344 = vrot.slane %v3343, 1
        %v3345 = vadd.f32 %v3343, %v3344
        %v3346 = vadd.f32 %v3196, %v3198
        %v3347 = vadd.f32 %v3346, %v3200
        %v3348 = vadd.f32 %v3347, %v3202
        %v3349 = vadd.f32 %v3348, %v3204
        %v3350 = vadd.f32 %v3349, %v3206
        %v3351 = vadd.f32 %v3350, %v3208
        %v3352 = vadd.f32 %v3351, %v3210
        %v3353 = vrot.slane %v3352, 4
        %v3354 = vadd.f32 %v3352, %v3353
        %v3355 = vrot.slane %v3354, 2
        %v3356 = vadd.f32 %v3354, %v3355
        %v3357 = vrot.slane %v3356, 1
        %v3358 = vadd.f32 %v3356, %v3357
        %v3359 = vadd.f32 %v3211, %v3213
        %v3360 = vadd.f32 %v3359, %v3215
        %v3361 = vadd.f32 %v3360, %v3217
        %v3362 = vadd.f32 %v3361, %v3219
        %v3363 = vadd.f32 %v3362, %v3221
        %v3364 = vadd.f32 %v3363, %v3223
        %v3365 = vadd.f32 %v3364, %v3225
        %v3366 = vrot.slane %v3365, 4
        %v3367 = vadd.f32 %v3365, %v3366
        %v3368 = vrot.slane %v3367, 2
        %v3369 = vadd.f32 %v3367, %v3368
        %v3370 = vrot.slane %v3369, 1
        %v3371 = vadd.f32 %v3369, %v3370
        %v3372 = vadd.f32 %v3212, %v3214
        %v3373 = vadd.f32 %v3372, %v3216
        %v3374 = vadd.f32 %v3373, %v3218
        %v3375 = vadd.f32 %v3374, %v3220
        %v3376 = vadd.f32 %v3375, %v3222
        %v3377 = vadd.f32 %v3376, %v3224
        %v3378 = vadd.f32 %v3377, %v3226
        %v3379 = vrot.slane %v3378, 4
        %v3380 = vadd.f32 %v3378, %v3379
        %v3381 = vrot.slane %v3380, 2
        %v3382 = vadd.f32 %v3380, %v3381
        %v3383 = vrot.slane %v3382, 1
        %v3384 = vadd.f32 %v3382, %v3383
        %v3385 = vadd.f32 %v3227, %v3229
        %v3386 = vadd.f32 %v3385, %v3231
        %v3387 = vadd.f32 %v3386, %v3233
        %v3388 = vadd.f32 %v3387, %v3235
        %v3389 = vadd.f32 %v3388, %v3237
        %v3390 = vadd.f32 %v3389, %v3239
        %v3391 = vadd.f32 %v3390, %v3241
        %v3392 = vrot.slane %v3391, 4
        %v3393 = vadd.f32 %v3391, %v3392
        %v3394 = vrot.slane %v3393, 2
        %v3395 = vadd.f32 %v3393, %v3394
        %v3396 = vrot.slane %v3395, 1
        %v3397 = vadd.f32 %v3395, %v3396
        %v3398 = vadd.f32 %v3228, %v3230
        %v3399 = vadd.f32 %v3398, %v3232
        %v3400 = vadd.f32 %v3399, %v3234
        %v3401 = vadd.f32 %v3400, %v3236
        %v3402 = vadd.f32 %v3401, %v3238
        %v3403 = vadd.f32 %v3402, %v3240
        %v3404 = vadd.f32 %v3403, %v3242
        %v3405 = vrot.slane %v3404, 4
        %v3406 = vadd.f32 %v3404, %v3405
        %v3407 = vrot.slane %v3406, 2
        %v3408 = vadd.f32 %v3406, %v3407
        %v3409 = vrot.slane %v3408, 1
        %v3410 = vadd.f32 %v3408, %v3409
        %v3411 = vadd.f32 %v3243, %v3245
        %v3412 = vadd.f32 %v3411, %v3247
        %v3413 = vadd.f32 %v3412, %v3249
        %v3414 = vadd.f32 %v3413, %v3251
        %v3415 = vadd.f32 %v3414, %v3253
        %v3416 = vadd.f32 %v3415, %v3255
        %v3417 = vadd.f32 %v3416, %v3257
        %v3418 = vrot.slane %v3417, 4
        %v3419 = vadd.f32 %v3417, %v3418
        %v3420 = vrot.slane %v3419, 2
        %v3421 = vadd.f32 %v3419, %v3420
        %v3422 = vrot.slane %v3421, 1
        %v3423 = vadd.f32 %v3421, %v3422
        %v3424 = vadd.f32 %v3244, %v3246
        %v3425 = vadd.f32 %v3424, %v3248
        %v3426 = vadd.f32 %v3425, %v3250
        %v3427 = vadd.f32 %v3426, %v3252
        %v3428 = vadd.f32 %v3427, %v3254
        %v3429 = vadd.f32 %v3428, %v3256
        %v3430 = vadd.f32 %v3429, %v3258
        %v3431 = vrot.slane %v3430, 4
        %v3432 = vadd.f32 %v3430, %v3431
        %v3433 = vrot.slane %v3432, 2
        %v3434 = vadd.f32 %v3432, %v3433
        %v3435 = vrot.slane %v3434, 1
        %v3436 = vadd.f32 %v3434, %v3435
        %v3437 = vadd.f32 %v3259, %v3261
        %v3438 = vadd.f32 %v3437, %v3263
        %v3439 = vadd.f32 %v3438, %v3265
        %v3440 = vadd.f32 %v3439, %v3267
        %v3441 = vadd.f32 %v3440, %v3269
        %v3442 = vadd.f32 %v3441, %v3271
        %v3443 = vadd.f32 %v3442, %v3273
        %v3444 = vrot.slane %v3443, 4
        %v3445 = vadd.f32 %v3443, %v3444
        %v3446 = vrot.slane %v3445, 2
        %v3447 = vadd.f32 %v3445, %v3446
        %v3448 = vrot.slane %v3447, 1
        %v3449 = vadd.f32 %v3447, %v3448
        %v3450 = vadd.f32 %v3260, %v3262
        %v3451 = vadd.f32 %v3450, %v3264
        %v3452 = vadd.f32 %v3451, %v3266
        %v3453 = vadd.f32 %v3452, %v3268
        %v3454 = vadd.f32 %v3453, %v3270
        %v3455 = vadd.f32 %v3454, %v3272
        %v3456 = vadd.f32 %v3455, %v3274
        %v3457 = vrot.slane %v3456, 4
        %v3458 = vadd.f32 %v3456, %v3457
        %v3459 = vrot.slane %v3458, 2
        %v3460 = vadd.f32 %v3458, %v3459
        %v3461 = vrot.slane %v3460, 1
        %v3462 = vadd.f32 %v3460, %v3461
        %v3463 = vadd.f32 %v3275, %v3277
        %v3464 = vadd.f32 %v3463, %v3279
        %v3465 = vadd.f32 %v3464, %v3281
        %v3466 = vadd.f32 %v3465, %v3283
        %v3467 = vadd.f32 %v3466, %v3285
        %v3468 = vadd.f32 %v3467, %v3287
        %v3469 = vadd.f32 %v3468, %v3289
        %v3470 = vrot.slane %v3469, 4
        %v3471 = vadd.f32 %v3469, %v3470
        %v3472 = vrot.slane %v3471, 2
        %v3473 = vadd.f32 %v3471, %v3472
        %v3474 = vrot.slane %v3473, 1
        %v3475 = vadd.f32 %v3473, %v3474
        %v3476 = vadd.f32 %v3276, %v3278
        %v3477 = vadd.f32 %v3476, %v3280
        %v3478 = vadd.f32 %v3477, %v3282
        %v3479 = vadd.f32 %v3478, %v3284
        %v3480 = vadd.f32 %v3479, %v3286
        %v3481 = vadd.f32 %v3480, %v3288
        %v3482 = vadd.f32 %v3481, %v3290
        %v3483 = vrot.slane %v3482, 4
        %v3484 = vadd.f32 %v3482, %v3483
        %v3485 = vrot.slane %v3484, 2
        %v3486 = vadd.f32 %v3484, %v3485
        %v3487 = vrot.slane %v3486, 1
        %v3488 = vadd.f32 %v3486, %v3487
        %v3489 = vadd.f32 %v3291, %v3293
        %v3490 = vadd.f32 %v3489, %v3295
        %v3491 = vadd.f32 %v3490, %v3297
        %v3492 = vadd.f32 %v3491, %v3299
        %v3493 = vadd.f32 %v3492, %v3301
        %v3494 = vadd.f32 %v3493, %v3303
        %v3495 = vadd.f32 %v3494, %v3305
        %v3496 = vrot.slane %v3495, 4
        %v3497 = vadd.f32 %v3495, %v3496
        %v3498 = vrot.slane %v3497, 2
        %v3499 = vadd.f32 %v3497, %v3498
        %v3500 = vrot.slane %v3499, 1
        %v3501 = vadd.f32 %v3499, %v3500
        %v3502 = vadd.f32 %v3292, %v3294
        %v3503 = vadd.f32 %v3502, %v3296
        %v3504 = vadd.f32 %v3503, %v3298
        %v3505 = vadd.f32 %v3504, %v3300
        %v3506 = vadd.f32 %v3505, %v3302
        %v3507 = vadd.f32 %v3506, %v3304
        %v3508 = vadd.f32 %v3507, %v3306
        %v3509 = vrot.slane %v3508, 4
        %v3510 = vadd.f32 %v3508, %v3509
        %v3511 = vrot.slane %v3510, 2
        %v3512 = vadd.f32 %v3510, %v3511
        %v3513 = vrot.slane %v3512, 1
        %v3514 = vadd.f32 %v3512, %v3513
        %v3515 = vmul.f32 %v3319, %v715
        %v3516 = vmul.f32 %v3332, %v715
        %v3517 = vmul.f32 %v3345, %v715
        %v3518 = vmul.f32 %v3358, %v715
        %v3519 = vmul.f32 %v3371, %v715
        %v3520 = vmul.f32 %v3384, %v715
        %v3521 = vmul.f32 %v3397, %v715
        %v3522 = vmul.f32 %v3410, %v715
        %v3523 = vmul.f32 %v3423, %v715
        %v3524 = vmul.f32 %v3436, %v715
        %v3525 = vmul.f32 %v3449, %v715
        %v3526 = vmul.f32 %v3462, %v715
        %v3527 = vmul.f32 %v3475, %v715
        %v3528 = vmul.f32 %v3488, %v715
        %v3529 = vmul.f32 %v3501, %v715
        %v3530 = vmul.f32 %v3514, %v715
        %v3531 = vmul.f32 %v3163, %v3163
        %v3532 = vmul.f32 %v3164, %v3164
        %v3533 = vmul.f32 %v3165, %v3165
        %v3534 = vmul.f32 %v3166, %v3166
        %v3535 = vmul.f32 %v3167, %v3167
        %v3536 = vmul.f32 %v3168, %v3168
        %v3537 = vmul.f32 %v3169, %v3169
        %v3538 = vmul.f32 %v3170, %v3170
        %v3539 = vmul.f32 %v3171, %v3171
        %v3540 = vmul.f32 %v3172, %v3172
        %v3541 = vmul.f32 %v3173, %v3173
        %v3542 = vmul.f32 %v3174, %v3174
        %v3543 = vmul.f32 %v3175, %v3175
        %v3544 = vmul.f32 %v3176, %v3176
        %v3545 = vmul.f32 %v3177, %v3177
        %v3546 = vmul.f32 %v3178, %v3178
        %v3547 = vsub.f32 %v3515, %v3531
        %v3548 = vsub.f32 %v3516, %v3532
        %v3549 = vsub.f32 %v3517, %v3533
        %v3550 = vsub.f32 %v3518, %v3534
        %v3551 = vsub.f32 %v3519, %v3535
        %v3552 = vsub.f32 %v3520, %v3536
        %v3553 = vsub.f32 %v3521, %v3537
        %v3554 = vsub.f32 %v3522, %v3538
        %v3555 = vsub.f32 %v3523, %v3539
        %v3556 = vsub.f32 %v3524, %v3540
        %v3557 = vsub.f32 %v3525, %v3541
        %v3558 = vsub.f32 %v3526, %v3542
        %v3559 = vsub.f32 %v3527, %v3543
        %v3560 = vsub.f32 %v3528, %v3544
        %v3561 = vsub.f32 %v3529, %v3545
        %v3562 = vsub.f32 %v3530, %v3546
        %v3563 = vmax.f32 %v3547, 0.0
        %v3564 = vmax.f32 %v3548, 0.0
        %v3565 = vmax.f32 %v3549, 0.0
        %v3566 = vmax.f32 %v3550, 0.0
        %v3567 = vmax.f32 %v3551, 0.0
        %v3568 = vmax.f32 %v3552, 0.0
        %v3569 = vmax.f32 %v3553, 0.0
        %v3570 = vmax.f32 %v3554, 0.0
        %v3571 = vmax.f32 %v3555, 0.0
        %v3572 = vmax.f32 %v3556, 0.0
        %v3573 = vmax.f32 %v3557, 0.0
        %v3574 = vmax.f32 %v3558, 0.0
        %v3575 = vmax.f32 %v3559, 0.0
        %v3576 = vmax.f32 %v3560, 0.0
        %v3577 = vmax.f32 %v3561, 0.0
        %v3578 = vmax.f32 %v3562, 0.0
        %v3579 = vld [vmem:[%s8] ss:$2 sm:$0x3]
        %v3580 = vadd.f32 %v3563, 1e-05
        %v3581 = vadd.f32 %v3564, 1e-05
        %v3582 = vadd.f32 %v3565, 1e-05
        %v3583 = vadd.f32 %v3566, 1e-05
        %v3584 = vadd.f32 %v3567, 1e-05
        %v3585 = vadd.f32 %v3568, 1e-05
        %v3586 = vadd.f32 %v3569, 1e-05
        %v3587 = vadd.f32 %v3570, 1e-05
        %v3588 = vadd.f32 %v3571, 1e-05
        %v3589 = vadd.f32 %v3572, 1e-05
        %v3590 = vadd.f32 %v3573, 1e-05
        %v3591 = vadd.f32 %v3574, 1e-05
        %v3592 = vadd.f32 %v3575, 1e-05
        %v3593 = vadd.f32 %v3576, 1e-05
        %v3594 = vadd.f32 %v3577, 1e-05
        %v3595 = vadd.f32 %v3578, 1e-05
        %v3596 = vrsqrt.pop %v3580
        %v3597 = vrsqrt.pop %v3581
        %v3598 = vrsqrt.pop %v3582
        %v3599 = vrsqrt.pop %v3583
        %v3600 = vrsqrt.pop %v3584
        %v3601 = vrsqrt.pop %v3585
        %v3602 = vrsqrt.pop %v3586
        %v3603 = vrsqrt.pop %v3587
        %v3604 = vrsqrt.pop %v3588
        %v3605 = vrsqrt.pop %v3589
        %v3606 = vrsqrt.pop %v3590
        %v3607 = vrsqrt.pop %v3591
        %v3608 = vrsqrt.pop %v3592
        %v3609 = vrsqrt.pop %v3593
        %v3610 = vrsqrt.pop %v3594
        %v3611 = vrsqrt.pop %v3595
        %v3628 = vcombine.low %v3596, %v3597
        %v3630 = vunpack.c.l.s4 1966171168
        %v3631 = vunpack.c.0.s8 %v3630
        %v3632 = vlaneseq
        %v3633 = vshrl.u32 %v3632, 7
        %v3634 = vsub.s32 %v3631, %v3633
        %v3635 = vrot.slane %v3628, %v3634
        %v3637 = vunpack.c.l.s4 1966171168
        %v3638 = vunpack.c.0.s8 %v3637
        %v3639 = vlaneseq
        %v3640 = vshrl.u32 %v3639, 7
        %v3641 = vsub.s32 %v3638, %v3640
        %v3642 = vrot.slane %v3635, %v3641
        %v3643 = vcombine.low %v3598, %v3599
        %v3645 = vunpack.c.l.s4 1966171168
        %v3646 = vunpack.c.0.s8 %v3645
        %v3647 = vlaneseq
        %v3648 = vshrl.u32 %v3647, 7
        %v3649 = vsub.s32 %v3646, %v3648
        %v3650 = vrot.slane %v3643, %v3649
        %v3652 = vunpack.c.l.s4 1966171168
        %v3653 = vunpack.c.0.s8 %v3652
        %v3654 = vlaneseq
        %v3655 = vshrl.u32 %v3654, 7
        %v3656 = vsub.s32 %v3653, %v3655
        %v3657 = vrot.slane %v3650, %v3656
        %v3658 = vcombine.low %v3600, %v3601
        %v3660 = vunpack.c.l.s4 1966171168
        %v3661 = vunpack.c.0.s8 %v3660
        %v3662 = vlaneseq
        %v3663 = vshrl.u32 %v3662, 7
        %v3664 = vsub.s32 %v3661, %v3663
        %v3665 = vrot.slane %v3658, %v3664
        %v3667 = vunpack.c.l.s4 1966171168
        %v3668 = vunpack.c.0.s8 %v3667
        %v3669 = vlaneseq
        %v3670 = vshrl.u32 %v3669, 7
        %v3671 = vsub.s32 %v3668, %v3670
        %v3672 = vrot.slane %v3665, %v3671
        %v3673 = vcombine.low %v3602, %v3603
        %v3675 = vunpack.c.l.s4 1966171168
        %v3676 = vunpack.c.0.s8 %v3675
        %v3677 = vlaneseq
        %v3678 = vshrl.u32 %v3677, 7
        %v3679 = vsub.s32 %v3676, %v3678
        %v3680 = vrot.slane %v3673, %v3679
        %v3682 = vunpack.c.l.s4 1966171168
        %v3683 = vunpack.c.0.s8 %v3682
        %v3684 = vlaneseq
        %v3685 = vshrl.u32 %v3684, 7
        %v3686 = vsub.s32 %v3683, %v3685
        %v3687 = vrot.slane %v3680, %v3686
        %v3688 = vcombine.low %v3604, %v3605
        %v3690 = vunpack.c.l.s4 1966171168
        %v3691 = vunpack.c.0.s8 %v3690
        %v3692 = vlaneseq
        %v3693 = vshrl.u32 %v3692, 7
        %v3694 = vsub.s32 %v3691, %v3693
        %v3695 = vrot.slane %v3688, %v3694
        %v3697 = vunpack.c.l.s4 1966171168
        %v3698 = vunpack.c.0.s8 %v3697
        %v3699 = vlaneseq
        %v3700 = vshrl.u32 %v3699, 7
        %v3701 = vsub.s32 %v3698, %v3700
        %v3702 = vrot.slane %v3695, %v3701
        %v3703 = vcombine.low %v3606, %v3607
        %v3705 = vunpack.c.l.s4 1966171168
        %v3706 = vunpack.c.0.s8 %v3705
        %v3707 = vlaneseq
        %v3708 = vshrl.u32 %v3707, 7
        %v3709 = vsub.s32 %v3706, %v3708
        %v3710 = vrot.slane %v3703, %v3709
        %v3712 = vunpack.c.l.s4 1966171168
        %v3713 = vunpack.c.0.s8 %v3712
        %v3714 = vlaneseq
        %v3715 = vshrl.u32 %v3714, 7
        %v3716 = vsub.s32 %v3713, %v3715
        %v3717 = vrot.slane %v3710, %v3716
        %v3718 = vcombine.low %v3608, %v3609
        %v3720 = vunpack.c.l.s4 1966171168
        %v3721 = vunpack.c.0.s8 %v3720
        %v3722 = vlaneseq
        %v3723 = vshrl.u32 %v3722, 7
        %v3724 = vsub.s32 %v3721, %v3723
        %v3725 = vrot.slane %v3718, %v3724
        %v3727 = vunpack.c.l.s4 1966171168
        %v3728 = vunpack.c.0.s8 %v3727
        %v3729 = vlaneseq
        %v3730 = vshrl.u32 %v3729, 7
        %v3731 = vsub.s32 %v3728, %v3730
        %v3732 = vrot.slane %v3725, %v3731
        %v3733 = vcombine.low %v3610, %v3611
        %v3735 = vunpack.c.l.s4 1966171168
        %v3736 = vunpack.c.0.s8 %v3735
        %v3737 = vlaneseq
        %v3738 = vshrl.u32 %v3737, 7
        %v3739 = vsub.s32 %v3736, %v3738
        %v3740 = vrot.slane %v3733, %v3739
        %v3742 = vunpack.c.l.s4 1966171168
        %v3743 = vunpack.c.0.s8 %v3742
        %v3744 = vlaneseq
        %v3745 = vshrl.u32 %v3744, 7
        %v3746 = vsub.s32 %v3743, %v3745
        %v3747 = vrot.slane %v3740, %v3746
        %v3756 = vmul.f32 %v3579, %v3642
        %v3757 = vmul.f32 %v3579, %v3657
        %v3758 = vmul.f32 %v3579, %v3672
        %v3759 = vmul.f32 %v3579, %v3687
        %v3760 = vmul.f32 %v3579, %v3702
        %v3761 = vmul.f32 %v3579, %v3717
        %v3762 = vmul.f32 %v3579, %v3732
        %v3763 = vmul.f32 %v3579, %v3747
        %s3764 = scalar_lea.vmem %s8, 1
        %v3765 = vld [vmem:[%s3764] ss:$2 sm:$0x3]
        %v3774 = vlaneseq
        %v3775 = vshrl.u32 %v3774, 7
        %v3776 = vsub.s32 0, %v3775
        %v3777 = vrot.slane %v3756, %v3776
        %v3778 = vlaneseq
        %v3779 = vshrl.u32 %v3778, 7
        %v3780 = vsub.s32 1, %v3779
        %v3781 = vrot.slane %v3756, %v3780
        %v3782 = vlaneseq
        %v3783 = vshrl.u32 %v3782, 7
        %v3784 = vsub.s32 0, %v3783
        %v3785 = vrot.slane %v3757, %v3784
        %v3786 = vlaneseq
        %v3787 = vshrl.u32 %v3786, 7
        %v3788 = vsub.s32 1, %v3787
        %v3789 = vrot.slane %v3757, %v3788
        %v3790 = vlaneseq
        %v3791 = vshrl.u32 %v3790, 7
        %v3792 = vsub.s32 0, %v3791
        %v3793 = vrot.slane %v3758, %v3792
        %v3794 = vlaneseq
        %v3795 = vshrl.u32 %v3794, 7
        %v3796 = vsub.s32 1, %v3795
        %v3797 = vrot.slane %v3758, %v3796
        %v3798 = vlaneseq
        %v3799 = vshrl.u32 %v3798, 7
        %v3800 = vsub.s32 0, %v3799
        %v3801 = vrot.slane %v3759, %v3800
        %v3802 = vlaneseq
        %v3803 = vshrl.u32 %v3802, 7
        %v3804 = vsub.s32 1, %v3803
        %v3805 = vrot.slane %v3759, %v3804
        %v3806 = vlaneseq
        %v3807 = vshrl.u32 %v3806, 7
        %v3808 = vsub.s32 0, %v3807
        %v3809 = vrot.slane %v3760, %v3808
        %v3810 = vlaneseq
        %v3811 = vshrl.u32 %v3810, 7
        %v3812 = vsub.s32 1, %v3811
        %v3813 = vrot.slane %v3760, %v3812
        %v3814 = vlaneseq
        %v3815 = vshrl.u32 %v3814, 7
        %v3816 = vsub.s32 0, %v3815
        %v3817 = vrot.slane %v3761, %v3816
        %v3818 = vlaneseq
        %v3819 = vshrl.u32 %v3818, 7
        %v3820 = vsub.s32 1, %v3819
        %v3821 = vrot.slane %v3761, %v3820
        %v3822 = vlaneseq
        %v3823 = vshrl.u32 %v3822, 7
        %v3824 = vsub.s32 0, %v3823
        %v3825 = vrot.slane %v3762, %v3824
        %v3826 = vlaneseq
        %v3827 = vshrl.u32 %v3826, 7
        %v3828 = vsub.s32 1, %v3827
        %v3829 = vrot.slane %v3762, %v3828
        %v3830 = vlaneseq
        %v3831 = vshrl.u32 %v3830, 7
        %v3832 = vsub.s32 0, %v3831
        %v3833 = vrot.slane %v3763, %v3832
        %v3834 = vlaneseq
        %v3835 = vshrl.u32 %v3834, 7
        %v3836 = vsub.s32 1, %v3835
        %v3837 = vrot.slane %v3763, %v3836
        %v3854 = vmul.f32 %v3163, %v3777
        %v3855 = vmul.f32 %v3164, %v3781
        %v3856 = vmul.f32 %v3165, %v3785
        %v3857 = vmul.f32 %v3166, %v3789
        %v3858 = vmul.f32 %v3167, %v3793
        %v3859 = vmul.f32 %v3168, %v3797
        %v3860 = vmul.f32 %v3169, %v3801
        %v3861 = vmul.f32 %v3170, %v3805
        %v3862 = vmul.f32 %v3171, %v3809
        %v3863 = vmul.f32 %v3172, %v3813
        %v3864 = vmul.f32 %v3173, %v3817
        %v3865 = vmul.f32 %v3174, %v3821
        %v3866 = vmul.f32 %v3175, %v3825
        %v3867 = vmul.f32 %v3176, %v3829
        %v3868 = vmul.f32 %v3177, %v3833
        %v3869 = vmul.f32 %v3178, %v3837
        %v3886 = vcombine.low %v3854, %v3855
        %v3888 = vunpack.c.l.s4 1966171168
        %v3889 = vunpack.c.0.s8 %v3888
        %v3890 = vlaneseq
        %v3891 = vshrl.u32 %v3890, 7
        %v3892 = vsub.s32 %v3889, %v3891
        %v3893 = vrot.slane %v3886, %v3892
        %v3895 = vunpack.c.l.s4 1966171168
        %v3896 = vunpack.c.0.s8 %v3895
        %v3897 = vlaneseq
        %v3898 = vshrl.u32 %v3897, 7
        %v3899 = vsub.s32 %v3896, %v3898
        %v3900 = vrot.slane %v3893, %v3899
        %v3901 = vcombine.low %v3856, %v3857
        %v3903 = vunpack.c.l.s4 1966171168
        %v3904 = vunpack.c.0.s8 %v3903
        %v3905 = vlaneseq
        %v3906 = vshrl.u32 %v3905, 7
        %v3907 = vsub.s32 %v3904, %v3906
        %v3908 = vrot.slane %v3901, %v3907
        %v3910 = vunpack.c.l.s4 1966171168
        %v3911 = vunpack.c.0.s8 %v3910
        %v3912 = vlaneseq
        %v3913 = vshrl.u32 %v3912, 7
        %v3914 = vsub.s32 %v3911, %v3913
        %v3915 = vrot.slane %v3908, %v3914
        %v3916 = vcombine.low %v3858, %v3859
        %v3918 = vunpack.c.l.s4 1966171168
        %v3919 = vunpack.c.0.s8 %v3918
        %v3920 = vlaneseq
        %v3921 = vshrl.u32 %v3920, 7
        %v3922 = vsub.s32 %v3919, %v3921
        %v3923 = vrot.slane %v3916, %v3922
        %v3925 = vunpack.c.l.s4 1966171168
        %v3926 = vunpack.c.0.s8 %v3925
        %v3927 = vlaneseq
        %v3928 = vshrl.u32 %v3927, 7
        %v3929 = vsub.s32 %v3926, %v3928
        %v3930 = vrot.slane %v3923, %v3929
        %v3931 = vcombine.low %v3860, %v3861
        %v3933 = vunpack.c.l.s4 1966171168
        %v3934 = vunpack.c.0.s8 %v3933
        %v3935 = vlaneseq
        %v3936 = vshrl.u32 %v3935, 7
        %v3937 = vsub.s32 %v3934, %v3936
        %v3938 = vrot.slane %v3931, %v3937
        %v3940 = vunpack.c.l.s4 1966171168
        %v3941 = vunpack.c.0.s8 %v3940
        %v3942 = vlaneseq
        %v3943 = vshrl.u32 %v3942, 7
        %v3944 = vsub.s32 %v3941, %v3943
        %v3945 = vrot.slane %v3938, %v3944
        %v3946 = vcombine.low %v3862, %v3863
        %v3948 = vunpack.c.l.s4 1966171168
        %v3949 = vunpack.c.0.s8 %v3948
        %v3950 = vlaneseq
        %v3951 = vshrl.u32 %v3950, 7
        %v3952 = vsub.s32 %v3949, %v3951
        %v3953 = vrot.slane %v3946, %v3952
        %v3955 = vunpack.c.l.s4 1966171168
        %v3956 = vunpack.c.0.s8 %v3955
        %v3957 = vlaneseq
        %v3958 = vshrl.u32 %v3957, 7
        %v3959 = vsub.s32 %v3956, %v3958
        %v3960 = vrot.slane %v3953, %v3959
        %v3961 = vcombine.low %v3864, %v3865
        %v3963 = vunpack.c.l.s4 1966171168
        %v3964 = vunpack.c.0.s8 %v3963
        %v3965 = vlaneseq
        %v3966 = vshrl.u32 %v3965, 7
        %v3967 = vsub.s32 %v3964, %v3966
        %v3968 = vrot.slane %v3961, %v3967
        %v3970 = vunpack.c.l.s4 1966171168
        %v3971 = vunpack.c.0.s8 %v3970
        %v3972 = vlaneseq
        %v3973 = vshrl.u32 %v3972, 7
        %v3974 = vsub.s32 %v3971, %v3973
        %v3975 = vrot.slane %v3968, %v3974
        %v3976 = vcombine.low %v3866, %v3867
        %v3978 = vunpack.c.l.s4 1966171168
        %v3979 = vunpack.c.0.s8 %v3978
        %v3980 = vlaneseq
        %v3981 = vshrl.u32 %v3980, 7
        %v3982 = vsub.s32 %v3979, %v3981
        %v3983 = vrot.slane %v3976, %v3982
        %v3985 = vunpack.c.l.s4 1966171168
        %v3986 = vunpack.c.0.s8 %v3985
        %v3987 = vlaneseq
        %v3988 = vshrl.u32 %v3987, 7
        %v3989 = vsub.s32 %v3986, %v3988
        %v3990 = vrot.slane %v3983, %v3989
        %v3991 = vcombine.low %v3868, %v3869
        %v3993 = vunpack.c.l.s4 1966171168
        %v3994 = vunpack.c.0.s8 %v3993
        %v3995 = vlaneseq
        %v3996 = vshrl.u32 %v3995, 7
        %v3997 = vsub.s32 %v3994, %v3996
        %v3998 = vrot.slane %v3991, %v3997
        %v4000 = vunpack.c.l.s4 1966171168
        %v4001 = vunpack.c.0.s8 %v4000
        %v4002 = vlaneseq
        %v4003 = vshrl.u32 %v4002, 7
        %v4004 = vsub.s32 %v4001, %v4003
        %v4005 = vrot.slane %v3998, %v4004
        %v4014 = vsub.f32 %v3765, %v3900
        %v4015 = vsub.f32 %v3765, %v3915
        %v4016 = vsub.f32 %v3765, %v3930
        %v4017 = vsub.f32 %v3765, %v3945
        %v4018 = vsub.f32 %v3765, %v3960
        %v4019 = vsub.f32 %v3765, %v3975
        %v4020 = vsub.f32 %v3765, %v3990
        %v4021 = vsub.f32 %v3765, %v4005
        %v4022 = vmul.f32 %v2637, %v3777
        %v4023 = vmul.f32 %v2639, %v3781
        %v4024 = vmul.f32 %v2641, %v3777
        %v4025 = vmul.f32 %v2643, %v3781
        %v4026 = vmul.f32 %v2647, %v3777
        %v4027 = vmul.f32 %v2649, %v3781
        %v4028 = vmul.f32 %v2651, %v3777
        %v4029 = vmul.f32 %v2653, %v3781
        %v4030 = vmul.f32 %v2657, %v3777
        %v4031 = vmul.f32 %v2659, %v3781
        %v4032 = vmul.f32 %v2661, %v3777
        %v4033 = vmul.f32 %v2663, %v3781
        %v4034 = vmul.f32 %v2667, %v3777
        %v4035 = vmul.f32 %v2669, %v3781
        %v4036 = vmul.f32 %v2671, %v3777
        %v4037 = vmul.f32 %v2673, %v3781
        %v4038 = vmul.f32 %v2677, %v3785
        %v4039 = vmul.f32 %v2679, %v3789
        %v4040 = vmul.f32 %v2681, %v3785
        %v4041 = vmul.f32 %v2683, %v3789
        %v4042 = vmul.f32 %v2687, %v3785
        %v4043 = vmul.f32 %v2689, %v3789
        %v4044 = vmul.f32 %v2691, %v3785
        %v4045 = vmul.f32 %v2693, %v3789
        %v4046 = vmul.f32 %v2697, %v3785
        %v4047 = vmul.f32 %v2699, %v3789
        %v4048 = vmul.f32 %v2701, %v3785
        %v4049 = vmul.f32 %v2703, %v3789
        %v4050 = vmul.f32 %v2707, %v3785
        %v4051 = vmul.f32 %v2709, %v3789
        %v4052 = vmul.f32 %v2711, %v3785
        %v4053 = vmul.f32 %v2713, %v3789
        %v4054 = vmul.f32 %v2717, %v3793
        %v4055 = vmul.f32 %v2719, %v3797
        %v4056 = vmul.f32 %v2721, %v3793
        %v4057 = vmul.f32 %v2723, %v3797
        %v4058 = vmul.f32 %v2727, %v3793
        %v4059 = vmul.f32 %v2729, %v3797
        %v4060 = vmul.f32 %v2731, %v3793
        %v4061 = vmul.f32 %v2733, %v3797
        %v4062 = vmul.f32 %v2737, %v3793
        %v4063 = vmul.f32 %v2739, %v3797
        %v4064 = vmul.f32 %v2741, %v3793
        %v4065 = vmul.f32 %v2743, %v3797
        %v4066 = vmul.f32 %v2747, %v3793
        %v4067 = vmul.f32 %v2749, %v3797
        %v4068 = vmul.f32 %v2751, %v3793
        %v4069 = vmul.f32 %v2753, %v3797
        %v4070 = vmul.f32 %v2757, %v3801
        %v4071 = vmul.f32 %v2759, %v3805
        %v4072 = vmul.f32 %v2761, %v3801
        %v4073 = vmul.f32 %v2763, %v3805
        %v4074 = vmul.f32 %v2767, %v3801
        %v4075 = vmul.f32 %v2769, %v3805
        %v4076 = vmul.f32 %v2771, %v3801
        %v4077 = vmul.f32 %v2773, %v3805
        %v4078 = vmul.f32 %v2777, %v3801
        %v4079 = vmul.f32 %v2779, %v3805
        %v4080 = vmul.f32 %v2781, %v3801
        %v4081 = vmul.f32 %v2783, %v3805
        %v4082 = vmul.f32 %v2787, %v3801
        %v4083 = vmul.f32 %v2789, %v3805
        %v4084 = vmul.f32 %v2791, %v3801
        %v4085 = vmul.f32 %v2793, %v3805
        %v4086 = vmul.f32 %v2797, %v3809
        %v4087 = vmul.f32 %v2799, %v3813
        %v4088 = vmul.f32 %v2801, %v3809
        %v4089 = vmul.f32 %v2803, %v3813
        %v4090 = vmul.f32 %v2807, %v3809
        %v4091 = vmul.f32 %v2809, %v3813
        %v4092 = vmul.f32 %v2811, %v3809
        %v4093 = vmul.f32 %v2813, %v3813
        %v4094 = vmul.f32 %v2817, %v3809
        %v4095 = vmul.f32 %v2819, %v3813
        %v4096 = vmul.f32 %v2821, %v3809
        %v4097 = vmul.f32 %v2823, %v3813
        %v4098 = vmul.f32 %v2827, %v3809
        %v4099 = vmul.f32 %v2829, %v3813
        %v4100 = vmul.f32 %v2831, %v3809
        %v4101 = vmul.f32 %v2833, %v3813
        %v4102 = vmul.f32 %v2837, %v3817
        %v4103 = vmul.f32 %v2839, %v3821
        %v4104 = vmul.f32 %v2841, %v3817
        %v4105 = vmul.f32 %v2843, %v3821
        %v4106 = vmul.f32 %v2847, %v3817
        %v4107 = vmul.f32 %v2849, %v3821
        %v4108 = vmul.f32 %v2851, %v3817
        %v4109 = vmul.f32 %v2853, %v3821
        %v4110 = vmul.f32 %v2857, %v3817
        %v4111 = vmul.f32 %v2859, %v3821
        %v4112 = vmul.f32 %v2861, %v3817
        %v4113 = vmul.f32 %v2863, %v3821
        %v4114 = vmul.f32 %v2867, %v3817
        %v4115 = vmul.f32 %v2869, %v3821
        %v4116 = vmul.f32 %v2871, %v3817
        %v4117 = vmul.f32 %v2873, %v3821
        %v4118 = vmul.f32 %v2877, %v3825
        %v4119 = vmul.f32 %v2879, %v3829
        %v4120 = vmul.f32 %v2881, %v3825
        %v4121 = vmul.f32 %v2883, %v3829
        %v4122 = vmul.f32 %v2887, %v3825
        %v4123 = vmul.f32 %v2889, %v3829
        %v4124 = vmul.f32 %v2891, %v3825
        %v4125 = vmul.f32 %v2893, %v3829
        %v4126 = vmul.f32 %v2897, %v3825
        %v4127 = vmul.f32 %v2899, %v3829
        %v4128 = vmul.f32 %v2901, %v3825
        %v4129 = vmul.f32 %v2903, %v3829
        %v4130 = vmul.f32 %v2907, %v3825
        %v4131 = vmul.f32 %v2909, %v3829
        %v4132 = vmul.f32 %v2911, %v3825
        %v4133 = vmul.f32 %v2913, %v3829
        %v4134 = vmul.f32 %v2917, %v3833
        %v4135 = vmul.f32 %v2919, %v3837
        %v4136 = vmul.f32 %v2921, %v3833
        %v4137 = vmul.f32 %v2923, %v3837
        %v4138 = vmul.f32 %v2927, %v3833
        %v4139 = vmul.f32 %v2929, %v3837
        %v4140 = vmul.f32 %v2931, %v3833
        %v4141 = vmul.f32 %v2933, %v3837
        %v4142 = vmul.f32 %v2937, %v3833
        %v4143 = vmul.f32 %v2939, %v3837
        %v4144 = vmul.f32 %v2941, %v3833
        %v4145 = vmul.f32 %v2943, %v3837
        %v4146 = vmul.f32 %v2947, %v3833
        %v4147 = vmul.f32 %v2949, %v3837
        %v4148 = vmul.f32 %v2951, %v3833
        %v4149 = vmul.f32 %v2953, %v3837
        %v4158 = vlaneseq
        %v4159 = vshrl.u32 %v4158, 7
        %v4160 = vsub.s32 0, %v4159
        %v4161 = vrot.slane %v4014, %v4160
        %v4162 = vlaneseq
        %v4163 = vshrl.u32 %v4162, 7
        %v4164 = vsub.s32 1, %v4163
        %v4165 = vrot.slane %v4014, %v4164
        %v4166 = vlaneseq
        %v4167 = vshrl.u32 %v4166, 7
        %v4168 = vsub.s32 0, %v4167
        %v4169 = vrot.slane %v4015, %v4168
        %v4170 = vlaneseq
        %v4171 = vshrl.u32 %v4170, 7
        %v4172 = vsub.s32 1, %v4171
        %v4173 = vrot.slane %v4015, %v4172
        %v4174 = vlaneseq
        %v4175 = vshrl.u32 %v4174, 7
        %v4176 = vsub.s32 0, %v4175
        %v4177 = vrot.slane %v4016, %v4176
        %v4178 = vlaneseq
        %v4179 = vshrl.u32 %v4178, 7
        %v4180 = vsub.s32 1, %v4179
        %v4181 = vrot.slane %v4016, %v4180
        %v4182 = vlaneseq
        %v4183 = vshrl.u32 %v4182, 7
        %v4184 = vsub.s32 0, %v4183
        %v4185 = vrot.slane %v4017, %v4184
        %v4186 = vlaneseq
        %v4187 = vshrl.u32 %v4186, 7
        %v4188 = vsub.s32 1, %v4187
        %v4189 = vrot.slane %v4017, %v4188
        %v4190 = vlaneseq
        %v4191 = vshrl.u32 %v4190, 7
        %v4192 = vsub.s32 0, %v4191
        %v4193 = vrot.slane %v4018, %v4192
        %v4194 = vlaneseq
        %v4195 = vshrl.u32 %v4194, 7
        %v4196 = vsub.s32 1, %v4195
        %v4197 = vrot.slane %v4018, %v4196
        %v4198 = vlaneseq
        %v4199 = vshrl.u32 %v4198, 7
        %v4200 = vsub.s32 0, %v4199
        %v4201 = vrot.slane %v4019, %v4200
        %v4202 = vlaneseq
        %v4203 = vshrl.u32 %v4202, 7
        %v4204 = vsub.s32 1, %v4203
        %v4205 = vrot.slane %v4019, %v4204
        %v4206 = vlaneseq
        %v4207 = vshrl.u32 %v4206, 7
        %v4208 = vsub.s32 0, %v4207
        %v4209 = vrot.slane %v4020, %v4208
        %v4210 = vlaneseq
        %v4211 = vshrl.u32 %v4210, 7
        %v4212 = vsub.s32 1, %v4211
        %v4213 = vrot.slane %v4020, %v4212
        %v4214 = vlaneseq
        %v4215 = vshrl.u32 %v4214, 7
        %v4216 = vsub.s32 0, %v4215
        %v4217 = vrot.slane %v4021, %v4216
        %v4218 = vlaneseq
        %v4219 = vshrl.u32 %v4218, 7
        %v4220 = vsub.s32 1, %v4219
        %v4221 = vrot.slane %v4021, %v4220
        %v4238 = vadd.f32 %v4022, %v4161
        %v4239 = vadd.f32 %v4023, %v4165
        %v4240 = vadd.f32 %v4024, %v4161
        %v4241 = vadd.f32 %v4025, %v4165
        %v4242 = vadd.f32 %v4026, %v4161
        %v4243 = vadd.f32 %v4027, %v4165
        %v4244 = vadd.f32 %v4028, %v4161
        %v4245 = vadd.f32 %v4029, %v4165
        %v4246 = vadd.f32 %v4030, %v4161
        %v4247 = vadd.f32 %v4031, %v4165
        %v4248 = vadd.f32 %v4032, %v4161
        %v4249 = vadd.f32 %v4033, %v4165
        %v4250 = vadd.f32 %v4034, %v4161
        %v4251 = vadd.f32 %v4035, %v4165
        %v4252 = vadd.f32 %v4036, %v4161
        %v4253 = vadd.f32 %v4037, %v4165
        %v4254 = vadd.f32 %v4038, %v4169
        %v4255 = vadd.f32 %v4039, %v4173
        %v4256 = vadd.f32 %v4040, %v4169
        %v4257 = vadd.f32 %v4041, %v4173
        %v4258 = vadd.f32 %v4042, %v4169
        %v4259 = vadd.f32 %v4043, %v4173
        %v4260 = vadd.f32 %v4044, %v4169
        %v4261 = vadd.f32 %v4045, %v4173
        %v4262 = vadd.f32 %v4046, %v4169
        %v4263 = vadd.f32 %v4047, %v4173
        %v4264 = vadd.f32 %v4048, %v4169
        %v4265 = vadd.f32 %v4049, %v4173
        %v4266 = vadd.f32 %v4050, %v4169
        %v4267 = vadd.f32 %v4051, %v4173
        %v4268 = vadd.f32 %v4052, %v4169
        %v4269 = vadd.f32 %v4053, %v4173
        %v4270 = vadd.f32 %v4054, %v4177
        %v4271 = vadd.f32 %v4055, %v4181
        %v4272 = vadd.f32 %v4056, %v4177
        %v4273 = vadd.f32 %v4057, %v4181
        %v4274 = vadd.f32 %v4058, %v4177
        %v4275 = vadd.f32 %v4059, %v4181
        %v4276 = vadd.f32 %v4060, %v4177
        %v4277 = vadd.f32 %v4061, %v4181
        %v4278 = vadd.f32 %v4062, %v4177
        %v4279 = vadd.f32 %v4063, %v4181
        %v4280 = vadd.f32 %v4064, %v4177
        %v4281 = vadd.f32 %v4065, %v4181
        %v4282 = vadd.f32 %v4066, %v4177
        %v4283 = vadd.f32 %v4067, %v4181
        %v4284 = vadd.f32 %v4068, %v4177
        %v4285 = vadd.f32 %v4069, %v4181
        %v4286 = vadd.f32 %v4070, %v4185
        %v4287 = vadd.f32 %v4071, %v4189
        %v4288 = vadd.f32 %v4072, %v4185
        %v4289 = vadd.f32 %v4073, %v4189
        %v4290 = vadd.f32 %v4074, %v4185
        %v4291 = vadd.f32 %v4075, %v4189
        %v4292 = vadd.f32 %v4076, %v4185
        %v4293 = vadd.f32 %v4077, %v4189
        %v4294 = vadd.f32 %v4078, %v4185
        %v4295 = vadd.f32 %v4079, %v4189
        %v4296 = vadd.f32 %v4080, %v4185
        %v4297 = vadd.f32 %v4081, %v4189
        %v4298 = vadd.f32 %v4082, %v4185
        %v4299 = vadd.f32 %v4083, %v4189
        %v4300 = vadd.f32 %v4084, %v4185
        %v4301 = vadd.f32 %v4085, %v4189
        %v4302 = vadd.f32 %v4086, %v4193
        %v4303 = vadd.f32 %v4087, %v4197
        %v4304 = vadd.f32 %v4088, %v4193
        %v4305 = vadd.f32 %v4089, %v4197
        %v4306 = vadd.f32 %v4090, %v4193
        %v4307 = vadd.f32 %v4091, %v4197
        %v4308 = vadd.f32 %v4092, %v4193
        %v4309 = vadd.f32 %v4093, %v4197
        %v4310 = vadd.f32 %v4094, %v4193
        %v4311 = vadd.f32 %v4095, %v4197
        %v4312 = vadd.f32 %v4096, %v4193
        %v4313 = vadd.f32 %v4097, %v4197
        %v4314 = vadd.f32 %v4098, %v4193
        %v4315 = vadd.f32 %v4099, %v4197
        %v4316 = vadd.f32 %v4100, %v4193
        %v4317 = vadd.f32 %v4101, %v4197
        %v4318 = vadd.f32 %v4102, %v4201
        %v4319 = vadd.f32 %v4103, %v4205
        %v4320 = vadd.f32 %v4104, %v4201
        %v4321 = vadd.f32 %v4105, %v4205
        %v4322 = vadd.f32 %v4106, %v4201
        %v4323 = vadd.f32 %v4107, %v4205
        %v4324 = vadd.f32 %v4108, %v4201
        %v4325 = vadd.f32 %v4109, %v4205
        %v4326 = vadd.f32 %v4110, %v4201
        %v4327 = vadd.f32 %v4111, %v4205
        %v4328 = vadd.f32 %v4112, %v4201
        %v4329 = vadd.f32 %v4113, %v4205
        %v4330 = vadd.f32 %v4114, %v4201
        %v4331 = vadd.f32 %v4115, %v4205
        %v4332 = vadd.f32 %v4116, %v4201
        %v4333 = vadd.f32 %v4117, %v4205
        %v4334 = vadd.f32 %v4118, %v4209
        %v4335 = vadd.f32 %v4119, %v4213
        %v4336 = vadd.f32 %v4120, %v4209
        %v4337 = vadd.f32 %v4121, %v4213
        %v4338 = vadd.f32 %v4122, %v4209
        %v4339 = vadd.f32 %v4123, %v4213
        %v4340 = vadd.f32 %v4124, %v4209
        %v4341 = vadd.f32 %v4125, %v4213
        %v4342 = vadd.f32 %v4126, %v4209
        %v4343 = vadd.f32 %v4127, %v4213
        %v4344 = vadd.f32 %v4128, %v4209
        %v4345 = vadd.f32 %v4129, %v4213
        %v4346 = vadd.f32 %v4130, %v4209
        %v4347 = vadd.f32 %v4131, %v4213
        %v4348 = vadd.f32 %v4132, %v4209
        %v4349 = vadd.f32 %v4133, %v4213
        %v4350 = vadd.f32 %v4134, %v4217
        %v4351 = vadd.f32 %v4135, %v4221
        %v4352 = vadd.f32 %v4136, %v4217
        %v4353 = vadd.f32 %v4137, %v4221
        %v4354 = vadd.f32 %v4138, %v4217
        %v4355 = vadd.f32 %v4139, %v4221
        %v4356 = vadd.f32 %v4140, %v4217
        %v4357 = vadd.f32 %v4141, %v4221
        %v4358 = vadd.f32 %v4142, %v4217
        %v4359 = vadd.f32 %v4143, %v4221
        %v4360 = vadd.f32 %v4144, %v4217
        %v4361 = vadd.f32 %v4145, %v4221
        %v4362 = vadd.f32 %v4146, %v4217
        %v4363 = vadd.f32 %v4147, %v4221
        %v4364 = vadd.f32 %v4148, %v4217
        %v4365 = vadd.f32 %v4149, %v4221
        %v4366 = vmax.f32 %v4238, 0.0
        %v4367 = vmax.f32 %v4239, 0.0
        %v4368 = vmax.f32 %v4240, 0.0
        %v4369 = vmax.f32 %v4241, 0.0
        %v4370 = vmax.f32 %v4242, 0.0
        %v4371 = vmax.f32 %v4243, 0.0
        %v4372 = vmax.f32 %v4244, 0.0
        %v4373 = vmax.f32 %v4245, 0.0
        %v4374 = vmax.f32 %v4246, 0.0
        %v4375 = vmax.f32 %v4247, 0.0
        %v4376 = vmax.f32 %v4248, 0.0
        %v4377 = vmax.f32 %v4249, 0.0
        %v4378 = vmax.f32 %v4250, 0.0
        %v4379 = vmax.f32 %v4251, 0.0
        %v4380 = vmax.f32 %v4252, 0.0
        %v4381 = vmax.f32 %v4253, 0.0
        %v4382 = vmax.f32 %v4254, 0.0
        %v4383 = vmax.f32 %v4255, 0.0
        %v4384 = vmax.f32 %v4256, 0.0
        %v4385 = vmax.f32 %v4257, 0.0
        %v4386 = vmax.f32 %v4258, 0.0
        %v4387 = vmax.f32 %v4259, 0.0
        %v4388 = vmax.f32 %v4260, 0.0
        %v4389 = vmax.f32 %v4261, 0.0
        %v4390 = vmax.f32 %v4262, 0.0
        %v4391 = vmax.f32 %v4263, 0.0
        %v4392 = vmax.f32 %v4264, 0.0
        %v4393 = vmax.f32 %v4265, 0.0
        %v4394 = vmax.f32 %v4266, 0.0
        %v4395 = vmax.f32 %v4267, 0.0
        %v4396 = vmax.f32 %v4268, 0.0
        %v4397 = vmax.f32 %v4269, 0.0
        %v4398 = vmax.f32 %v4270, 0.0
        %v4399 = vmax.f32 %v4271, 0.0
        %v4400 = vmax.f32 %v4272, 0.0
        %v4401 = vmax.f32 %v4273, 0.0
        %v4402 = vmax.f32 %v4274, 0.0
        %v4403 = vmax.f32 %v4275, 0.0
        %v4404 = vmax.f32 %v4276, 0.0
        %v4405 = vmax.f32 %v4277, 0.0
        %v4406 = vmax.f32 %v4278, 0.0
        %v4407 = vmax.f32 %v4279, 0.0
        %v4408 = vmax.f32 %v4280, 0.0
        %v4409 = vmax.f32 %v4281, 0.0
        %v4410 = vmax.f32 %v4282, 0.0
        %v4411 = vmax.f32 %v4283, 0.0
        %v4412 = vmax.f32 %v4284, 0.0
        %v4413 = vmax.f32 %v4285, 0.0
        %v4414 = vmax.f32 %v4286, 0.0
        %v4415 = vmax.f32 %v4287, 0.0
        %v4416 = vmax.f32 %v4288, 0.0
        %v4417 = vmax.f32 %v4289, 0.0
        %v4418 = vmax.f32 %v4290, 0.0
        %v4419 = vmax.f32 %v4291, 0.0
        %v4420 = vmax.f32 %v4292, 0.0
        %v4421 = vmax.f32 %v4293, 0.0
        %v4422 = vmax.f32 %v4294, 0.0
        %v4423 = vmax.f32 %v4295, 0.0
        %v4424 = vmax.f32 %v4296, 0.0
        %v4425 = vmax.f32 %v4297, 0.0
        %v4426 = vmax.f32 %v4298, 0.0
        %v4427 = vmax.f32 %v4299, 0.0
        %v4428 = vmax.f32 %v4300, 0.0
        %v4429 = vmax.f32 %v4301, 0.0
        %v4430 = vmax.f32 %v4302, 0.0
        %v4431 = vmax.f32 %v4303, 0.0
        %v4432 = vmax.f32 %v4304, 0.0
        %v4433 = vmax.f32 %v4305, 0.0
        %v4434 = vmax.f32 %v4306, 0.0
        %v4435 = vmax.f32 %v4307, 0.0
        %v4436 = vmax.f32 %v4308, 0.0
        %v4437 = vmax.f32 %v4309, 0.0
        %v4438 = vmax.f32 %v4310, 0.0
        %v4439 = vmax.f32 %v4311, 0.0
        %v4440 = vmax.f32 %v4312, 0.0
        %v4441 = vmax.f32 %v4313, 0.0
        %v4442 = vmax.f32 %v4314, 0.0
        %v4443 = vmax.f32 %v4315, 0.0
        %v4444 = vmax.f32 %v4316, 0.0
        %v4445 = vmax.f32 %v4317, 0.0
        %v4446 = vmax.f32 %v4318, 0.0
        %v4447 = vmax.f32 %v4319, 0.0
        %v4448 = vmax.f32 %v4320, 0.0
        %v4449 = vmax.f32 %v4321, 0.0
        %v4450 = vmax.f32 %v4322, 0.0
        %v4451 = vmax.f32 %v4323, 0.0
        %v4452 = vmax.f32 %v4324, 0.0
        %v4453 = vmax.f32 %v4325, 0.0
        %v4454 = vmax.f32 %v4326, 0.0
        %v4455 = vmax.f32 %v4327, 0.0
        %v4456 = vmax.f32 %v4328, 0.0
        %v4457 = vmax.f32 %v4329, 0.0
        %v4458 = vmax.f32 %v4330, 0.0
        %v4459 = vmax.f32 %v4331, 0.0
        %v4460 = vmax.f32 %v4332, 0.0
        %v4461 = vmax.f32 %v4333, 0.0
        %v4462 = vmax.f32 %v4334, 0.0
        %v4463 = vmax.f32 %v4335, 0.0
        %v4464 = vmax.f32 %v4336, 0.0
        %v4465 = vmax.f32 %v4337, 0.0
        %v4466 = vmax.f32 %v4338, 0.0
        %v4467 = vmax.f32 %v4339, 0.0
        %v4468 = vmax.f32 %v4340, 0.0
        %v4469 = vmax.f32 %v4341, 0.0
        %v4470 = vmax.f32 %v4342, 0.0
        %v4471 = vmax.f32 %v4343, 0.0
        %v4472 = vmax.f32 %v4344, 0.0
        %v4473 = vmax.f32 %v4345, 0.0
        %v4474 = vmax.f32 %v4346, 0.0
        %v4475 = vmax.f32 %v4347, 0.0
        %v4476 = vmax.f32 %v4348, 0.0
        %v4477 = vmax.f32 %v4349, 0.0
        %v4478 = vmax.f32 %v4350, 0.0
        %v4479 = vmax.f32 %v4351, 0.0
        %v4480 = vmax.f32 %v4352, 0.0
        %v4481 = vmax.f32 %v4353, 0.0
        %v4482 = vmax.f32 %v4354, 0.0
        %v4483 = vmax.f32 %v4355, 0.0
        %v4484 = vmax.f32 %v4356, 0.0
        %v4485 = vmax.f32 %v4357, 0.0
        %v4486 = vmax.f32 %v4358, 0.0
        %v4487 = vmax.f32 %v4359, 0.0
        %v4488 = vmax.f32 %v4360, 0.0
        %v4489 = vmax.f32 %v4361, 0.0
        %v4490 = vmax.f32 %v4362, 0.0
        %v4491 = vmax.f32 %v4363, 0.0
        %v4492 = vmax.f32 %v4364, 0.0
        %v4493 = vmax.f32 %v4365, 0.0
        %v4494 = vpack.c.bf16 %v4368, %v4366
        %v4495 = vpack.c.bf16 %v4369, %v4367
        %v4496 = vpack.c.bf16 %v4372, %v4370
        %v4497 = vpack.c.bf16 %v4373, %v4371
        %v4498 = vpack.c.bf16 %v4376, %v4374
        %v4499 = vpack.c.bf16 %v4377, %v4375
        %v4500 = vpack.c.bf16 %v4380, %v4378
        %v4501 = vpack.c.bf16 %v4381, %v4379
        %v4502 = vpack.c.bf16 %v4384, %v4382
        %v4503 = vpack.c.bf16 %v4385, %v4383
        %v4504 = vpack.c.bf16 %v4388, %v4386
        %v4505 = vpack.c.bf16 %v4389, %v4387
        %v4506 = vpack.c.bf16 %v4392, %v4390
        %v4507 = vpack.c.bf16 %v4393, %v4391
        %v4508 = vpack.c.bf16 %v4396, %v4394
        %v4509 = vpack.c.bf16 %v4397, %v4395
        %v4510 = vpack.c.bf16 %v4400, %v4398
        %v4511 = vpack.c.bf16 %v4401, %v4399
        %v4512 = vpack.c.bf16 %v4404, %v4402
        %v4513 = vpack.c.bf16 %v4405, %v4403
        %v4514 = vpack.c.bf16 %v4408, %v4406
        %v4515 = vpack.c.bf16 %v4409, %v4407
        %v4516 = vpack.c.bf16 %v4412, %v4410
        %v4517 = vpack.c.bf16 %v4413, %v4411
        %v4518 = vpack.c.bf16 %v4416, %v4414
        %v4519 = vpack.c.bf16 %v4417, %v4415
        %v4520 = vpack.c.bf16 %v4420, %v4418
        %v4521 = vpack.c.bf16 %v4421, %v4419
        %v4522 = vpack.c.bf16 %v4424, %v4422
        %v4523 = vpack.c.bf16 %v4425, %v4423
        %v4524 = vpack.c.bf16 %v4428, %v4426
        %v4525 = vpack.c.bf16 %v4429, %v4427
        %v4526 = vpack.c.bf16 %v4432, %v4430
        %v4527 = vpack.c.bf16 %v4433, %v4431
        %v4528 = vpack.c.bf16 %v4436, %v4434
        %v4529 = vpack.c.bf16 %v4437, %v4435
        %v4530 = vpack.c.bf16 %v4440, %v4438
        %v4531 = vpack.c.bf16 %v4441, %v4439
        %v4532 = vpack.c.bf16 %v4444, %v4442
        %v4533 = vpack.c.bf16 %v4445, %v4443
        %v4534 = vpack.c.bf16 %v4448, %v4446
        %v4535 = vpack.c.bf16 %v4449, %v4447
        %v4536 = vpack.c.bf16 %v4452, %v4450
        %v4537 = vpack.c.bf16 %v4453, %v4451
        %v4538 = vpack.c.bf16 %v4456, %v4454
        %v4539 = vpack.c.bf16 %v4457, %v4455
        %v4540 = vpack.c.bf16 %v4460, %v4458
        %v4541 = vpack.c.bf16 %v4461, %v4459
        %v4542 = vpack.c.bf16 %v4464, %v4462
        %v4543 = vpack.c.bf16 %v4465, %v4463
        %v4544 = vpack.c.bf16 %v4468, %v4466
        %v4545 = vpack.c.bf16 %v4469, %v4467
        %v4546 = vpack.c.bf16 %v4472, %v4470
        %v4547 = vpack.c.bf16 %v4473, %v4471
        %v4548 = vpack.c.bf16 %v4476, %v4474
        %v4549 = vpack.c.bf16 %v4477, %v4475
        %v4550 = vpack.c.bf16 %v4480, %v4478
        %v4551 = vpack.c.bf16 %v4481, %v4479
        %v4552 = vpack.c.bf16 %v4484, %v4482
        %v4553 = vpack.c.bf16 %v4485, %v4483
        %v4554 = vpack.c.bf16 %v4488, %v4486
        %v4555 = vpack.c.bf16 %v4489, %v4487
        %v4556 = vpack.c.bf16 %v4492, %v4490
        %v4557 = vpack.c.bf16 %v4493, %v4491
        %v4558 = vmax.bf16 %v4494, %v4496
        %v4559 = vmax.bf16 %v4558, %v4498
        %v4560 = vmax.bf16 %v4559, %v4500
        %v4561 = vunpack.i.l.bf16 %v4560
        %v4562 = vunpack.i.h.bf16 %v4560
        %v4563 = vmax.f32 %v4561, %v4562
        %v4564 = vrot.slane %v4563, 4
        %v4565 = vmax.f32 %v4563, %v4564
        %v4566 = vrot.slane %v4565, 2
        %v4567 = vmax.f32 %v4565, %v4566
        %v4568 = vrot.slane %v4567, 1
        %v4569 = vmax.f32 %v4567, %v4568
        %v4570 = vpack.i.bf16 %v4569, %v4569
        %v4571 = vmax.bf16 %v4495, %v4497
        %v4572 = vmax.bf16 %v4571, %v4499
        %v4573 = vmax.bf16 %v4572, %v4501
        %v4574 = vunpack.i.l.bf16 %v4573
        %v4575 = vunpack.i.h.bf16 %v4573
        %v4576 = vmax.f32 %v4574, %v4575
        %v4577 = vrot.slane %v4576, 4
        %v4578 = vmax.f32 %v4576, %v4577
        %v4579 = vrot.slane %v4578, 2
        %v4580 = vmax.f32 %v4578, %v4579
        %v4581 = vrot.slane %v4580, 1
        %v4582 = vmax.f32 %v4580, %v4581
        %v4583 = vpack.i.bf16 %v4582, %v4582
        %v4584 = vmax.bf16 %v4502, %v4504
        %v4585 = vmax.bf16 %v4584, %v4506
        %v4586 = vmax.bf16 %v4585, %v4508
        %v4587 = vunpack.i.l.bf16 %v4586
        %v4588 = vunpack.i.h.bf16 %v4586
        %v4589 = vmax.f32 %v4587, %v4588
        %v4590 = vrot.slane %v4589, 4
        %v4591 = vmax.f32 %v4589, %v4590
        %v4592 = vrot.slane %v4591, 2
        %v4593 = vmax.f32 %v4591, %v4592
        %v4594 = vrot.slane %v4593, 1
        %v4595 = vmax.f32 %v4593, %v4594
        %v4596 = vpack.i.bf16 %v4595, %v4595
        %v4597 = vmax.bf16 %v4503, %v4505
        %v4598 = vmax.bf16 %v4597, %v4507
        %v4599 = vmax.bf16 %v4598, %v4509
        %v4600 = vunpack.i.l.bf16 %v4599
        %v4601 = vunpack.i.h.bf16 %v4599
        %v4602 = vmax.f32 %v4600, %v4601
        %v4603 = vrot.slane %v4602, 4
        %v4604 = vmax.f32 %v4602, %v4603
        %v4605 = vrot.slane %v4604, 2
        %v4606 = vmax.f32 %v4604, %v4605
        %v4607 = vrot.slane %v4606, 1
        %v4608 = vmax.f32 %v4606, %v4607
        %v4609 = vpack.i.bf16 %v4608, %v4608
        %v4610 = vmax.bf16 %v4510, %v4512
        %v4611 = vmax.bf16 %v4610, %v4514
        %v4612 = vmax.bf16 %v4611, %v4516
        %v4613 = vunpack.i.l.bf16 %v4612
        %v4614 = vunpack.i.h.bf16 %v4612
        %v4615 = vmax.f32 %v4613, %v4614
        %v4616 = vrot.slane %v4615, 4
        %v4617 = vmax.f32 %v4615, %v4616
        %v4618 = vrot.slane %v4617, 2
        %v4619 = vmax.f32 %v4617, %v4618
        %v4620 = vrot.slane %v4619, 1
        %v4621 = vmax.f32 %v4619, %v4620
        %v4622 = vpack.i.bf16 %v4621, %v4621
        %v4623 = vmax.bf16 %v4511, %v4513
        %v4624 = vmax.bf16 %v4623, %v4515
        %v4625 = vmax.bf16 %v4624, %v4517
        %v4626 = vunpack.i.l.bf16 %v4625
        %v4627 = vunpack.i.h.bf16 %v4625
        %v4628 = vmax.f32 %v4626, %v4627
        %v4629 = vrot.slane %v4628, 4
        %v4630 = vmax.f32 %v4628, %v4629
        %v4631 = vrot.slane %v4630, 2
        %v4632 = vmax.f32 %v4630, %v4631
        %v4633 = vrot.slane %v4632, 1
        %v4634 = vmax.f32 %v4632, %v4633
        %v4635 = vpack.i.bf16 %v4634, %v4634
        %v4636 = vmax.bf16 %v4518, %v4520
        %v4637 = vmax.bf16 %v4636, %v4522
        %v4638 = vmax.bf16 %v4637, %v4524
        %v4639 = vunpack.i.l.bf16 %v4638
        %v4640 = vunpack.i.h.bf16 %v4638
        %v4641 = vmax.f32 %v4639, %v4640
        %v4642 = vrot.slane %v4641, 4
        %v4643 = vmax.f32 %v4641, %v4642
        %v4644 = vrot.slane %v4643, 2
        %v4645 = vmax.f32 %v4643, %v4644
        %v4646 = vrot.slane %v4645, 1
        %v4647 = vmax.f32 %v4645, %v4646
        %v4648 = vpack.i.bf16 %v4647, %v4647
        %v4649 = vmax.bf16 %v4519, %v4521
        %v4650 = vmax.bf16 %v4649, %v4523
        %v4651 = vmax.bf16 %v4650, %v4525
        %v4652 = vunpack.i.l.bf16 %v4651
        %v4653 = vunpack.i.h.bf16 %v4651
        %v4654 = vmax.f32 %v4652, %v4653
        %v4655 = vrot.slane %v4654, 4
        %v4656 = vmax.f32 %v4654, %v4655
        %v4657 = vrot.slane %v4656, 2
        %v4658 = vmax.f32 %v4656, %v4657
        %v4659 = vrot.slane %v4658, 1
        %v4660 = vmax.f32 %v4658, %v4659
        %v4661 = vpack.i.bf16 %v4660, %v4660
        %v4662 = vmax.bf16 %v4526, %v4528
        %v4663 = vmax.bf16 %v4662, %v4530
        %v4664 = vmax.bf16 %v4663, %v4532
        %v4665 = vunpack.i.l.bf16 %v4664
        %v4666 = vunpack.i.h.bf16 %v4664
        %v4667 = vmax.f32 %v4665, %v4666
        %v4668 = vrot.slane %v4667, 4
        %v4669 = vmax.f32 %v4667, %v4668
        %v4670 = vrot.slane %v4669, 2
        %v4671 = vmax.f32 %v4669, %v4670
        %v4672 = vrot.slane %v4671, 1
        %v4673 = vmax.f32 %v4671, %v4672
        %v4674 = vpack.i.bf16 %v4673, %v4673
        %v4675 = vmax.bf16 %v4527, %v4529
        %v4676 = vmax.bf16 %v4675, %v4531
        %v4677 = vmax.bf16 %v4676, %v4533
        %v4678 = vunpack.i.l.bf16 %v4677
        %v4679 = vunpack.i.h.bf16 %v4677
        %v4680 = vmax.f32 %v4678, %v4679
        %v4681 = vrot.slane %v4680, 4
        %v4682 = vmax.f32 %v4680, %v4681
        %v4683 = vrot.slane %v4682, 2
        %v4684 = vmax.f32 %v4682, %v4683
        %v4685 = vrot.slane %v4684, 1
        %v4686 = vmax.f32 %v4684, %v4685
        %v4687 = vpack.i.bf16 %v4686, %v4686
        %v4688 = vmax.bf16 %v4534, %v4536
        %v4689 = vmax.bf16 %v4688, %v4538
        %v4690 = vmax.bf16 %v4689, %v4540
        %v4691 = vunpack.i.l.bf16 %v4690
        %v4692 = vunpack.i.h.bf16 %v4690
        %v4693 = vmax.f32 %v4691, %v4692
        %v4694 = vrot.slane %v4693, 4
        %v4695 = vmax.f32 %v4693, %v4694
        %v4696 = vrot.slane %v4695, 2
        %v4697 = vmax.f32 %v4695, %v4696
        %v4698 = vrot.slane %v4697, 1
        %v4699 = vmax.f32 %v4697, %v4698
        %v4700 = vpack.i.bf16 %v4699, %v4699
        %v4701 = vmax.bf16 %v4535, %v4537
        %v4702 = vmax.bf16 %v4701, %v4539
        %v4703 = vmax.bf16 %v4702, %v4541
        %v4704 = vunpack.i.l.bf16 %v4703
        %v4705 = vunpack.i.h.bf16 %v4703
        %v4706 = vmax.f32 %v4704, %v4705
        %v4707 = vrot.slane %v4706, 4
        %v4708 = vmax.f32 %v4706, %v4707
        %v4709 = vrot.slane %v4708, 2
        %v4710 = vmax.f32 %v4708, %v4709
        %v4711 = vrot.slane %v4710, 1
        %v4712 = vmax.f32 %v4710, %v4711
        %v4713 = vpack.i.bf16 %v4712, %v4712
        %v4714 = vmax.bf16 %v4542, %v4544
        %v4715 = vmax.bf16 %v4714, %v4546
        %v4716 = vmax.bf16 %v4715, %v4548
        %v4717 = vunpack.i.l.bf16 %v4716
        %v4718 = vunpack.i.h.bf16 %v4716
        %v4719 = vmax.f32 %v4717, %v4718
        %v4720 = vrot.slane %v4719, 4
        %v4721 = vmax.f32 %v4719, %v4720
        %v4722 = vrot.slane %v4721, 2
        %v4723 = vmax.f32 %v4721, %v4722
        %v4724 = vrot.slane %v4723, 1
        %v4725 = vmax.f32 %v4723, %v4724
        %v4726 = vpack.i.bf16 %v4725, %v4725
        %v4727 = vmax.bf16 %v4543, %v4545
        %v4728 = vmax.bf16 %v4727, %v4547
        %v4729 = vmax.bf16 %v4728, %v4549
        %v4730 = vunpack.i.l.bf16 %v4729
        %v4731 = vunpack.i.h.bf16 %v4729
        %v4732 = vmax.f32 %v4730, %v4731
        %v4733 = vrot.slane %v4732, 4
        %v4734 = vmax.f32 %v4732, %v4733
        %v4735 = vrot.slane %v4734, 2
        %v4736 = vmax.f32 %v4734, %v4735
        %v4737 = vrot.slane %v4736, 1
        %v4738 = vmax.f32 %v4736, %v4737
        %v4739 = vpack.i.bf16 %v4738, %v4738
        %v4740 = vmax.bf16 %v4550, %v4552
        %v4741 = vmax.bf16 %v4740, %v4554
        %v4742 = vmax.bf16 %v4741, %v4556
        %v4743 = vunpack.i.l.bf16 %v4742
        %v4744 = vunpack.i.h.bf16 %v4742
        %v4745 = vmax.f32 %v4743, %v4744
        %v4746 = vrot.slane %v4745, 4
        %v4747 = vmax.f32 %v4745, %v4746
        %v4748 = vrot.slane %v4747, 2
        %v4749 = vmax.f32 %v4747, %v4748
        %v4750 = vrot.slane %v4749, 1
        %v4751 = vmax.f32 %v4749, %v4750
        %v4752 = vpack.i.bf16 %v4751, %v4751
        %v4753 = vmax.bf16 %v4551, %v4553
        %v4754 = vmax.bf16 %v4753, %v4555
        %v4755 = vmax.bf16 %v4754, %v4557
        %v4756 = vunpack.i.l.bf16 %v4755
        %v4757 = vunpack.i.h.bf16 %v4755
        %v4758 = vmax.f32 %v4756, %v4757
        %v4759 = vrot.slane %v4758, 4
        %v4760 = vmax.f32 %v4758, %v4759
        %v4761 = vrot.slane %v4760, 2
        %v4762 = vmax.f32 %v4760, %v4761
        %v4763 = vrot.slane %v4762, 1
        %v4764 = vmax.f32 %v4762, %v4763
        %v4765 = vpack.i.bf16 %v4764, %v4764
        %v4766 = vld [vmem:[%s3] sm:$0xf]
        %v4767 = vld [vmem:[%s3 + $0x4] sm:$0xf]
        %v4768 = vld [vmem:[%s3 + $0x8] sm:$0xf]
        %v4769 = vld [vmem:[%s3 + $0xc] sm:$0xf]
        %v4770 = vld [vmem:[%s3 + $0x10] sm:$0xf]
        %v4771 = vld [vmem:[%s3 + $0x14] sm:$0xf]
        %v4772 = vld [vmem:[%s3 + $0x18] sm:$0xf]
        %v4773 = vld [vmem:[%s3 + $0x1c] sm:$0xf]
        %v4774 = vld [vmem:[%s3 + $0x20] sm:$0xf]
        %v4775 = vld [vmem:[%s3 + $0x24] sm:$0xf]
        %v4776 = vld [vmem:[%s3 + $0x28] sm:$0xf]
        %v4777 = vld [vmem:[%s3 + $0x2c] sm:$0xf]
        %v4778 = vld [vmem:[%s3 + $0x30] sm:$0xf]
        %v4779 = vld [vmem:[%s3 + $0x34] sm:$0xf]
        %v4780 = vld [vmem:[%s3 + $0x38] sm:$0xf]
        %v4781 = vld [vmem:[%s3 + $0x3c] sm:$0xf]
        %v4782 = vld [vmem:[%s3 + $0x40] sm:$0xf]
        %v4783 = vld [vmem:[%s3 + $0x44] sm:$0xf]
        %v4784 = vld [vmem:[%s3 + $0x48] sm:$0xf]
        %v4785 = vld [vmem:[%s3 + $0x4c] sm:$0xf]
        %v4786 = vld [vmem:[%s3 + $0x50] sm:$0xf]
        %v4787 = vld [vmem:[%s3 + $0x54] sm:$0xf]
        %v4788 = vld [vmem:[%s3 + $0x58] sm:$0xf]
        %v4789 = vld [vmem:[%s3 + $0x5c] sm:$0xf]
        %v4790 = vld [vmem:[%s3 + $0x60] sm:$0xf]
        %v4791 = vld [vmem:[%s3 + $0x64] sm:$0xf]
        %v4792 = vld [vmem:[%s3 + $0x68] sm:$0xf]
        %v4793 = vld [vmem:[%s3 + $0x6c] sm:$0xf]
        %v4794 = vld [vmem:[%s3 + $0x70] sm:$0xf]
        %v4795 = vld [vmem:[%s3 + $0x74] sm:$0xf]
        %v4796 = vld [vmem:[%s3 + $0x78] sm:$0xf]
        %v4797 = vld [vmem:[%s3 + $0x7c] sm:$0xf]
        %v4798 = vld [vmem:[%s9] sm:$0x1]
        %v4799 = vlaneseq
        %v4800 = vshrl.u32 %v4799, 7
        %v4801 = vsub.s32 0, %v4800
        %v4802 = vrot.slane %v4798, %v4801
        %v4819 = vunpack.c.l.b16 %v4570
        %v4820 = vunpack.c.l.b16 %v4583
        %v4821 = vunpack.c.l.b16 %v4596
        %v4822 = vunpack.c.l.b16 %v4609
        %v4823 = vunpack.c.l.b16 %v4622
        %v4824 = vunpack.c.l.b16 %v4635
        %v4825 = vunpack.c.l.b16 %v4648
        %v4826 = vunpack.c.l.b16 %v4661
        %v4827 = vunpack.c.l.b16 %v4674
        %v4828 = vunpack.c.l.b16 %v4687
        %v4829 = vunpack.c.l.b16 %v4700
        %v4830 = vunpack.c.l.b16 %v4713
        %v4831 = vunpack.c.l.b16 %v4726
        %v4832 = vunpack.c.l.b16 %v4739
        %v4833 = vunpack.c.l.b16 %v4752
        %v4834 = vunpack.c.l.b16 %v4765
        %vm4835 = vcmask 1041409
        %v4836 = vsel %vm4835, %v4821, %v4819
        %vm4837 = vcmask 1042434
        %v4838 = vsel %vm4837, %v4823, %v4836
        %vm4839 = vcmask 1043459
        %v4840 = vsel %vm4839, %v4825, %v4838
        %vm4841 = vcmask 1044484
        %v4842 = vsel %vm4841, %v4827, %v4840
        %vm4843 = vcmask 1045509
        %v4844 = vsel %vm4843, %v4829, %v4842
        %vm4845 = vcmask 1046534
        %v4846 = vsel %vm4845, %v4831, %v4844
        %vm4847 = vcmask 1047559
        %v4848 = vsel %vm4847, %v4833, %v4846
        %v4849 = vsel %vm4835, %v4822, %v4820
        %v4850 = vsel %vm4837, %v4824, %v4849
        %v4851 = vsel %vm4839, %v4826, %v4850
        %v4852 = vsel %vm4841, %v4828, %v4851
        %v4853 = vsel %vm4843, %v4830, %v4852
        %v4854 = vsel %vm4845, %v4832, %v4853
        %v4855 = vsel %vm4847, %v4834, %v4854
        %v4856 = vpack.c.b16 %v4848, %v4848
        %v4857 = vpack.c.b16 %v4855, %v4855
        %v4892 = vunpack.c.l.b16 %v4766
        %v4893 = vunpack.c.l.b16 %v4767
        %v4894 = vunpack.c.l.b16 %v4768
        %v4895 = vunpack.c.l.b16 %v4769
        %v4896 = vunpack.c.l.b16 %v4770
        %v4897 = vunpack.c.l.b16 %v4771
        %v4898 = vunpack.c.l.b16 %v4772
        %v4899 = vunpack.c.l.b16 %v4773
        %v4900 = vunpack.c.l.b16 %v4774
        %v4901 = vunpack.c.l.b16 %v4775
        %v4902 = vunpack.c.l.b16 %v4776
        %v4903 = vunpack.c.l.b16 %v4777
        %v4904 = vunpack.c.l.b16 %v4778
        %v4905 = vunpack.c.l.b16 %v4779
        %v4906 = vunpack.c.l.b16 %v4780
        %v4907 = vunpack.c.l.b16 %v4781
        %v4908 = vunpack.c.l.b16 %v4782
        %v4909 = vunpack.c.l.b16 %v4783
        %v4910 = vunpack.c.l.b16 %v4784
        %v4911 = vunpack.c.l.b16 %v4785
        %v4912 = vunpack.c.l.b16 %v4786
        %v4913 = vunpack.c.l.b16 %v4787
        %v4914 = vunpack.c.l.b16 %v4788
        %v4915 = vunpack.c.l.b16 %v4789
        %v4916 = vunpack.c.l.b16 %v4790
        %v4917 = vunpack.c.l.b16 %v4791
        %v4918 = vunpack.c.l.b16 %v4792
        %v4919 = vunpack.c.l.b16 %v4793
        %v4920 = vunpack.c.l.b16 %v4794
        %v4921 = vunpack.c.l.b16 %v4795
        %v4922 = vunpack.c.l.b16 %v4796
        %v4923 = vunpack.c.l.b16 %v4797
        %v4924 = vpack.c.b16 %v4893, %v4892
        %v4925 = vpack.c.b16 %v4895, %v4894
        %v4926 = vpack.c.b16 %v4897, %v4896
        %v4927 = vpack.c.b16 %v4899, %v4898
        %v4928 = vpack.c.b16 %v4901, %v4900
        %v4929 = vpack.c.b16 %v4903, %v4902
        %v4930 = vpack.c.b16 %v4905, %v4904
        %v4931 = vpack.c.b16 %v4907, %v4906
        %v4932 = vpack.c.b16 %v4909, %v4908
        %v4933 = vpack.c.b16 %v4911, %v4910
        %v4934 = vpack.c.b16 %v4913, %v4912
        %v4935 = vpack.c.b16 %v4915, %v4914
        %v4936 = vpack.c.b16 %v4917, %v4916
        %v4937 = vpack.c.b16 %v4919, %v4918
        %v4938 = vpack.c.b16 %v4921, %v4920
        %v4939 = vpack.c.b16 %v4923, %v4922
        %4956 = vmatprep.subr.bf16.mxu0 0
        %4957 = vmatpush1.bf16.msra.mxu0 %v4924
        %4958 = vmatprep.subr.bf16.mxu0 0
        %4959 = vmatpush1.bf16.msra.mxu0 %v4925
        %4960 = vmatprep.subr.bf16.mxu0 0
        %4961 = vmatpush1.bf16.msra.mxu0 %v4926
        %4962 = vmatprep.subr.bf16.mxu0 0
        %4963 = vmatpush1.bf16.msra.mxu0 %v4927
        %4964 = vmatprep.subr.bf16.mxu0 0
        %4965 = vmatpush1.bf16.msra.mxu0 %v4928
        %4966 = vmatprep.subr.bf16.mxu0 0
        %4967 = vmatpush1.bf16.msra.mxu0 %v4929
        %4968 = vmatprep.subr.bf16.mxu0 0
        %4969 = vmatpush1.bf16.msra.mxu0 %v4930
        %4970 = vmatprep.subr.bf16.mxu0 0
        %4971 = vmatpush1.bf16.msra.mxu0 %v4931
        %4972 = vmatprep.subr.bf16.mxu0 0
        %4973 = vmatpush1.bf16.msra.mxu0 %v4932
        %4974 = vmatprep.subr.bf16.mxu0 0
        %4975 = vmatpush1.bf16.msra.mxu0 %v4933
        %4976 = vmatprep.subr.bf16.mxu0 0
        %4977 = vmatpush1.bf16.msra.mxu0 %v4934
        %4978 = vmatprep.subr.bf16.mxu0 0
        %4979 = vmatpush1.bf16.msra.mxu0 %v4935
        %4980 = vmatprep.subr.bf16.mxu0 0
        %4981 = vmatpush1.bf16.msra.mxu0 %v4936
        %4982 = vmatprep.subr.bf16.mxu0 0
        %4983 = vmatpush1.bf16.msra.mxu0 %v4937
        %4984 = vmatprep.subr.bf16.mxu0 0
        %4985 = vmatpush1.bf16.msra.mxu0 %v4938
        %4986 = vmatprep.subr.bf16.mxu0 0
        %4987 = vmatpush1.bf16.msra.mxu0 %v4939
        %4988 = vmatprep.mubr.bf16.mxu0 %v4857
        %4989 = vmatmul.mubr.bf16.gmra.mrb[0].mxu0 %v4856
        %v4990 = vpop.f32.mrb[0].mxu0
        %v4991 = vadd.f32 %v4802, %v4990
        %v4992 = vpop.f32.mrb[0].mxu0
        %v4993 = vpop.f32.mrb[0].mxu0
        %v4994 = vpop.f32.mrb[0].mxu0
        %4995 = vdwg.mxu0
        %v4996 = vsub.f32 %v4991, %v4991
        %v4997 = vmul.f32 %v4996, 316.22775
        %v4998 = vld [vmem:[%s9 + $0x1] sm:$0x1]
        %v4999 = vlaneseq
        %v5000 = vshrl.u32 %v4999, 7
        %v5001 = vsub.s32 0, %v5000
        %v5002 = vrot.slane %v4998, %v5001
        %v5003 = vmul.f32 %v4997, %v5002
        %v5004 = vld [vmem:[%s9 + $0x2] sm:$0x1]
        %v5005 = vlaneseq
        %v5006 = vshrl.u32 %v5005, 7
        %v5007 = vsub.s32 0, %v5006
        %v5008 = vrot.slane %v5004, %v5007
        %v5009 = vadd.f32 %v5003, %v5008
        %v5010 = vmax.f32 %v5009, 0.0
        %v5011 = vpack.c.bf16 %v5010, %v5010
        %v5012 = vld [vmem:[%s4] sm:$0xf]
        %v5013 = vld [vmem:[%s4 + $0x4] sm:$0xf]
        %v5014 = vld [vmem:[%s4 + $0x8] sm:$0xf]
        %v5015 = vld [vmem:[%s4 + $0xc] sm:$0xf]
        %v5016 = vld [vmem:[%s4 + $0x10] sm:$0xf]
        %v5017 = vld [vmem:[%s4 + $0x14] sm:$0xf]
        %v5018 = vld [vmem:[%s4 + $0x18] sm:$0xf]
        %v5019 = vld [vmem:[%s4 + $0x1c] sm:$0xf]
        %v5020 = vld [vmem:[%s4 + $0x20] sm:$0xf]
        %v5021 = vld [vmem:[%s4 + $0x24] sm:$0xf]
        %v5022 = vld [vmem:[%s4 + $0x28] sm:$0xf]
        %v5023 = vld [vmem:[%s4 + $0x2c] sm:$0xf]
        %v5024 = vld [vmem:[%s4 + $0x30] sm:$0xf]
        %v5025 = vld [vmem:[%s4 + $0x34] sm:$0xf]
        %v5026 = vld [vmem:[%s4 + $0x38] sm:$0xf]
        %v5027 = vld [vmem:[%s4 + $0x3c] sm:$0xf]
        %v5028 = vld [vmem:[%s10] sm:$0x1]
        %v5029 = vlaneseq
        %v5030 = vshrl.u32 %v5029, 7
        %v5031 = vsub.s32 0, %v5030
        %v5032 = vrot.slane %v5028, %v5031
        %v5049 = vunpack.c.l.b16 %v5012
        %v5050 = vunpack.c.l.b16 %v5013
        %v5051 = vunpack.c.l.b16 %v5014
        %v5052 = vunpack.c.l.b16 %v5015
        %v5053 = vunpack.c.l.b16 %v5016
        %v5054 = vunpack.c.l.b16 %v5017
        %v5055 = vunpack.c.l.b16 %v5018
        %v5056 = vunpack.c.l.b16 %v5019
        %v5057 = vunpack.c.l.b16 %v5020
        %v5058 = vunpack.c.l.b16 %v5021
        %v5059 = vunpack.c.l.b16 %v5022
        %v5060 = vunpack.c.l.b16 %v5023
        %v5061 = vunpack.c.l.b16 %v5024
        %v5062 = vunpack.c.l.b16 %v5025
        %v5063 = vunpack.c.l.b16 %v5026
        %v5064 = vunpack.c.l.b16 %v5027
        %v5065 = vpack.c.b16 %v5050, %v5049
        %v5066 = vpack.c.b16 %v5052, %v5051
        %v5067 = vpack.c.b16 %v5054, %v5053
        %v5068 = vpack.c.b16 %v5056, %v5055
        %v5069 = vpack.c.b16 %v5058, %v5057
        %v5070 = vpack.c.b16 %v5060, %v5059
        %v5071 = vpack.c.b16 %v5062, %v5061
        %v5072 = vpack.c.b16 %v5064, %v5063
        %5081 = vmatprep.subr.bf16.mxu0 0
        %5082 = vmatpush1.bf16.msra.mxu0 %v5065
        %5083 = vmatprep.subr.bf16.mxu0 0
        %5084 = vmatpush1.bf16.msra.mxu0 %v5066
        %5085 = vmatprep.subr.bf16.mxu0 0
        %5086 = vmatpush1.bf16.msra.mxu0 %v5067
        %5087 = vmatprep.subr.bf16.mxu0 0
        %5088 = vmatpush1.bf16.msra.mxu0 %v5068
        %5089 = vmatprep.subr.bf16.mxu0 0
        %5090 = vmatpush1.bf16.msra.mxu0 %v5069
        %5091 = vmatprep.subr.bf16.mxu0 0
        %5092 = vmatpush1.bf16.msra.mxu0 %v5070
        %5093 = vmatprep.subr.bf16.mxu0 0
        %5094 = vmatpush1.bf16.msra.mxu0 %v5071
        %5095 = vmatprep.subr.bf16.mxu0 0
        %5096 = vmatpush1.bf16.msra.mxu0 %v5072
        %5097 = vmatprep.subr.bf16.mxu0 0
        %5098 = vmatpush1.bf16.msra.mxu0 0
        %5099 = vmatprep.subr.bf16.mxu0 0
        %5100 = vmatpush1.bf16.msra.mxu0 0
        %5101 = vmatprep.subr.bf16.mxu0 0
        %5102 = vmatpush1.bf16.msra.mxu0 0
        %5103 = vmatprep.subr.bf16.mxu0 0
        %5104 = vmatpush1.bf16.msra.mxu0 0
        %5105 = vmatprep.subr.bf16.mxu0 0
        %5106 = vmatpush1.bf16.msra.mxu0 0
        %5107 = vmatprep.subr.bf16.mxu0 0
        %5108 = vmatpush1.bf16.msra.mxu0 0
        %5109 = vmatprep.subr.bf16.mxu0 0
        %5110 = vmatpush1.bf16.msra.mxu0 0
        %5111 = vmatprep.subr.bf16.mxu0 0
        %5112 = vmatpush1.bf16.msra.mxu0 0
        %5113 = vmatprep.mubr.bf16.mxu0 0
        %5114 = vmatmul.mubr.bf16.gmra.mrb[0].mxu0 %v5011
        %v5115 = vpop.f32.mrb[0].mxu0
        %v5116 = vadd.f32 %v5032, %v5115
        %v5117 = vpop.f32.mrb[0].mxu0
        %v5118 = vpop.f32.mrb[0].mxu0
        %v5119 = vpop.f32.mrb[0].mxu0
        %5120 = vdwg.mxu0
        %v5121 = vsub.f32 %v5116, %v5116
        %v5122 = vmul.f32 %v5121, 316.22775
        %v5123 = vld [vmem:[%s10 + $0x1] sm:$0x1]
        %v5124 = vlaneseq
        %v5125 = vshrl.u32 %v5124, 7
        %v5126 = vsub.s32 0, %v5125
        %v5127 = vrot.slane %v5123, %v5126
        %v5128 = vmul.f32 %v5122, %v5127
        %v5129 = vld [vmem:[%s10 + $0x2] sm:$0x1]
        %v5130 = vlaneseq
        %v5131 = vshrl.u32 %v5130, 7
        %v5132 = vsub.s32 0, %v5131
        %v5133 = vrot.slane %v5129, %v5132
        %v5134 = vadd.f32 %v5128, %v5133
        %v5135 = vmax.f32 %v5134, 0.0
        %v5136 = vld [vmem:[%s5] sm:$0xff]
        %v5137 = vld [vmem:[%s5 + $0x8] sm:$0xff]
        %v5138 = vld [vmem:[%s5 + $0x10] sm:$0xff]
        %v5139 = vld [vmem:[%s5 + $0x18] sm:$0xff]
        %v5140 = vld [vmem:[%s5 + $0x20] sm:$0xff]
        %v5141 = vld [vmem:[%s5 + $0x28] sm:$0xff]
        %v5142 = vld [vmem:[%s5 + $0x30] sm:$0xff]
        %v5143 = vld [vmem:[%s5 + $0x38] sm:$0xff]
        %v5144 = vld [vmem:[%s11] sm:$0x1]
        %v5145 = vlaneseq
        %v5146 = vshrl.u32 %v5145, 7
        %v5147 = vsub.s32 0, %v5146
        %v5148 = vrot.slane %v5144, %v5147
        %vm5149 = vcmask 523264
        %v5151 = vsel %vm5149, %v5135, 0
        %5153 = vmatprep.subr.mxu0 0.0
        %5154 = vmatpush1.msra.mxu0 %v5136
        %5155 = vmatprep.subr.mxu0 0.0
        %5156 = vmatpush1.msra.mxu0 %v5137
        %5157 = vmatprep.subr.mxu0 0.0
        %5158 = vmatpush1.msra.mxu0 %v5138
        %5159 = vmatprep.subr.mxu0 0.0
        %5160 = vmatpush1.msra.mxu0 %v5139
        %5161 = vmatprep.subr.mxu0 0.0
        %5162 = vmatpush1.msra.mxu0 %v5140
        %5163 = vmatprep.subr.mxu0 0.0
        %5164 = vmatpush1.msra.mxu0 %v5141
        %5165 = vmatprep.subr.mxu0 0.0
        %5166 = vmatpush1.msra.mxu0 %v5142
        %5167 = vmatprep.subr.mxu0 0.0
        %5168 = vmatpush1.msra.mxu0 %v5143
        %5169 = vmatprep.subr.mxu0 0.0
        %5170 = vmatpush1.msra.mxu0 0.0
        %5171 = vmatprep.subr.mxu0 0.0
        %5172 = vmatpush1.msra.mxu0 0.0
        %5173 = vmatprep.subr.mxu0 0.0
        %5174 = vmatpush1.msra.mxu0 0.0
        %5175 = vmatprep.subr.mxu0 0.0
        %5176 = vmatpush1.msra.mxu0 0.0
        %5177 = vmatprep.subr.mxu0 0.0
        %5178 = vmatpush1.msra.mxu0 0.0
        %5179 = vmatprep.subr.mxu0 0.0
        %5180 = vmatpush1.msra.mxu0 0.0
        %5181 = vmatprep.subr.mxu0 0.0
        %5182 = vmatpush1.msra.mxu0 0.0
        %5183 = vmatprep.subr.mxu0 0.0
        %5184 = vmatpush1.msra.mxu0 0.0
        %5185 = vmatprep.subr.mxu0 0.0
        %5186 = vmatpush1.msra.mxu0 0.0
        %5187 = vmatprep.subr.mxu0 0.0
        %5188 = vmatpush1.msra.mxu0 0.0
        %5189 = vmatprep.subr.mxu0 0.0
        %5190 = vmatpush1.msra.mxu0 0.0
        %5191 = vmatprep.subr.mxu0 0.0
        %5192 = vmatpush1.msra.mxu0 0.0
        %5193 = vmatprep.subr.mxu0 0.0
        %5194 = vmatpush1.msra.mxu0 0.0
        %5195 = vmatprep.subr.mxu0 0.0
        %5196 = vmatpush1.msra.mxu0 0.0
        %5197 = vmatprep.subr.mxu0 0.0
        %5198 = vmatpush1.msra.mxu0 0.0
        %5199 = vmatprep.subr.mxu0 0.0
        %5200 = vmatpush1.msra.mxu0 0.0
        %5201 = vmatprep.subr.mxu0 0.0
        %5202 = vmatpush1.msra.mxu0 0.0
        %5203 = vmatprep.subr.mxu0 0.0
        %5204 = vmatpush1.msra.mxu0 0.0
        %5205 = vmatprep.subr.mxu0 0.0
        %5206 = vmatpush1.msra.mxu0 0.0
        %5207 = vmatprep.subr.mxu0 0.0
        %5208 = vmatpush1.msra.mxu0 0.0
        %5209 = vmatprep.subr.mxu0 0.0
        %5210 = vmatpush1.msra.mxu0 0.0
        %5211 = vmatprep.subr.mxu0 0.0
        %5212 = vmatpush1.msra.mxu0 0.0
        %5213 = vmatprep.subr.mxu0 0.0
        %5214 = vmatpush1.msra.mxu0 0.0
        %5215 = vmatprep.subr.mxu0 0.0
        %5216 = vmatpush1.msra.mxu0 0.0
        %5217 = vmatprep.mubr.f32.mxu0 0.0
        %5218 = vmatmul.mubr.f32.gmra.mrb[0].mxu0 %v5151
        %v5219 = vpop.f32.mrb[0].mxu0
        %v5220 = vadd.f32 %v5148, %v5219
        %v5221 = vpop.f32.mrb[0].mxu0
        %5222 = vdwg.mxu0
        %v5223 = vld [vmem:[%s11 + $0x1] sm:$0x1]
        %v5224 = vlaneseq
        %v5225 = vshrl.u32 %v5224, 7
        %v5226 = vsub.s32 0, %v5225
        %v5227 = vrot.slane %v5223, %v5226
        %v5228 = vadd.f32 %v5220, %v5227
        %5229 = vst [vmem:[%s409] sm:$0xff] %v5228
        %s5230 = sand.u32 %s291, 1
        %s5231 = scalar_lea.sflag [#allocation3], %s5230
        %s5232 = sand.u32 %s291, 1
        %s5233 = smul.addr %s5232, 8
        %s5234 = scalar_lea.vmem [#allocation2], %s5233
        // Predicated region
        $region69: #{tpu_custom_call.1} parent=67 // pred_check
          %p5235 = pneg %p301
        $region70: #{tpu_custom_call.1} parent=67 // pred_check_branch
          %5237 = sbr.rel (%p5235) target = $region72
        $region71: #{tpu_custom_call.1} parent=67 // pred_region
          %s5239 = ssub.s32 128, 128
          %5240 = vsyncadd %s5231, %s5239
          %s5241 = smul.addr %s26, 128
          %s5242 = scalar_lea.hbm %s12, %s5241
          %s5244 = sshll.u32 %s5234, 4
          %s5245 = int_to_ptr.vmem [resolvable:$true] %s5244
          %5247 = dma.vmem_to_hbm [thread:$0]  %s5245, 128, %s5242, %s5231
        $region72: #{tpu_custom_call.1} parent=67 // pred_fallthru
          _
      $region68: #{tpu_custom_call.1} parent=5 // pred_fallthru
        _
      %p5248 = scmp.le.s32.totalorder 2, %s21
      // Predicated region
      $region73: #{tpu_custom_call.1} parent=5 // pred_check
        %p5249 = pneg %p5248
      $region74: #{tpu_custom_call.1} parent=5 // pred_check_branch
        %5251 = sbr.rel (%p5249) target = $region76
      $region75: #{tpu_custom_call.1} parent=5 // pred_region
        %s5252 = ssub.s32 %s21, 2
        // Predicated region
        $region77: #{tpu_custom_call.1} parent=75 // pred_check
          %p5253 = pneg %p307
        $region78: #{tpu_custom_call.1} parent=75 // pred_check_branch
          %5255 = sbr.rel (%p5253) target = $region80
        $region79: #{tpu_custom_call.1} parent=75 // pred_region
          %s5256 = sand.u32 %s292, 1
          %s5257 = scalar_lea.sflag [#allocation3], %s5256
          %s5258 = sand.u32 %s292, 1
          %s5259 = smul.addr %s5258, 8
          %s5260 = scalar_lea.vmem [#allocation2], %s5259
          %5261 = dma.done %s5257, 128
        $region80: #{tpu_custom_call.1} parent=75 // pred_fallthru
          _
      $region76: #{tpu_custom_call.1} parent=5 // pred_fallthru
        _
    $region6: #{tpu_custom_call.1} parent=1 // loop_footer
      %s25 = sadd.s32 1, %s21
    $region7: #{tpu_custom_call.1} parent=1 // loop_footer_branch
      %20 = sbr.rel target = $region3
    $region8: #{tpu_custom_call.1} parent=1 // loop_exit
      _
    %5262 = vsyncpa [#allocation3], 1
    %s5263 = scalar_lea.sflag [#allocation3], 1
    %5264 = vsyncpa %s5263, 1

</llo_original>
